<compile_context>
chip_gen: v5e
topology: v5e:2x2
jax: 0.10.0
libtpu: 0.0.40
codegen_flags: <defaults>
</compile_context>

<pallas_src>
import jax
import jax.numpy as jnp
import numpy as np
from jax.experimental import pallas as pl
from jax.experimental.pallas import tpu as pltpu


def _round_up(x, m):
    return (x + m - 1) // m * m


# ----------------------------------------------------------------------------
# Fused kernel: conv1+bn1+relu -> conv2+bn2+relu -> +residual -> relu
# One grid step == one batch sample.
# ----------------------------------------------------------------------------
def _make_block_kernel(H, W, We):
    R1 = (H + 2) * We          # rows of the extended conv1 domain
    R2 = H * W                 # rows of the final output domain

    def kernel(xpad_ref, mask_ref, w1_ref, b1_ref, w2_ref, b2_ref, out_ref):
        xp = xpad_ref[0]                       # (H+4, We+2, Cin), f32
        Cin = xp.shape[-1]
        Cmid = w1_ref.shape[-1]
        Cout = w2_ref.shape[-1]

        # ---- conv1 (BN1 scale pre-folded into w1) on the extended grid ------
        # 9 shifted MXU dots; accumulation stays in f32 vregs / VMEM.
        acc1 = jnp.zeros((R1, Cmid), jnp.float32)
        for kh in range(3):
            for kw in range(3):
                sl = xp[kh:kh + H + 2, kw:kw + We, :].reshape(R1, Cin)
                acc1 = acc1 + jnp.dot(sl, w1_ref[kh * 3 + kw],
                                      preferred_element_type=jnp.float32)
        # BN1 bias + ReLU, then zero the ring so it acts as conv2's zero pad.
        y1 = jnp.maximum(acc1 + b1_ref[...], 0.0) * mask_ref[...]
        y1 = y1.reshape(H + 2, We, Cmid)       # zero-padded conv2 input (in VMEM)

        # ---- conv2 (BN2 scale pre-folded into w2) ---------------------------
        acc2 = jnp.zeros((R2, Cout), jnp.float32)
        for kh in range(3):
            for kw in range(3):
                sl = y1[kh:kh + H, kw:kw + W, :].reshape(R2, Cmid)
                acc2 = acc2 + jnp.dot(sl, w2_ref[kh * 3 + kw],
                                      preferred_element_type=jnp.float32)
        y2 = jnp.maximum(acc2 + b2_ref[...], 0.0)

        # ---- residual add (residual = x, read from the padded input) --------
        res = xp[2:2 + H, 2:2 + W, :].reshape(R2, Cin)
        y2 = jnp.maximum(y2 + res, 0.0)

        # Lane-dense, NCHW-flat store: (Cout, H*W), last dim multiple of 128.
        out_ref[0] = y2.T.astype(out_ref.dtype)

    return kernel


# ----------------------------------------------------------------------------
# One-time parameter preparation (hoisted out of the per-call path).
# ----------------------------------------------------------------------------
def prepare_params(params, eps=1e-5):
    def fold(w_oihw, gamma, beta, mean, var):
        s = gamma / jnp.sqrt(var + eps)            # per-output-channel scale
        b = beta - mean * s                        # per-output-channel bias
        cout, cin = w_oihw.shape[0], w_oihw.shape[1]
        # OIHW -> (kh*3+kw, Cin, Cout), with the BN scale folded into Cout.
        w = jnp.transpose(w_oihw, (2, 3, 1, 0)).reshape(9, cin, cout)
        return (w * s[None, None, :]).astype(jnp.float32), \
               b.reshape(1, cout).astype(jnp.float32)

    w1, b1 = fold(params["conv1_w"], params["bn1_gamma"], params["bn1_beta"],
                  params["bn1_mean"], params["bn1_var"])
    w2, b2 = fold(params["conv2_w"], params["bn2_gamma"], params["bn2_beta"],
                  params["bn2_mean"], params["bn2_var"])
    return {"w1": w1, "b1": b1, "w2": w2, "b2": b2}


# ----------------------------------------------------------------------------
# BasicBlock forward (NCHW in / NCHW out, matching PyTorch).
# ----------------------------------------------------------------------------
@jax.jit
def basic_block_forward(x_nchw, prep):
    N, C, H, W = x_nchw.shape
    We = _round_up(W + 2, 8)       # extended width, multiple of 8 (clean tiling)
    R1 = (H + 2) * We

    # NCHW -> NHWC (channels on lanes for the conv matmuls).
    x_nhwc = jnp.transpose(x_nchw, (0, 2, 3, 1))
    # Zero-pad by 2 on top/left (and enough on the right) so conv1 can be
    # evaluated on the extended (H+2, We) grid inside the kernel.
    xpad = jnp.pad(x_nhwc, ((0, 0), (2, 2), (2, We - W), (0, 0)))

    # Mask of the real y1 interior on the extended grid (constant-folded by XLA).
    mask = jnp.pad(jnp.ones((H, W), jnp.float32),
                   ((1, 1), (1, We - W - 1))).reshape(R1, 1)

    Cout = prep["w2"].shape[-1]
    kernel = _make_block_kernel(H, W, We)

    out = pl.pallas_call(
        kernel,
        out_shape=jax.ShapeDtypeStruct((N, Cout, H * W), jnp.float32),
        grid=(N,),
        in_specs=[
            pl.BlockSpec((1, H + 4, We + 2, C), lambda n: (n, 0, 0, 0)),
            pl.BlockSpec((R1, 1), lambda n: (0, 0)),
            pl.BlockSpec(prep["w1"].shape, lambda n: (0, 0, 0)),
            pl.BlockSpec(prep["b1"].shape, lambda n: (0, 0)),
            pl.BlockSpec(prep["w2"].shape, lambda n: (0, 0, 0)),
            pl.BlockSpec(prep["b2"].shape, lambda n: (0, 0)),
        ],
        out_specs=pl.BlockSpec((1, Cout, H * W), lambda n: (n, 0, 0)),
        compiler_params=pltpu.CompilerParams(
            dimension_semantics=("parallel",)),
    )(xpad, mask, prep["w1"], prep["b1"], prep["w2"], prep["b2"])

    # (N, Cout, H*W) is already NCHW-flat -> free reshape, no transpose.
    return out.reshape(N, Cout, H, W)


# ----------------------------------------------------------------------------
# Pure-JAX reference (for correctness check).
# ----------------------------------------------------------------------------
def basic_block_reference(x_nchw, params):
    def conv(x, w_oihw):
        return jax.lax.conv_general_dilated(
            x, w_oihw, window_strides=(1, 1), padding=((1, 1), (1, 1)),
            dimension_numbers=("NCHW", "OIHW", "NCHW"))

    def bn(x, g, b, m, v, eps=1e-5):
        s = g / jnp.sqrt(v + eps)
        return x * s[None, :, None, None] + (b - m * s)[None, :, None, None]

    residual = x_nchw
    out = conv(x_nchw, params["conv1_w"])
    out = bn(out, params["bn1_gamma"], params["bn1_beta"],
             params["bn1_mean"], params["bn1_var"])
    out = jnp.maximum(out, 0.0)
    out = conv(out, params["conv2_w"])
    out = bn(out, params["bn2_gamma"], params["bn2_beta"],
             params["bn2_mean"], params["bn2_var"])
    out = jnp.maximum(out, 0.0)
    out = out + residual
    return jnp.maximum(out, 0.0)


# ----------------------------------------------------------------------------
# Deterministic parameter init + run.
# ----------------------------------------------------------------------------
def init_params(key, inplanes, planes):
    ks = jax.random.split(key, 10)
    return {
        "conv1_w": 0.1 * jax.random.normal(ks[0], (planes, inplanes, 3, 3), jnp.float32),
        "conv2_w": 0.1 * jax.random.normal(ks[1], (planes, planes, 3, 3), jnp.float32),
        "bn1_gamma": 1.0 + 0.1 * jax.random.normal(ks[2], (planes,), jnp.float32),
        "bn1_beta": 0.1 * jax.random.normal(ks[3], (planes,), jnp.float32),
        "bn1_mean": 0.05 * jax.random.normal(ks[4], (planes,), jnp.float32),
        "bn1_var": 1.0 + 0.1 * jax.nn.softplus(jax.random.normal(ks[5], (planes,), jnp.float32)),
        "bn2_gamma": 1.0 + 0.1 * jax.random.normal(ks[6], (planes,), jnp.float32),
        "bn2_beta": 0.1 * jax.random.normal(ks[7], (planes,), jnp.float32),
        "bn2_mean": 0.05 * jax.random.normal(ks[8], (planes,), jnp.float32),
        "bn2_var": 1.0 + 0.1 * jax.nn.softplus(jax.random.normal(ks[9], (planes,), jnp.float32)),
    }


if __name__ == "__main__":
    key = jax.random.PRNGKey(0)
    k_x, k_p = jax.random.split(key)

    N, C, H, W = 2, 4, 16, 16        # inplanes == planes, stride=1, no downsample
    x = jax.random.normal(k_x, (N, C, H, W), jnp.float32)
    params = init_params(k_p, inplanes=C, planes=C)

    prep = prepare_params(params)    # one-time weight/BN preparation
    out = basic_block_forward(x, prep)
    out = jax.block_until_ready(out)

    ref = jax.block_until_ready(basic_block_reference(x, params))
    np.testing.assert_allclose(np.asarray(out), np.asarray(ref), rtol=1e-3, atol=1e-3)
    assert out.shape == (N, C, H, W)

    print("KERNEL_OK")
</pallas_src>

<mosaic_0001>
module attributes {stable_mosaic.version = 11 : i64} {
  func.func @kernel(%arg0: i32, %arg1: memref<1x20x26x4xf32, #tpu.memory_space<vmem>>, %arg2: memref<432x1xf32, #tpu.memory_space<vmem>>, %arg3: memref<9x4x4xf32, #tpu.memory_space<vmem>>, %arg4: memref<1x4xf32, #tpu.memory_space<vmem>>, %arg5: memref<9x4x4xf32, #tpu.memory_space<vmem>>, %arg6: memref<1x4xf32, #tpu.memory_space<vmem>>, %arg7: memref<1x4x256xf32, #tpu.memory_space<vmem>>) attributes {dimension_semantics = [#tpu.dimension_semantics<parallel>], iteration_bounds = array<i64: 2>, scalar_prefetch = 0 : i64, scratch_operands = 0 : i64, tpu.core_type = #tpu.core_type<tc>, window_params = [{transform_indices = @transform_0, window_bounds = array<i64: 1, 20, 26, 4>}, {pipeline_mode = #tpu.pipeline_mode<synchronous>, transform_indices = @transform_1, window_bounds = array<i64: 432, 1>}, {pipeline_mode = #tpu.pipeline_mode<synchronous>, transform_indices = @transform_2, window_bounds = array<i64: 9, 4, 4>}, {pipeline_mode = #tpu.pipeline_mode<synchronous>, transform_indices = @transform_3, window_bounds = array<i64: 1, 4>}, {pipeline_mode = #tpu.pipeline_mode<synchronous>, transform_indices = @transform_4, window_bounds = array<i64: 9, 4, 4>}, {pipeline_mode = #tpu.pipeline_mode<synchronous>, transform_indices = @transform_5, window_bounds = array<i64: 1, 4>}, {transform_indices = @transform_6, window_bounds = array<i64: 1, 4, 256>}]} {
    %c0 = arith.constant 0 : index
    %c0_0 = arith.constant 0 : index
    %c0_1 = arith.constant 0 : index
    %c0_2 = arith.constant 0 : index
    %0 = vector.load %arg1[%c0, %c0_0, %c0_1, %c0_2] : memref<1x20x26x4xf32, #tpu.memory_space<vmem>>, vector<1x20x26x4xf32>
    %1 = vector.shape_cast %0 : vector<1x20x26x4xf32> to vector<20x26x4xf32>
    %cst = arith.constant 0.000000e+00 : f32
    %2 = vector.broadcast %cst : f32 to vector<432x4xf32>
    %3 = vector.extract_strided_slice %1 {offsets = [0, 0, 0], sizes = [18, 24, 4], strides = [1, 1, 1]} : vector<20x26x4xf32> to vector<18x24x4xf32>
    %4 = vector.shape_cast %3 : vector<18x24x4xf32> to vector<432x4xf32>
    %c0_3 = arith.constant 0 : index
    %c0_4 = arith.constant 0 : index
    %c0_5 = arith.constant 0 : index
    %5 = vector.load %arg3[%c0_3, %c0_4, %c0_5] : memref<9x4x4xf32, #tpu.memory_space<vmem>>, vector<1x4x4xf32>
    %6 = vector.shape_cast %5 : vector<1x4x4xf32> to vector<4x4xf32>
    %cst_6 = arith.constant dense<0.000000e+00> : vector<432x4xf32>
    %7 = tpu.matmul %4, %6, %cst_6 {dimension_numbers = #tpu.dot_dimension_numbers<[1], [0], [0], [1], [0, 0, 1, 1], [], []>} : vector<432x4xf32>, vector<4x4xf32>, vector<432x4xf32> -> vector<432x4xf32>
    %8 = arith.addf %2, %7 : vector<432x4xf32>
    %9 = vector.extract_strided_slice %1 {offsets = [0, 1, 0], sizes = [18, 24, 4], strides = [1, 1, 1]} : vector<20x26x4xf32> to vector<18x24x4xf32>
    %10 = vector.shape_cast %9 : vector<18x24x4xf32> to vector<432x4xf32>
    %c1 = arith.constant 1 : index
    %c0_7 = arith.constant 0 : index
    %c0_8 = arith.constant 0 : index
    %11 = vector.load %arg3[%c1, %c0_7, %c0_8] : memref<9x4x4xf32, #tpu.memory_space<vmem>>, vector<1x4x4xf32>
    %12 = vector.shape_cast %11 : vector<1x4x4xf32> to vector<4x4xf32>
    %cst_9 = arith.constant dense<0.000000e+00> : vector<432x4xf32>
    %13 = tpu.matmul %10, %12, %cst_9 {dimension_numbers = #tpu.dot_dimension_numbers<[1], [0], [0], [1], [0, 0, 1, 1], [], []>} : vector<432x4xf32>, vector<4x4xf32>, vector<432x4xf32> -> vector<432x4xf32>
    %14 = arith.addf %8, %13 : vector<432x4xf32>
    %15 = vector.extract_strided_slice %1 {offsets = [0, 2, 0], sizes = [18, 24, 4], strides = [1, 1, 1]} : vector<20x26x4xf32> to vector<18x24x4xf32>
    %16 = vector.shape_cast %15 : vector<18x24x4xf32> to vector<432x4xf32>
    %c2 = arith.constant 2 : index
    %c0_10 = arith.constant 0 : index
    %c0_11 = arith.constant 0 : index
    %17 = vector.load %arg3[%c2, %c0_10, %c0_11] : memref<9x4x4xf32, #tpu.memory_space<vmem>>, vector<1x4x4xf32>
    %18 = vector.shape_cast %17 : vector<1x4x4xf32> to vector<4x4xf32>
    %cst_12 = arith.constant dense<0.000000e+00> : vector<432x4xf32>
    %19 = tpu.matmul %16, %18, %cst_12 {dimension_numbers = #tpu.dot_dimension_numbers<[1], [0], [0], [1], [0, 0, 1, 1], [], []>} : vector<432x4xf32>, vector<4x4xf32>, vector<432x4xf32> -> vector<432x4xf32>
    %20 = arith.addf %14, %19 : vector<432x4xf32>
    %21 = vector.extract_strided_slice %1 {offsets = [1, 0, 0], sizes = [18, 24, 4], strides = [1, 1, 1]} : vector<20x26x4xf32> to vector<18x24x4xf32>
    %22 = vector.shape_cast %21 : vector<18x24x4xf32> to vector<432x4xf32>
    %c3 = arith.constant 3 : index
    %c0_13 = arith.constant 0 : index
    %c0_14 = arith.constant 0 : index
    %23 = vector.load %arg3[%c3, %c0_13, %c0_14] : memref<9x4x4xf32, #tpu.memory_space<vmem>>, vector<1x4x4xf32>
    %24 = vector.shape_cast %23 : vector<1x4x4xf32> to vector<4x4xf32>
    %cst_15 = arith.constant dense<0.000000e+00> : vector<432x4xf32>
    %25 = tpu.matmul %22, %24, %cst_15 {dimension_numbers = #tpu.dot_dimension_numbers<[1], [0], [0], [1], [0, 0, 1, 1], [], []>} : vector<432x4xf32>, vector<4x4xf32>, vector<432x4xf32> -> vector<432x4xf32>
    %26 = arith.addf %20, %25 : vector<432x4xf32>
    %27 = vector.extract_strided_slice %1 {offsets = [1, 1, 0], sizes = [18, 24, 4], strides = [1, 1, 1]} : vector<20x26x4xf32> to vector<18x24x4xf32>
    %28 = vector.shape_cast %27 : vector<18x24x4xf32> to vector<432x4xf32>
    %c4 = arith.constant 4 : index
    %c0_16 = arith.constant 0 : index
    %c0_17 = arith.constant 0 : index
    %29 = vector.load %arg3[%c4, %c0_16, %c0_17] : memref<9x4x4xf32, #tpu.memory_space<vmem>>, vector<1x4x4xf32>
    %30 = vector.shape_cast %29 : vector<1x4x4xf32> to vector<4x4xf32>
    %cst_18 = arith.constant dense<0.000000e+00> : vector<432x4xf32>
    %31 = tpu.matmul %28, %30, %cst_18 {dimension_numbers = #tpu.dot_dimension_numbers<[1], [0], [0], [1], [0, 0, 1, 1], [], []>} : vector<432x4xf32>, vector<4x4xf32>, vector<432x4xf32> -> vector<432x4xf32>
    %32 = arith.addf %26, %31 : vector<432x4xf32>
    %33 = vector.extract_strided_slice %1 {offsets = [1, 2, 0], sizes = [18, 24, 4], strides = [1, 1, 1]} : vector<20x26x4xf32> to vector<18x24x4xf32>
    %34 = vector.shape_cast %33 : vector<18x24x4xf32> to vector<432x4xf32>
    %c5 = arith.constant 5 : index
    %c0_19 = arith.constant 0 : index
    %c0_20 = arith.constant 0 : index
    %35 = vector.load %arg3[%c5, %c0_19, %c0_20] : memref<9x4x4xf32, #tpu.memory_space<vmem>>, vector<1x4x4xf32>
    %36 = vector.shape_cast %35 : vector<1x4x4xf32> to vector<4x4xf32>
    %cst_21 = arith.constant dense<0.000000e+00> : vector<432x4xf32>
    %37 = tpu.matmul %34, %36, %cst_21 {dimension_numbers = #tpu.dot_dimension_numbers<[1], [0], [0], [1], [0, 0, 1, 1], [], []>} : vector<432x4xf32>, vector<4x4xf32>, vector<432x4xf32> -> vector<432x4xf32>
    %38 = arith.addf %32, %37 : vector<432x4xf32>
    %39 = vector.extract_strided_slice %1 {offsets = [2, 0, 0], sizes = [18, 24, 4], strides = [1, 1, 1]} : vector<20x26x4xf32> to vector<18x24x4xf32>
    %40 = vector.shape_cast %39 : vector<18x24x4xf32> to vector<432x4xf32>
    %c6 = arith.constant 6 : index
    %c0_22 = arith.constant 0 : index
    %c0_23 = arith.constant 0 : index
    %41 = vector.load %arg3[%c6, %c0_22, %c0_23] : memref<9x4x4xf32, #tpu.memory_space<vmem>>, vector<1x4x4xf32>
    %42 = vector.shape_cast %41 : vector<1x4x4xf32> to vector<4x4xf32>
    %cst_24 = arith.constant dense<0.000000e+00> : vector<432x4xf32>
    %43 = tpu.matmul %40, %42, %cst_24 {dimension_numbers = #tpu.dot_dimension_numbers<[1], [0], [0], [1], [0, 0, 1, 1], [], []>} : vector<432x4xf32>, vector<4x4xf32>, vector<432x4xf32> -> vector<432x4xf32>
    %44 = arith.addf %38, %43 : vector<432x4xf32>
    %45 = vector.extract_strided_slice %1 {offsets = [2, 1, 0], sizes = [18, 24, 4], strides = [1, 1, 1]} : vector<20x26x4xf32> to vector<18x24x4xf32>
    %46 = vector.shape_cast %45 : vector<18x24x4xf32> to vector<432x4xf32>
    %c7 = arith.constant 7 : index
    %c0_25 = arith.constant 0 : index
    %c0_26 = arith.constant 0 : index
    %47 = vector.load %arg3[%c7, %c0_25, %c0_26] : memref<9x4x4xf32, #tpu.memory_space<vmem>>, vector<1x4x4xf32>
    %48 = vector.shape_cast %47 : vector<1x4x4xf32> to vector<4x4xf32>
    %cst_27 = arith.constant dense<0.000000e+00> : vector<432x4xf32>
    %49 = tpu.matmul %46, %48, %cst_27 {dimension_numbers = #tpu.dot_dimension_numbers<[1], [0], [0], [1], [0, 0, 1, 1], [], []>} : vector<432x4xf32>, vector<4x4xf32>, vector<432x4xf32> -> vector<432x4xf32>
    %50 = arith.addf %44, %49 : vector<432x4xf32>
    %51 = vector.extract_strided_slice %1 {offsets = [2, 2, 0], sizes = [18, 24, 4], strides = [1, 1, 1]} : vector<20x26x4xf32> to vector<18x24x4xf32>
    %52 = vector.shape_cast %51 : vector<18x24x4xf32> to vector<432x4xf32>
    %c8 = arith.constant 8 : index
    %c0_28 = arith.constant 0 : index
    %c0_29 = arith.constant 0 : index
    %53 = vector.load %arg3[%c8, %c0_28, %c0_29] : memref<9x4x4xf32, #tpu.memory_space<vmem>>, vector<1x4x4xf32>
    %54 = vector.shape_cast %53 : vector<1x4x4xf32> to vector<4x4xf32>
    %cst_30 = arith.constant dense<0.000000e+00> : vector<432x4xf32>
    %55 = tpu.matmul %52, %54, %cst_30 {dimension_numbers = #tpu.dot_dimension_numbers<[1], [0], [0], [1], [0, 0, 1, 1], [], []>} : vector<432x4xf32>, vector<4x4xf32>, vector<432x4xf32> -> vector<432x4xf32>
    %56 = arith.addf %50, %55 : vector<432x4xf32>
    %c0_31 = arith.constant 0 : index
    %c0_32 = arith.constant 0 : index
    %57 = vector.load %arg4[%c0_31, %c0_32] : memref<1x4xf32, #tpu.memory_space<vmem>>, vector<1x4xf32>
    %58 = vector.broadcast %57 : vector<1x4xf32> to vector<432x4xf32>
    %59 = arith.addf %56, %58 : vector<432x4xf32>
    %cst_33 = arith.constant 0.000000e+00 : f32
    %60 = vector.broadcast %cst_33 : f32 to vector<432x4xf32>
    %61 = arith.maximumf %59, %60 : vector<432x4xf32>
    %c0_34 = arith.constant 0 : index
    %c0_35 = arith.constant 0 : index
    %62 = vector.load %arg2[%c0_34, %c0_35] : memref<432x1xf32, #tpu.memory_space<vmem>>, vector<432x1xf32>
    %63 = vector.broadcast %62 : vector<432x1xf32> to vector<432x4xf32>
    %64 = arith.mulf %61, %63 : vector<432x4xf32>
    %65 = vector.shape_cast %64 : vector<432x4xf32> to vector<18x24x4xf32>
    %cst_36 = arith.constant 0.000000e+00 : f32
    %66 = vector.broadcast %cst_36 : f32 to vector<256x4xf32>
    %67 = vector.extract_strided_slice %65 {offsets = [0, 0, 0], sizes = [16, 16, 4], strides = [1, 1, 1]} : vector<18x24x4xf32> to vector<16x16x4xf32>
    %68 = vector.shape_cast %67 : vector<16x16x4xf32> to vector<256x4xf32>
    %c0_37 = arith.constant 0 : index
    %c0_38 = arith.constant 0 : index
    %c0_39 = arith.constant 0 : index
    %69 = vector.load %arg5[%c0_37, %c0_38, %c0_39] : memref<9x4x4xf32, #tpu.memory_space<vmem>>, vector<1x4x4xf32>
    %70 = vector.shape_cast %69 : vector<1x4x4xf32> to vector<4x4xf32>
    %cst_40 = arith.constant dense<0.000000e+00> : vector<256x4xf32>
    %71 = tpu.matmul %68, %70, %cst_40 {dimension_numbers = #tpu.dot_dimension_numbers<[1], [0], [0], [1], [0, 0, 1, 1], [], []>} : vector<256x4xf32>, vector<4x4xf32>, vector<256x4xf32> -> vector<256x4xf32>
    %72 = arith.addf %66, %71 : vector<256x4xf32>
    %73 = vector.extract_strided_slice %65 {offsets = [0, 1, 0], sizes = [16, 16, 4], strides = [1, 1, 1]} : vector<18x24x4xf32> to vector<16x16x4xf32>
    %74 = vector.shape_cast %73 : vector<16x16x4xf32> to vector<256x4xf32>
    %c1_41 = arith.constant 1 : index
    %c0_42 = arith.constant 0 : index
    %c0_43 = arith.constant 0 : index
    %75 = vector.load %arg5[%c1_41, %c0_42, %c0_43] : memref<9x4x4xf32, #tpu.memory_space<vmem>>, vector<1x4x4xf32>
    %76 = vector.shape_cast %75 : vector<1x4x4xf32> to vector<4x4xf32>
    %cst_44 = arith.constant dense<0.000000e+00> : vector<256x4xf32>
    %77 = tpu.matmul %74, %76, %cst_44 {dimension_numbers = #tpu.dot_dimension_numbers<[1], [0], [0], [1], [0, 0, 1, 1], [], []>} : vector<256x4xf32>, vector<4x4xf32>, vector<256x4xf32> -> vector<256x4xf32>
    %78 = arith.addf %72, %77 : vector<256x4xf32>
    %79 = vector.extract_strided_slice %65 {offsets = [0, 2, 0], sizes = [16, 16, 4], strides = [1, 1, 1]} : vector<18x24x4xf32> to vector<16x16x4xf32>
    %80 = vector.shape_cast %79 : vector<16x16x4xf32> to vector<256x4xf32>
    %c2_45 = arith.constant 2 : index
    %c0_46 = arith.constant 0 : index
    %c0_47 = arith.constant 0 : index
    %81 = vector.load %arg5[%c2_45, %c0_46, %c0_47] : memref<9x4x4xf32, #tpu.memory_space<vmem>>, vector<1x4x4xf32>
    %82 = vector.shape_cast %81 : vector<1x4x4xf32> to vector<4x4xf32>
    %cst_48 = arith.constant dense<0.000000e+00> : vector<256x4xf32>
    %83 = tpu.matmul %80, %82, %cst_48 {dimension_numbers = #tpu.dot_dimension_numbers<[1], [0], [0], [1], [0, 0, 1, 1], [], []>} : vector<256x4xf32>, vector<4x4xf32>, vector<256x4xf32> -> vector<256x4xf32>
    %84 = arith.addf %78, %83 : vector<256x4xf32>
    %85 = vector.extract_strided_slice %65 {offsets = [1, 0, 0], sizes = [16, 16, 4], strides = [1, 1, 1]} : vector<18x24x4xf32> to vector<16x16x4xf32>
    %86 = vector.shape_cast %85 : vector<16x16x4xf32> to vector<256x4xf32>
    %c3_49 = arith.constant 3 : index
    %c0_50 = arith.constant 0 : index
    %c0_51 = arith.constant 0 : index
    %87 = vector.load %arg5[%c3_49, %c0_50, %c0_51] : memref<9x4x4xf32, #tpu.memory_space<vmem>>, vector<1x4x4xf32>
    %88 = vector.shape_cast %87 : vector<1x4x4xf32> to vector<4x4xf32>
    %cst_52 = arith.constant dense<0.000000e+00> : vector<256x4xf32>
    %89 = tpu.matmul %86, %88, %cst_52 {dimension_numbers = #tpu.dot_dimension_numbers<[1], [0], [0], [1], [0, 0, 1, 1], [], []>} : vector<256x4xf32>, vector<4x4xf32>, vector<256x4xf32> -> vector<256x4xf32>
    %90 = arith.addf %84, %89 : vector<256x4xf32>
    %91 = vector.extract_strided_slice %65 {offsets = [1, 1, 0], sizes = [16, 16, 4], strides = [1, 1, 1]} : vector<18x24x4xf32> to vector<16x16x4xf32>
    %92 = vector.shape_cast %91 : vector<16x16x4xf32> to vector<256x4xf32>
    %c4_53 = arith.constant 4 : index
    %c0_54 = arith.constant 0 : index
    %c0_55 = arith.constant 0 : index
    %93 = vector.load %arg5[%c4_53, %c0_54, %c0_55] : memref<9x4x4xf32, #tpu.memory_space<vmem>>, vector<1x4x4xf32>
    %94 = vector.shape_cast %93 : vector<1x4x4xf32> to vector<4x4xf32>
    %cst_56 = arith.constant dense<0.000000e+00> : vector<256x4xf32>
    %95 = tpu.matmul %92, %94, %cst_56 {dimension_numbers = #tpu.dot_dimension_numbers<[1], [0], [0], [1], [0, 0, 1, 1], [], []>} : vector<256x4xf32>, vector<4x4xf32>, vector<256x4xf32> -> vector<256x4xf32>
    %96 = arith.addf %90, %95 : vector<256x4xf32>
    %97 = vector.extract_strided_slice %65 {offsets = [1, 2, 0], sizes = [16, 16, 4], strides = [1, 1, 1]} : vector<18x24x4xf32> to vector<16x16x4xf32>
    %98 = vector.shape_cast %97 : vector<16x16x4xf32> to vector<256x4xf32>
    %c5_57 = arith.constant 5 : index
    %c0_58 = arith.constant 0 : index
    %c0_59 = arith.constant 0 : index
    %99 = vector.load %arg5[%c5_57, %c0_58, %c0_59] : memref<9x4x4xf32, #tpu.memory_space<vmem>>, vector<1x4x4xf32>
    %100 = vector.shape_cast %99 : vector<1x4x4xf32> to vector<4x4xf32>
    %cst_60 = arith.constant dense<0.000000e+00> : vector<256x4xf32>
    %101 = tpu.matmul %98, %100, %cst_60 {dimension_numbers = #tpu.dot_dimension_numbers<[1], [0], [0], [1], [0, 0, 1, 1], [], []>} : vector<256x4xf32>, vector<4x4xf32>, vector<256x4xf32> -> vector<256x4xf32>
    %102 = arith.addf %96, %101 : vector<256x4xf32>
    %103 = vector.extract_strided_slice %65 {offsets = [2, 0, 0], sizes = [16, 16, 4], strides = [1, 1, 1]} : vector<18x24x4xf32> to vector<16x16x4xf32>
    %104 = vector.shape_cast %103 : vector<16x16x4xf32> to vector<256x4xf32>
    %c6_61 = arith.constant 6 : index
    %c0_62 = arith.constant 0 : index
    %c0_63 = arith.constant 0 : index
    %105 = vector.load %arg5[%c6_61, %c0_62, %c0_63] : memref<9x4x4xf32, #tpu.memory_space<vmem>>, vector<1x4x4xf32>
    %106 = vector.shape_cast %105 : vector<1x4x4xf32> to vector<4x4xf32>
    %cst_64 = arith.constant dense<0.000000e+00> : vector<256x4xf32>
    %107 = tpu.matmul %104, %106, %cst_64 {dimension_numbers = #tpu.dot_dimension_numbers<[1], [0], [0], [1], [0, 0, 1, 1], [], []>} : vector<256x4xf32>, vector<4x4xf32>, vector<256x4xf32> -> vector<256x4xf32>
    %108 = arith.addf %102, %107 : vector<256x4xf32>
    %109 = vector.extract_strided_slice %65 {offsets = [2, 1, 0], sizes = [16, 16, 4], strides = [1, 1, 1]} : vector<18x24x4xf32> to vector<16x16x4xf32>
    %110 = vector.shape_cast %109 : vector<16x16x4xf32> to vector<256x4xf32>
    %c7_65 = arith.constant 7 : index
    %c0_66 = arith.constant 0 : index
    %c0_67 = arith.constant 0 : index
    %111 = vector.load %arg5[%c7_65, %c0_66, %c0_67] : memref<9x4x4xf32, #tpu.memory_space<vmem>>, vector<1x4x4xf32>
    %112 = vector.shape_cast %111 : vector<1x4x4xf32> to vector<4x4xf32>
    %cst_68 = arith.constant dense<0.000000e+00> : vector<256x4xf32>
    %113 = tpu.matmul %110, %112, %cst_68 {dimension_numbers = #tpu.dot_dimension_numbers<[1], [0], [0], [1], [0, 0, 1, 1], [], []>} : vector<256x4xf32>, vector<4x4xf32>, vector<256x4xf32> -> vector<256x4xf32>
    %114 = arith.addf %108, %113 : vector<256x4xf32>
    %115 = vector.extract_strided_slice %65 {offsets = [2, 2, 0], sizes = [16, 16, 4], strides = [1, 1, 1]} : vector<18x24x4xf32> to vector<16x16x4xf32>
    %116 = vector.shape_cast %115 : vector<16x16x4xf32> to vector<256x4xf32>
    %c8_69 = arith.constant 8 : index
    %c0_70 = arith.constant 0 : index
    %c0_71 = arith.constant 0 : index
    %117 = vector.load %arg5[%c8_69, %c0_70, %c0_71] : memref<9x4x4xf32, #tpu.memory_space<vmem>>, vector<1x4x4xf32>
    %118 = vector.shape_cast %117 : vector<1x4x4xf32> to vector<4x4xf32>
    %cst_72 = arith.constant dense<0.000000e+00> : vector<256x4xf32>
    %119 = tpu.matmul %116, %118, %cst_72 {dimension_numbers = #tpu.dot_dimension_numbers<[1], [0], [0], [1], [0, 0, 1, 1], [], []>} : vector<256x4xf32>, vector<4x4xf32>, vector<256x4xf32> -> vector<256x4xf32>
    %120 = arith.addf %114, %119 : vector<256x4xf32>
    %c0_73 = arith.constant 0 : index
    %c0_74 = arith.constant 0 : index
    %121 = vector.load %arg6[%c0_73, %c0_74] : memref<1x4xf32, #tpu.memory_space<vmem>>, vector<1x4xf32>
    %122 = vector.broadcast %121 : vector<1x4xf32> to vector<256x4xf32>
    %123 = arith.addf %120, %122 : vector<256x4xf32>
    %cst_75 = arith.constant 0.000000e+00 : f32
    %124 = vector.broadcast %cst_75 : f32 to vector<256x4xf32>
    %125 = arith.maximumf %123, %124 : vector<256x4xf32>
    %126 = vector.extract_strided_slice %1 {offsets = [2, 2, 0], sizes = [16, 16, 4], strides = [1, 1, 1]} : vector<20x26x4xf32> to vector<16x16x4xf32>
    %127 = vector.shape_cast %126 : vector<16x16x4xf32> to vector<256x4xf32>
    %128 = arith.addf %125, %127 : vector<256x4xf32>
    %cst_76 = arith.constant 0.000000e+00 : f32
    %129 = vector.broadcast %cst_76 : f32 to vector<256x4xf32>
    %130 = arith.maximumf %128, %129 : vector<256x4xf32>
    %131 = tpu.transpose %130, [1, 0] : vector<256x4xf32> -> vector<4x256xf32>
    %c0_77 = arith.constant 0 : index
    %c0_78 = arith.constant 0 : index
    %c0_79 = arith.constant 0 : index
    %132 = vector.load %arg7[%c0_77, %c0_78, %c0_79] : memref<1x4x256xf32, #tpu.memory_space<vmem>>, vector<1x4x256xf32>
    %133 = vector.shape_cast %132 : vector<1x4x256xf32> to vector<4x256xf32>
    %134 = vector.shape_cast %131 : vector<4x256xf32> to vector<1x4x256xf32>
    tpu.vector_store %arg7[%c0_77, %c0_78, %c0_79], %134 {strides = array<i32>} : memref<1x4x256xf32, #tpu.memory_space<vmem>>, vector<1x4x256xf32>,
    return
  }
  func.func @transform_0(%arg0: i32) -> (i32, i32, i32, i32) {
    %c0_i32 = arith.constant 0 : i32
    %c0_i32_0 = arith.constant 0 : i32
    %c0_i32_1 = arith.constant 0 : i32
    %c0_i32_2 = arith.constant 0 : i32
    return %arg0, %c0_i32, %c0_i32_0, %c0_i32_1 : i32, i32, i32, i32
  }
  func.func @transform_1(%arg0: i32) -> (i32, i32) {
    %c0_i32 = arith.constant 0 : i32
    %c0_i32_0 = arith.constant 0 : i32
    %c0_i32_1 = arith.constant 0 : i32
    return %c0_i32, %c0_i32_0 : i32, i32
  }
  func.func @transform_2(%arg0: i32) -> (i32, i32, i32) {
    %c0_i32 = arith.constant 0 : i32
    %c0_i32_0 = arith.constant 0 : i32
    %c0_i32_1 = arith.constant 0 : i32
    %c0_i32_2 = arith.constant 0 : i32
    return %c0_i32, %c0_i32_0, %c0_i32_1 : i32, i32, i32
  }
  func.func @transform_3(%arg0: i32) -> (i32, i32) {
    %c0_i32 = arith.constant 0 : i32
    %c0_i32_0 = arith.constant 0 : i32
    %c0_i32_1 = arith.constant 0 : i32
    return %c0_i32, %c0_i32_0 : i32, i32
  }
  func.func @transform_4(%arg0: i32) -> (i32, i32, i32) {
    %c0_i32 = arith.constant 0 : i32
    %c0_i32_0 = arith.constant 0 : i32
    %c0_i32_1 = arith.constant 0 : i32
    %c0_i32_2 = arith.constant 0 : i32
    return %c0_i32, %c0_i32_0, %c0_i32_1 : i32, i32, i32
  }
  func.func @transform_5(%arg0: i32) -> (i32, i32) {
    %c0_i32 = arith.constant 0 : i32
    %c0_i32_0 = arith.constant 0 : i32
    %c0_i32_1 = arith.constant 0 : i32
    return %c0_i32, %c0_i32_0 : i32, i32
  }
  func.func @transform_6(%arg0: i32) -> (i32, i32, i32) {
    %c0_i32 = arith.constant 0 : i32
    %c0_i32_0 = arith.constant 0 : i32
    %c0_i32_1 = arith.constant 0 : i32
    return %arg0, %c0_i32, %c0_i32_0 : i32, i32, i32
  }
}

</mosaic_0001>

<llo_original>
// kernel: basic_block_forward.1
$region0: #{basic_block_forward.1}
  #allocation0 [shape = 'u32[]', space=smem, size = 0x4, offset = 0x4, fixed_abs, tag = 'smem constant byte address 0x4 - core index']
  #allocation1 [shape = 'u32[72,128]{1,0:T(1,128)}', space=vmem, size = 0x9000, scoped, tag = 'internal scratch']
  %s0 = inlined_call_operand.vmem [shape: f32[2,20,26,4], index: 0, kind: input, shape index: {}]
  %s1 = inlined_call_operand.vmem [shape: f32[432,1], index: 1, kind: input, shape index: {}]
  %s2 = inlined_call_operand.vmem [shape: f32[9,4,4], index: 2, kind: input, shape index: {}]
  %s3 = inlined_call_operand.vmem [shape: f32[1,4], index: 3, kind: input, shape index: {}]
  %s4 = inlined_call_operand.vmem [shape: f32[9,4,4], index: 4, kind: input, shape index: {}]
  %s5 = inlined_call_operand.vmem [shape: f32[1,4], index: 5, kind: input, shape index: {}]
  %s6 = inlined_call_operand.vmem [shape: f32[2,4,256], index: 6, kind: output, shape index: {}]
  %s7 = sld [smem:[#allocation0]]
  $region57: #{basic_block_forward.1} parent=0
    _
  %s9 = ssub.s32 1, %s7
  %s10 = scalar_select 0, %s9, %s7
  loop: start=0, step=1, limit=4
  $region2: #{basic_block_forward.1} parent=0 // loop_pre_header
    _
  $region3: #{basic_block_forward.1} parent=0 // loop_header
    %s12 = sphi 0, %s16
    %p13 = scmp.ge.s32.totalorder %s12, 4
    %s22 = sphi 0, %s24
    %s25 = sphi 0, %s22
    %s26 = sphi 0, %s25
    %s42 = sphi 0, %s26
    %s46 = sphi 0, %s46
    %s48 = sphi 0, %s46
    %s49 = sphi 0, %s48
    %s63 = sphi 0, %s49
    %s67 = sphi 0, %s67
    %s69 = sphi 0, %s67
    %s70 = sphi 0, %s69
    %s84 = sphi 0, %s70
    %s88 = sphi 0, %s88
    %s90 = sphi 0, %s88
    %s91 = sphi 0, %s90
    %s105 = sphi 0, %s91
    %s109 = sphi 0, %s109
    %s111 = sphi 0, %s109
    %s112 = sphi 0, %s111
    %s126 = sphi 0, %s112
    %s130 = sphi 0, %s130
    %s132 = sphi 0, %s130
    %s133 = sphi 0, %s132
    %s147 = sphi 0, %s133
    %s153 = sphi 0, %s155
    %s156 = sphi 0, %s153
    %s157 = sphi 0, %s156
    %s173 = sphi 0, %s157
  $region4: #{basic_block_forward.1} parent=0 // loop_header_branch
    %15 = sbr.rel (%p13) target = $region8
  $region5: #{basic_block_forward.1} parent=0 // loop_body
    %s17 = ssub.s32 %s12, 1
    %s18 = ssub.s32 %s12, 2
    %s19 = sadd.s32 %s12, 1
    %s20 = ssub.s32 %s12, %s19
    %p21 = scmp.eq.s32.totalorder %s20, 0
    %s23 = sadd.s32 %s22, 1
    %s24 = scalar_select %p21, %s22, %s23
    %p27 = pneg %p21
    %p28 = scmp.eq.s32.totalorder %s12, 1
    %p29 = por %p27, %p28
    %p30 = scmp.ne.s32.totalorder %s22, %s25
    %p31 = scmp.eq.s32.totalorder %s12, 0
    %p32 = por %p30, %p31
    %p33 = scmp.ne.s32.totalorder %s22, %s25
    %p34 = scmp.eq.s32.totalorder %s17, 1
    %p35 = por %p33, %p34
    %p36 = scmp.ne.s32.totalorder %s25, %s26
    %p37 = scmp.eq.s32.totalorder %s17, 0
    %p38 = por %p36, %p37
    %p39 = scmp.ne.s32.totalorder %s25, %s26
    %p40 = scmp.eq.s32.totalorder %s18, 1
    %p41 = por %p39, %p40
    %p43 = scmp.ne.s32.totalorder %s26, %s42
    %p44 = scmp.eq.s32.totalorder %s18, 0
    %p45 = por %p43, %p44
    %s47 = sadd.s32 %s46, 1
    %p50 = scmp.eq.s32.totalorder %s12, 1
    %p51 = scmp.ne.s32.totalorder %s46, %s48
    %p52 = scmp.eq.s32.totalorder %s12, 0
    %p53 = por %p51, %p52
    %p54 = scmp.ne.s32.totalorder %s46, %s48
    %p55 = scmp.eq.s32.totalorder %s17, 1
    %p56 = por %p54, %p55
    %p57 = scmp.ne.s32.totalorder %s48, %s49
    %p58 = scmp.eq.s32.totalorder %s17, 0
    %p59 = por %p57, %p58
    %p60 = scmp.ne.s32.totalorder %s48, %s49
    %p61 = scmp.eq.s32.totalorder %s18, 1
    %p62 = por %p60, %p61
    %p64 = scmp.ne.s32.totalorder %s49, %s63
    %p65 = scmp.eq.s32.totalorder %s18, 0
    %p66 = por %p64, %p65
    %s68 = sadd.s32 %s67, 1
    %p71 = scmp.eq.s32.totalorder %s12, 1
    %p72 = scmp.ne.s32.totalorder %s67, %s69
    %p73 = scmp.eq.s32.totalorder %s12, 0
    %p74 = por %p72, %p73
    %p75 = scmp.ne.s32.totalorder %s67, %s69
    %p76 = scmp.eq.s32.totalorder %s17, 1
    %p77 = por %p75, %p76
    %p78 = scmp.ne.s32.totalorder %s69, %s70
    %p79 = scmp.eq.s32.totalorder %s17, 0
    %p80 = por %p78, %p79
    %p81 = scmp.ne.s32.totalorder %s69, %s70
    %p82 = scmp.eq.s32.totalorder %s18, 1
    %p83 = por %p81, %p82
    %p85 = scmp.ne.s32.totalorder %s70, %s84
    %p86 = scmp.eq.s32.totalorder %s18, 0
    %p87 = por %p85, %p86
    %s89 = sadd.s32 %s88, 1
    %p92 = scmp.eq.s32.totalorder %s12, 1
    %p93 = scmp.ne.s32.totalorder %s88, %s90
    %p94 = scmp.eq.s32.totalorder %s12, 0
    %p95 = por %p93, %p94
    %p96 = scmp.ne.s32.totalorder %s88, %s90
    %p97 = scmp.eq.s32.totalorder %s17, 1
    %p98 = por %p96, %p97
    %p99 = scmp.ne.s32.totalorder %s90, %s91
    %p100 = scmp.eq.s32.totalorder %s17, 0
    %p101 = por %p99, %p100
    %p102 = scmp.ne.s32.totalorder %s90, %s91
    %p103 = scmp.eq.s32.totalorder %s18, 1
    %p104 = por %p102, %p103
    %p106 = scmp.ne.s32.totalorder %s91, %s105
    %p107 = scmp.eq.s32.totalorder %s18, 0
    %p108 = por %p106, %p107
    %s110 = sadd.s32 %s109, 1
    %p113 = scmp.eq.s32.totalorder %s12, 1
    %p114 = scmp.ne.s32.totalorder %s109, %s111
    %p115 = scmp.eq.s32.totalorder %s12, 0
    %p116 = por %p114, %p115
    %p117 = scmp.ne.s32.totalorder %s109, %s111
    %p118 = scmp.eq.s32.totalorder %s17, 1
    %p119 = por %p117, %p118
    %p120 = scmp.ne.s32.totalorder %s111, %s112
    %p121 = scmp.eq.s32.totalorder %s17, 0
    %p122 = por %p120, %p121
    %p123 = scmp.ne.s32.totalorder %s111, %s112
    %p124 = scmp.eq.s32.totalorder %s18, 1
    %p125 = por %p123, %p124
    %p127 = scmp.ne.s32.totalorder %s112, %s126
    %p128 = scmp.eq.s32.totalorder %s18, 0
    %p129 = por %p127, %p128
    %s131 = sadd.s32 %s130, 1
    %p134 = scmp.eq.s32.totalorder %s12, 1
    %p135 = scmp.ne.s32.totalorder %s130, %s132
    %p136 = scmp.eq.s32.totalorder %s12, 0
    %p137 = por %p135, %p136
    %p138 = scmp.ne.s32.totalorder %s130, %s132
    %p139 = scmp.eq.s32.totalorder %s17, 1
    %p140 = por %p138, %p139
    %p141 = scmp.ne.s32.totalorder %s132, %s133
    %p142 = scmp.eq.s32.totalorder %s17, 0
    %p143 = por %p141, %p142
    %p144 = scmp.ne.s32.totalorder %s132, %s133
    %p145 = scmp.eq.s32.totalorder %s18, 1
    %p146 = por %p144, %p145
    %p148 = scmp.ne.s32.totalorder %s133, %s147
    %p149 = scmp.eq.s32.totalorder %s18, 0
    %p150 = por %p148, %p149
    %s151 = ssub.s32 %s12, %s19
    %p152 = scmp.eq.s32.totalorder %s151, 0
    %s154 = sadd.s32 %s153, 1
    %s155 = scalar_select %p152, %s153, %s154
    %p158 = pneg %p152
    %p159 = scmp.eq.s32.totalorder %s12, 1
    %p160 = por %p158, %p159
    %p161 = scmp.ne.s32.totalorder %s153, %s156
    %p162 = scmp.eq.s32.totalorder %s12, 0
    %p163 = por %p161, %p162
    %p164 = scmp.ne.s32.totalorder %s153, %s156
    %p165 = scmp.eq.s32.totalorder %s17, 1
    %p166 = por %p164, %p165
    %p167 = scmp.ne.s32.totalorder %s156, %s157
    %p168 = scmp.eq.s32.totalorder %s17, 0
    %p169 = por %p167, %p168
    %p170 = scmp.ne.s32.totalorder %s156, %s157
    %p171 = scmp.eq.s32.totalorder %s18, 1
    %p172 = por %p170, %p171
    %p174 = scmp.ne.s32.totalorder %s157, %s173
    %p175 = scmp.eq.s32.totalorder %s18, 0
    %p176 = por %p174, %p175
    %p177 = scmp.le.s32.totalorder 1, %s12
    %p178 = scmp.lt.s32.totalorder %s12, 3
    %p179 = pnand %p177, %p178
    %p180 = pneg %p179
    // Predicated region
    $region9: #{basic_block_forward.1} parent=5 // pred_check
      _
    $region10: #{basic_block_forward.1} parent=5 // pred_check_branch
      %182 = sbr.rel (%p179) target = $region12
    $region11: #{basic_block_forward.1} parent=5 // pred_region
      %s183 = ssub.s32 %s12, 1
      // Predicated region
      $region13: #{basic_block_forward.1} parent=11 // pred_check
        %p184 = pneg %p59
      $region14: #{basic_block_forward.1} parent=11 // pred_check_branch
        %186 = sbr.rel (%p184) target = $region16
      $region15: #{basic_block_forward.1} parent=11 // pred_region
        _
      $region16: #{basic_block_forward.1} parent=11 // pred_fallthru
        _
      // Predicated region
      $region17: #{basic_block_forward.1} parent=11 // pred_check
        %p187 = pneg %p80
      $region18: #{basic_block_forward.1} parent=11 // pred_check_branch
        %189 = sbr.rel (%p187) target = $region20
      $region19: #{basic_block_forward.1} parent=11 // pred_region
        _
      $region20: #{basic_block_forward.1} parent=11 // pred_fallthru
        _
      // Predicated region
      $region21: #{basic_block_forward.1} parent=11 // pred_check
        %p190 = pneg %p101
      $region22: #{basic_block_forward.1} parent=11 // pred_check_branch
        %192 = sbr.rel (%p190) target = $region24
      $region23: #{basic_block_forward.1} parent=11 // pred_region
        _
      $region24: #{basic_block_forward.1} parent=11 // pred_fallthru
        _
      // Predicated region
      $region25: #{basic_block_forward.1} parent=11 // pred_check
        %p193 = pneg %p122
      $region26: #{basic_block_forward.1} parent=11 // pred_check_branch
        %195 = sbr.rel (%p193) target = $region28
      $region27: #{basic_block_forward.1} parent=11 // pred_region
        _
      $region28: #{basic_block_forward.1} parent=11 // pred_fallthru
        _
      // Predicated region
      $region29: #{basic_block_forward.1} parent=11 // pred_check
        %p196 = pneg %p143
      $region30: #{basic_block_forward.1} parent=11 // pred_check_branch
        %198 = sbr.rel (%p196) target = $region32
      $region31: #{basic_block_forward.1} parent=11 // pred_region
        _
      $region32: #{basic_block_forward.1} parent=11 // pred_fallthru
        _
    $region12: #{basic_block_forward.1} parent=5 // pred_fallthru
      _
    %p199 = scmp.lt.s32.totalorder %s12, 2
    // Predicated region
    $region33: #{basic_block_forward.1} parent=5 // pred_check
      %p200 = pneg %p199
    $region34: #{basic_block_forward.1} parent=5 // pred_check_branch
      %202 = sbr.rel (%p200) target = $region36
    $region35: #{basic_block_forward.1} parent=5 // pred_region
      // Predicated region
      $region37: #{basic_block_forward.1} parent=35 // pred_check
        %p203 = pneg %p32
      $region38: #{basic_block_forward.1} parent=35 // pred_check_branch
        %205 = sbr.rel (%p203) target = $region40
      $region39: #{basic_block_forward.1} parent=35 // pred_region
        %p206 = scmp.lt.s32.totalorder %s12, 1
        %s207 = scalar_select %p206, %s12, 1
        %s208 = smul.addr %s207, 80
        %s209 = smul.addr %s208, 8
        %s210 = scalar_lea.vmem %s0, %s209
      $region40: #{basic_block_forward.1} parent=35 // pred_fallthru
        _
    $region36: #{basic_block_forward.1} parent=5 // pred_fallthru
      _
    %p211 = scmp.le.s32.totalorder 1, %s12
    %p212 = scmp.lt.s32.totalorder %s12, 3
    %p213 = pnand %p211, %p212
    %p214 = pneg %p213
    // Predicated region
    $region41: #{basic_block_forward.1} parent=5 // pred_check
      _
    $region42: #{basic_block_forward.1} parent=5 // pred_check_branch
      %216 = sbr.rel (%p213) target = $region44
    $region43: #{basic_block_forward.1} parent=5 // pred_region
      %s217 = ssub.s32 %s12, 1
      %p218 = scmp.lt.s32.totalorder %s17, 1
      %s219 = scalar_select %p218, %s17, 1
      %s220 = smul.addr %s219, 80
      %s221 = smul.addr %s220, 8
      %s222 = scalar_lea.vmem %s0, %s221
      %p223 = pneg %p38
      %p224 = pneg %p35
      %p225 = pneg %p59
      %p226 = pneg %p56
      %p227 = pneg %p80
      %p228 = pneg %p77
      %p229 = pneg %p101
      %p230 = pneg %p98
      %p231 = pneg %p122
      %p232 = pneg %p119
      %p233 = pneg %p143
      %p234 = pneg %p140
      %p235 = pneg %p169
      %p236 = pneg %p166
      %p237 = scmp.lt.s32.totalorder %s17, 1
      %s238 = scalar_select %p237, %s17, 1
      %s239 = smul.addr %s238, 2
      %s240 = smul.addr %s239, 4
      %s241 = scalar_lea.vmem %s6, %s240
      %p242 = scmp.lt.s32.totalorder %s17, 1
      %s243 = scalar_select %p242, %s17, 1
      %s244 = smul.addr %s243, 80
      %s245 = smul.addr %s244, 8
      %s246 = scalar_lea.vmem %s0, %s245
      %p247 = scmp.lt.s32.totalorder %s17, 1
      %s248 = scalar_select %p247, %s17, 1
      %s249 = smul.addr %s248, 2
      %s250 = smul.addr %s249, 4
      %s251 = scalar_lea.vmem %s6, %s250
      %v252 = vld [vmem:[%s246] sm:$0xff]
      %v253 = vld [vmem:[%s246 + $0x8] sm:$0xff]
      %v254 = vld [vmem:[%s246 + $0x10] sm:$0xff]
      %v255 = vld [vmem:[%s246 + $0x18] sm:$0x3]
      %v256 = vld [vmem:[%s246 + $0x20] sm:$0xff]
      %v257 = vld [vmem:[%s246 + $0x28] sm:$0xff]
      %v258 = vld [vmem:[%s246 + $0x30] sm:$0xff]
      %v259 = vld [vmem:[%s246 + $0x38] sm:$0x3]
      %v260 = vld [vmem:[%s246 + $0x40] sm:$0xff]
      %v261 = vld [vmem:[%s246 + $0x48] sm:$0xff]
      %v262 = vld [vmem:[%s246 + $0x50] sm:$0xff]
      %v263 = vld [vmem:[%s246 + $0x58] sm:$0x3]
      %v264 = vld [vmem:[%s246 + $0x60] sm:$0xff]
      %v265 = vld [vmem:[%s246 + $0x68] sm:$0xff]
      %v266 = vld [vmem:[%s246 + $0x70] sm:$0xff]
      %v267 = vld [vmem:[%s246 + $0x78] sm:$0x3]
      %v268 = vld [vmem:[%s246 + $0x80] sm:$0xff]
      %v269 = vld [vmem:[%s246 + $0x88] sm:$0xff]
      %v270 = vld [vmem:[%s246 + $0x90] sm:$0xff]
      %v271 = vld [vmem:[%s246 + $0x98] sm:$0x3]
      %v272 = vld [vmem:[%s246 + $0xa0] sm:$0xff]
      %v273 = vld [vmem:[%s246 + $0xa8] sm:$0xff]
      %v274 = vld [vmem:[%s246 + $0xb0] sm:$0xff]
      %v275 = vld [vmem:[%s246 + $0xb8] sm:$0x3]
      %v276 = vld [vmem:[%s246 + $0xc0] sm:$0xff]
      %v277 = vld [vmem:[%s246 + $0xc8] sm:$0xff]
      %v278 = vld [vmem:[%s246 + $0xd0] sm:$0xff]
      %v279 = vld [vmem:[%s246 + $0xd8] sm:$0x3]
      %v280 = vld [vmem:[%s246 + $0xe0] sm:$0xff]
      %v281 = vld [vmem:[%s246 + $0xe8] sm:$0xff]
      %v282 = vld [vmem:[%s246 + $0xf0] sm:$0xff]
      %v283 = vld [vmem:[%s246 + $0xf8] sm:$0x3]
      %v284 = vld [vmem:[%s246 + $0x100] sm:$0xff]
      %v285 = vld [vmem:[%s246 + $0x108] sm:$0xff]
      %v286 = vld [vmem:[%s246 + $0x110] sm:$0xff]
      %v287 = vld [vmem:[%s246 + $0x118] sm:$0x3]
      %v288 = vld [vmem:[%s246 + $0x120] sm:$0xff]
      %v289 = vld [vmem:[%s246 + $0x128] sm:$0xff]
      %v290 = vld [vmem:[%s246 + $0x130] sm:$0xff]
      %v291 = vld [vmem:[%s246 + $0x138] sm:$0x3]
      %v292 = vld [vmem:[%s246 + $0x140] sm:$0xff]
      %v293 = vld [vmem:[%s246 + $0x148] sm:$0xff]
      %v294 = vld [vmem:[%s246 + $0x150] sm:$0xff]
      %v295 = vld [vmem:[%s246 + $0x158] sm:$0x3]
      %v296 = vld [vmem:[%s246 + $0x160] sm:$0xff]
      %v297 = vld [vmem:[%s246 + $0x168] sm:$0xff]
      %v298 = vld [vmem:[%s246 + $0x170] sm:$0xff]
      %v299 = vld [vmem:[%s246 + $0x178] sm:$0x3]
      %v300 = vld [vmem:[%s246 + $0x180] sm:$0xff]
      %v301 = vld [vmem:[%s246 + $0x188] sm:$0xff]
      %v302 = vld [vmem:[%s246 + $0x190] sm:$0xff]
      %v303 = vld [vmem:[%s246 + $0x198] sm:$0x3]
      %v304 = vld [vmem:[%s246 + $0x1a0] sm:$0xff]
      %v305 = vld [vmem:[%s246 + $0x1a8] sm:$0xff]
      %v306 = vld [vmem:[%s246 + $0x1b0] sm:$0xff]
      %v307 = vld [vmem:[%s246 + $0x1b8] sm:$0x3]
      %v308 = vld [vmem:[%s246 + $0x1c0] sm:$0xff]
      %v309 = vld [vmem:[%s246 + $0x1c8] sm:$0xff]
      %v310 = vld [vmem:[%s246 + $0x1d0] sm:$0xff]
      %v311 = vld [vmem:[%s246 + $0x1d8] sm:$0x3]
      %v312 = vld [vmem:[%s246 + $0x1e0] sm:$0xff]
      %v313 = vld [vmem:[%s246 + $0x1e8] sm:$0xff]
      %v314 = vld [vmem:[%s246 + $0x1f0] sm:$0xff]
      %v315 = vld [vmem:[%s246 + $0x1f8] sm:$0x3]
      %v316 = vld [vmem:[%s246 + $0x200] sm:$0xff]
      %v317 = vld [vmem:[%s246 + $0x208] sm:$0xff]
      %v318 = vld [vmem:[%s246 + $0x210] sm:$0xff]
      %v319 = vld [vmem:[%s246 + $0x218] sm:$0x3]
      %v320 = vld [vmem:[%s246 + $0x220] sm:$0xff]
      %v321 = vld [vmem:[%s246 + $0x228] sm:$0xff]
      %v322 = vld [vmem:[%s246 + $0x230] sm:$0xff]
      %v323 = vld [vmem:[%s246 + $0x238] sm:$0x3]
      %v324 = vld [vmem:[%s246 + $0x240] sm:$0xff]
      %v325 = vld [vmem:[%s246 + $0x248] sm:$0xff]
      %v326 = vld [vmem:[%s246 + $0x250] sm:$0xff]
      %v327 = vld [vmem:[%s246 + $0x258] sm:$0x3]
      %v328 = vld [vmem:[%s246 + $0x260] sm:$0xff]
      %v329 = vld [vmem:[%s246 + $0x268] sm:$0xff]
      %v330 = vld [vmem:[%s246 + $0x270] sm:$0xff]
      %v331 = vld [vmem:[%s246 + $0x278] sm:$0x3]
      %v332 = vld [vmem:[%s2] sm:$0xf]
      %vm405 = vcmask 1046528
      %v406 = vrot.slane %v252, 1
      %v407 = vrot.slane %v253, 1
      %v408 = vsel %vm405, %v406, %v407
      %v409 = vrot.slane %v254, 1
      %v410 = vsel %vm405, %v407, %v409
      %v411 = vrot.slane %v255, 1
      %v412 = vsel %vm405, %v409, %v411
      %v413 = vrot.slane %v256, 1
      %v414 = vrot.slane %v257, 1
      %v415 = vsel %vm405, %v413, %v414
      %v416 = vrot.slane %v258, 1
      %v417 = vsel %vm405, %v414, %v416
      %v418 = vrot.slane %v259, 1
      %v419 = vsel %vm405, %v416, %v418
      %v420 = vrot.slane %v260, 1
      %v421 = vrot.slane %v261, 1
      %v422 = vsel %vm405, %v420, %v421
      %v423 = vrot.slane %v262, 1
      %v424 = vsel %vm405, %v421, %v423
      %v425 = vrot.slane %v263, 1
      %v426 = vsel %vm405, %v423, %v425
      %v427 = vrot.slane %v264, 1
      %v428 = vrot.slane %v265, 1
      %v429 = vsel %vm405, %v427, %v428
      %v430 = vrot.slane %v266, 1
      %v431 = vsel %vm405, %v428, %v430
      %v432 = vrot.slane %v267, 1
      %v433 = vsel %vm405, %v430, %v432
      %v434 = vrot.slane %v268, 1
      %v435 = vrot.slane %v269, 1
      %v436 = vsel %vm405, %v434, %v435
      %v437 = vrot.slane %v270, 1
      %v438 = vsel %vm405, %v435, %v437
      %v439 = vrot.slane %v271, 1
      %v440 = vsel %vm405, %v437, %v439
      %v441 = vrot.slane %v272, 1
      %v442 = vrot.slane %v273, 1
      %v443 = vsel %vm405, %v441, %v442
      %v444 = vrot.slane %v274, 1
      %v445 = vsel %vm405, %v442, %v444
      %v446 = vrot.slane %v275, 1
      %v447 = vsel %vm405, %v444, %v446
      %v448 = vrot.slane %v276, 1
      %v449 = vrot.slane %v277, 1
      %v450 = vsel %vm405, %v448, %v449
      %v451 = vrot.slane %v278, 1
      %v452 = vsel %vm405, %v449, %v451
      %v453 = vrot.slane %v279, 1
      %v454 = vsel %vm405, %v451, %v453
      %v455 = vrot.slane %v280, 1
      %v456 = vrot.slane %v281, 1
      %v457 = vsel %vm405, %v455, %v456
      %v458 = vrot.slane %v282, 1
      %v459 = vsel %vm405, %v456, %v458
      %v460 = vrot.slane %v283, 1
      %v461 = vsel %vm405, %v458, %v460
      %v462 = vrot.slane %v284, 1
      %v463 = vrot.slane %v285, 1
      %v464 = vsel %vm405, %v462, %v463
      %v465 = vrot.slane %v286, 1
      %v466 = vsel %vm405, %v463, %v465
      %v467 = vrot.slane %v287, 1
      %v468 = vsel %vm405, %v465, %v467
      %v469 = vrot.slane %v288, 1
      %v470 = vrot.slane %v289, 1
      %v471 = vsel %vm405, %v469, %v470
      %v472 = vrot.slane %v290, 1
      %v473 = vsel %vm405, %v470, %v472
      %v474 = vrot.slane %v291, 1
      %v475 = vsel %vm405, %v472, %v474
      %v476 = vrot.slane %v292, 1
      %v477 = vrot.slane %v293, 1
      %v478 = vsel %vm405, %v476, %v477
      %v479 = vrot.slane %v294, 1
      %v480 = vsel %vm405, %v477, %v479
      %v481 = vrot.slane %v295, 1
      %v482 = vsel %vm405, %v479, %v481
      %v483 = vrot.slane %v296, 1
      %v484 = vrot.slane %v297, 1
      %v485 = vsel %vm405, %v483, %v484
      %v486 = vrot.slane %v298, 1
      %v487 = vsel %vm405, %v484, %v486
      %v488 = vrot.slane %v299, 1
      %v489 = vsel %vm405, %v486, %v488
      %v490 = vrot.slane %v300, 1
      %v491 = vrot.slane %v301, 1
      %v492 = vsel %vm405, %v490, %v491
      %v493 = vrot.slane %v302, 1
      %v494 = vsel %vm405, %v491, %v493
      %v495 = vrot.slane %v303, 1
      %v496 = vsel %vm405, %v493, %v495
      %v497 = vrot.slane %v304, 1
      %v498 = vrot.slane %v305, 1
      %v499 = vsel %vm405, %v497, %v498
      %v500 = vrot.slane %v306, 1
      %v501 = vsel %vm405, %v498, %v500
      %v502 = vrot.slane %v307, 1
      %v503 = vsel %vm405, %v500, %v502
      %v504 = vrot.slane %v308, 1
      %v505 = vrot.slane %v309, 1
      %v506 = vsel %vm405, %v504, %v505
      %v507 = vrot.slane %v310, 1
      %v508 = vsel %vm405, %v505, %v507
      %v509 = vrot.slane %v311, 1
      %v510 = vsel %vm405, %v507, %v509
      %v511 = vrot.slane %v312, 1
      %v512 = vrot.slane %v313, 1
      %v513 = vsel %vm405, %v511, %v512
      %v514 = vrot.slane %v314, 1
      %v515 = vsel %vm405, %v512, %v514
      %v516 = vrot.slane %v315, 1
      %v517 = vsel %vm405, %v514, %v516
      %v518 = vrot.slane %v316, 1
      %v519 = vrot.slane %v317, 1
      %v520 = vsel %vm405, %v518, %v519
      %v521 = vrot.slane %v318, 1
      %v522 = vsel %vm405, %v519, %v521
      %v523 = vrot.slane %v319, 1
      %v524 = vsel %vm405, %v521, %v523
      %v525 = vrot.slane %v320, 1
      %v526 = vrot.slane %v321, 1
      %v527 = vsel %vm405, %v525, %v526
      %v528 = vrot.slane %v322, 1
      %v529 = vsel %vm405, %v526, %v528
      %v530 = vrot.slane %v323, 1
      %v531 = vsel %vm405, %v528, %v530
      %s532 = scalar_lea.vmem %s2, 4
      %v533 = vld [vmem:[%s532] sm:$0xf]
      %vm534 = vcmask 31744
      %v535 = vsel %vm534, %v408, 0
      %v537 = vsel %vm534, %v410, 0
      %v539 = vsel %vm534, %v412, 0
      %v541 = vsel %vm534, %v415, 0
      %v543 = vsel %vm534, %v417, 0
      %v545 = vsel %vm534, %v419, 0
      %v547 = vsel %vm534, %v422, 0
      %v549 = vsel %vm534, %v424, 0
      %v551 = vsel %vm534, %v426, 0
      %v553 = vsel %vm534, %v429, 0
      %v555 = vsel %vm534, %v431, 0
      %v557 = vsel %vm534, %v433, 0
      %v559 = vsel %vm534, %v436, 0
      %v561 = vsel %vm534, %v438, 0
      %v563 = vsel %vm534, %v440, 0
      %v565 = vsel %vm534, %v443, 0
      %v567 = vsel %vm534, %v445, 0
      %v569 = vsel %vm534, %v447, 0
      %v571 = vsel %vm534, %v450, 0
      %v573 = vsel %vm534, %v452, 0
      %v575 = vsel %vm534, %v454, 0
      %v577 = vsel %vm534, %v457, 0
      %v579 = vsel %vm534, %v459, 0
      %v581 = vsel %vm534, %v461, 0
      %v583 = vsel %vm534, %v464, 0
      %v585 = vsel %vm534, %v466, 0
      %v587 = vsel %vm534, %v468, 0
      %v589 = vsel %vm534, %v471, 0
      %v591 = vsel %vm534, %v473, 0
      %v593 = vsel %vm534, %v475, 0
      %v595 = vsel %vm534, %v478, 0
      %v597 = vsel %vm534, %v480, 0
      %v599 = vsel %vm534, %v482, 0
      %v601 = vsel %vm534, %v485, 0
      %v603 = vsel %vm534, %v487, 0
      %v605 = vsel %vm534, %v489, 0
      %v607 = vsel %vm534, %v492, 0
      %v609 = vsel %vm534, %v494, 0
      %v611 = vsel %vm534, %v496, 0
      %v613 = vsel %vm534, %v499, 0
      %v615 = vsel %vm534, %v501, 0
      %v617 = vsel %vm534, %v503, 0
      %v619 = vsel %vm534, %v506, 0
      %v621 = vsel %vm534, %v508, 0
      %v623 = vsel %vm534, %v510, 0
      %v625 = vsel %vm534, %v513, 0
      %v627 = vsel %vm534, %v515, 0
      %v629 = vsel %vm534, %v517, 0
      %v631 = vsel %vm534, %v520, 0
      %v633 = vsel %vm534, %v522, 0
      %v635 = vsel %vm534, %v524, 0
      %v637 = vsel %vm534, %v527, 0
      %v639 = vsel %vm534, %v529, 0
      %v641 = vsel %vm534, %v531, 0
      %vm643 = vcmask 1043456
      %v645 = vsel %vm643, %v533, 0
      %647 = vmatpush.msra.mxu0 0.0
      %648 = vmatpush.msra.mxu0 0.0
      %649 = vmatpush.msra.mxu0 0.0
      %650 = vmatpush.msra.mxu0 0.0
      %651 = vmatpush.msra.mxu0 0.0
      %652 = vmatpush.msra.mxu0 0.0
      %653 = vmatpush.msra.mxu0 0.0
      %654 = vmatpush.msra.mxu0 0.0
      %655 = vmatpush.msra.mxu0 0.0
      %656 = vmatpush.msra.mxu0 0.0
      %657 = vmatpush.msra.mxu0 0.0
      %658 = vmatpush.msra.mxu0 0.0
      %659 = vmatpush.msra.mxu0 0.0
      %660 = vmatpush.msra.mxu0 0.0
      %661 = vmatpush.msra.mxu0 0.0
      %662 = vmatpush.msra.mxu0 %v645
      %663 = vmatmul.f32.gmra.mxu0 %v535
      %v664 = vpop.f32.mrf.mxu0
      %v665 = vadd.f32 0.0, %v664
      %666 = vmatmul.f32.gmra.mxu0 %v537
      %v667 = vpop.f32.mrf.mxu0
      %v668 = vadd.f32 0.0, %v667
      %669 = vmatmul.f32.gmra.mxu0 %v539
      %v670 = vpop.f32.mrf.mxu0
      %v671 = vadd.f32 0.0, %v670
      %672 = vmatmul.f32.gmra.mxu0 %v541
      %v673 = vpop.f32.mrf.mxu0
      %v674 = vadd.f32 0.0, %v673
      %675 = vmatmul.f32.gmra.mxu0 %v543
      %v676 = vpop.f32.mrf.mxu0
      %v677 = vadd.f32 0.0, %v676
      %678 = vmatmul.f32.gmra.mxu0 %v545
      %v679 = vpop.f32.mrf.mxu0
      %v680 = vadd.f32 0.0, %v679
      %681 = vmatmul.f32.gmra.mxu0 %v547
      %v682 = vpop.f32.mrf.mxu0
      %v683 = vadd.f32 0.0, %v682
      %684 = vmatmul.f32.gmra.mxu0 %v549
      %v685 = vpop.f32.mrf.mxu0
      %v686 = vadd.f32 0.0, %v685
      %687 = vmatmul.f32.gmra.mxu0 %v551
      %v688 = vpop.f32.mrf.mxu0
      %v689 = vadd.f32 0.0, %v688
      %690 = vmatmul.f32.gmra.mxu0 %v553
      %v691 = vpop.f32.mrf.mxu0
      %v692 = vadd.f32 0.0, %v691
      %693 = vmatmul.f32.gmra.mxu0 %v555
      %v694 = vpop.f32.mrf.mxu0
      %v695 = vadd.f32 0.0, %v694
      %696 = vmatmul.f32.gmra.mxu0 %v557
      %v697 = vpop.f32.mrf.mxu0
      %v698 = vadd.f32 0.0, %v697
      %699 = vmatmul.f32.gmra.mxu0 %v559
      %v700 = vpop.f32.mrf.mxu0
      %v701 = vadd.f32 0.0, %v700
      %702 = vmatmul.f32.gmra.mxu0 %v561
      %v703 = vpop.f32.mrf.mxu0
      %v704 = vadd.f32 0.0, %v703
      %705 = vmatmul.f32.gmra.mxu0 %v563
      %v706 = vpop.f32.mrf.mxu0
      %v707 = vadd.f32 0.0, %v706
      %708 = vmatmul.f32.gmra.mxu0 %v565
      %v709 = vpop.f32.mrf.mxu0
      %v710 = vadd.f32 0.0, %v709
      %711 = vmatmul.f32.gmra.mxu0 %v567
      %v712 = vpop.f32.mrf.mxu0
      %v713 = vadd.f32 0.0, %v712
      %714 = vmatmul.f32.gmra.mxu0 %v569
      %v715 = vpop.f32.mrf.mxu0
      %v716 = vadd.f32 0.0, %v715
      %717 = vmatmul.f32.gmra.mxu0 %v571
      %v718 = vpop.f32.mrf.mxu0
      %v719 = vadd.f32 0.0, %v718
      %720 = vmatmul.f32.gmra.mxu0 %v573
      %v721 = vpop.f32.mrf.mxu0
      %v722 = vadd.f32 0.0, %v721
      %723 = vmatmul.f32.gmra.mxu0 %v575
      %v724 = vpop.f32.mrf.mxu0
      %v725 = vadd.f32 0.0, %v724
      %726 = vmatmul.f32.gmra.mxu0 %v577
      %v727 = vpop.f32.mrf.mxu0
      %v728 = vadd.f32 0.0, %v727
      %729 = vmatmul.f32.gmra.mxu0 %v579
      %v730 = vpop.f32.mrf.mxu0
      %v731 = vadd.f32 0.0, %v730
      %732 = vmatmul.f32.gmra.mxu0 %v581
      %v733 = vpop.f32.mrf.mxu0
      %v734 = vadd.f32 0.0, %v733
      %735 = vmatmul.f32.gmra.mxu0 %v583
      %v736 = vpop.f32.mrf.mxu0
      %v737 = vadd.f32 0.0, %v736
      %738 = vmatmul.f32.gmra.mxu0 %v585
      %v739 = vpop.f32.mrf.mxu0
      %v740 = vadd.f32 0.0, %v739
      %741 = vmatmul.f32.gmra.mxu0 %v587
      %v742 = vpop.f32.mrf.mxu0
      %v743 = vadd.f32 0.0, %v742
      %744 = vmatmul.f32.gmra.mxu0 %v589
      %v745 = vpop.f32.mrf.mxu0
      %v746 = vadd.f32 0.0, %v745
      %747 = vmatmul.f32.gmra.mxu0 %v591
      %v748 = vpop.f32.mrf.mxu0
      %v749 = vadd.f32 0.0, %v748
      %750 = vmatmul.f32.gmra.mxu0 %v593
      %v751 = vpop.f32.mrf.mxu0
      %v752 = vadd.f32 0.0, %v751
      %753 = vmatmul.f32.gmra.mxu0 %v595
      %v754 = vpop.f32.mrf.mxu0
      %v755 = vadd.f32 0.0, %v754
      %756 = vmatmul.f32.gmra.mxu0 %v597
      %v757 = vpop.f32.mrf.mxu0
      %v758 = vadd.f32 0.0, %v757
      %759 = vmatmul.f32.gmra.mxu0 %v599
      %v760 = vpop.f32.mrf.mxu0
      %v761 = vadd.f32 0.0, %v760
      %762 = vmatmul.f32.gmra.mxu0 %v601
      %v763 = vpop.f32.mrf.mxu0
      %v764 = vadd.f32 0.0, %v763
      %765 = vmatmul.f32.gmra.mxu0 %v603
      %v766 = vpop.f32.mrf.mxu0
      %v767 = vadd.f32 0.0, %v766
      %768 = vmatmul.f32.gmra.mxu0 %v605
      %v769 = vpop.f32.mrf.mxu0
      %v770 = vadd.f32 0.0, %v769
      %771 = vmatmul.f32.gmra.mxu0 %v607
      %v772 = vpop.f32.mrf.mxu0
      %v773 = vadd.f32 0.0, %v772
      %774 = vmatmul.f32.gmra.mxu0 %v609
      %v775 = vpop.f32.mrf.mxu0
      %v776 = vadd.f32 0.0, %v775
      %777 = vmatmul.f32.gmra.mxu0 %v611
      %v778 = vpop.f32.mrf.mxu0
      %v779 = vadd.f32 0.0, %v778
      %780 = vmatmul.f32.gmra.mxu0 %v613
      %v781 = vpop.f32.mrf.mxu0
      %v782 = vadd.f32 0.0, %v781
      %783 = vmatmul.f32.gmra.mxu0 %v615
      %v784 = vpop.f32.mrf.mxu0
      %v785 = vadd.f32 0.0, %v784
      %786 = vmatmul.f32.gmra.mxu0 %v617
      %v787 = vpop.f32.mrf.mxu0
      %v788 = vadd.f32 0.0, %v787
      %789 = vmatmul.f32.gmra.mxu0 %v619
      %v790 = vpop.f32.mrf.mxu0
      %v791 = vadd.f32 0.0, %v790
      %792 = vmatmul.f32.gmra.mxu0 %v621
      %v793 = vpop.f32.mrf.mxu0
      %v794 = vadd.f32 0.0, %v793
      %795 = vmatmul.f32.gmra.mxu0 %v623
      %v796 = vpop.f32.mrf.mxu0
      %v797 = vadd.f32 0.0, %v796
      %798 = vmatmul.f32.gmra.mxu0 %v625
      %v799 = vpop.f32.mrf.mxu0
      %v800 = vadd.f32 0.0, %v799
      %801 = vmatmul.f32.gmra.mxu0 %v627
      %v802 = vpop.f32.mrf.mxu0
      %v803 = vadd.f32 0.0, %v802
      %804 = vmatmul.f32.gmra.mxu0 %v629
      %v805 = vpop.f32.mrf.mxu0
      %v806 = vadd.f32 0.0, %v805
      %807 = vmatmul.f32.gmra.mxu0 %v631
      %v808 = vpop.f32.mrf.mxu0
      %v809 = vadd.f32 0.0, %v808
      %810 = vmatmul.f32.gmra.mxu0 %v633
      %v811 = vpop.f32.mrf.mxu0
      %v812 = vadd.f32 0.0, %v811
      %813 = vmatmul.f32.gmra.mxu0 %v635
      %v814 = vpop.f32.mrf.mxu0
      %v815 = vadd.f32 0.0, %v814
      %816 = vmatmul.f32.gmra.mxu0 %v637
      %v817 = vpop.f32.mrf.mxu0
      %v818 = vadd.f32 0.0, %v817
      %819 = vmatmul.f32.gmra.mxu0 %v639
      %v820 = vpop.f32.mrf.mxu0
      %v821 = vadd.f32 0.0, %v820
      %822 = vmatmul.f32.gmra.mxu0 %v641
      %v823 = vpop.f32.mrf.mxu0
      %v824 = vadd.f32 0.0, %v823
      %825 = vdwg.mxu0
      %v826 = vsel %vm534, %v252, 0
      %v828 = vsel %vm534, %v253, 0
      %v830 = vsel %vm534, %v254, 0
      %v832 = vsel %vm534, %v256, 0
      %v834 = vsel %vm534, %v257, 0
      %v836 = vsel %vm534, %v258, 0
      %v838 = vsel %vm534, %v260, 0
      %v840 = vsel %vm534, %v261, 0
      %v842 = vsel %vm534, %v262, 0
      %v844 = vsel %vm534, %v264, 0
      %v846 = vsel %vm534, %v265, 0
      %v848 = vsel %vm534, %v266, 0
      %v850 = vsel %vm534, %v268, 0
      %v852 = vsel %vm534, %v269, 0
      %v854 = vsel %vm534, %v270, 0
      %v856 = vsel %vm534, %v272, 0
      %v858 = vsel %vm534, %v273, 0
      %v860 = vsel %vm534, %v274, 0
      %v862 = vsel %vm534, %v276, 0
      %v864 = vsel %vm534, %v277, 0
      %v866 = vsel %vm534, %v278, 0
      %v868 = vsel %vm534, %v280, 0
      %v870 = vsel %vm534, %v281, 0
      %v872 = vsel %vm534, %v282, 0
      %v874 = vsel %vm534, %v284, 0
      %v876 = vsel %vm534, %v285, 0
      %v878 = vsel %vm534, %v286, 0
      %v880 = vsel %vm534, %v288, 0
      %v882 = vsel %vm534, %v289, 0
      %v884 = vsel %vm534, %v290, 0
      %v886 = vsel %vm534, %v292, 0
      %v888 = vsel %vm534, %v293, 0
      %v890 = vsel %vm534, %v294, 0
      %v892 = vsel %vm534, %v296, 0
      %v894 = vsel %vm534, %v297, 0
      %v896 = vsel %vm534, %v298, 0
      %v898 = vsel %vm534, %v300, 0
      %v900 = vsel %vm534, %v301, 0
      %v902 = vsel %vm534, %v302, 0
      %v904 = vsel %vm534, %v304, 0
      %v906 = vsel %vm534, %v305, 0
      %v908 = vsel %vm534, %v306, 0
      %v910 = vsel %vm534, %v308, 0
      %v912 = vsel %vm534, %v309, 0
      %v914 = vsel %vm534, %v310, 0
      %v916 = vsel %vm534, %v312, 0
      %v918 = vsel %vm534, %v313, 0
      %v920 = vsel %vm534, %v314, 0
      %v922 = vsel %vm534, %v316, 0
      %v924 = vsel %vm534, %v317, 0
      %v926 = vsel %vm534, %v318, 0
      %v928 = vsel %vm534, %v320, 0
      %v930 = vsel %vm534, %v321, 0
      %v932 = vsel %vm534, %v322, 0
      %v935 = vsel %vm643, %v332, 0
      %937 = vmatpush.msra.mxu0 0.0
      %938 = vmatpush.msra.mxu0 0.0
      %939 = vmatpush.msra.mxu0 0.0
      %940 = vmatpush.msra.mxu0 0.0
      %941 = vmatpush.msra.mxu0 0.0
      %942 = vmatpush.msra.mxu0 0.0
      %943 = vmatpush.msra.mxu0 0.0
      %944 = vmatpush.msra.mxu0 0.0
      %945 = vmatpush.msra.mxu0 0.0
      %946 = vmatpush.msra.mxu0 0.0
      %947 = vmatpush.msra.mxu0 0.0
      %948 = vmatpush.msra.mxu0 0.0
      %949 = vmatpush.msra.mxu0 0.0
      %950 = vmatpush.msra.mxu0 0.0
      %951 = vmatpush.msra.mxu0 0.0
      %952 = vmatpush.msra.mxu0 %v935
      %953 = vmatmul.f32.gmra.mxu0 %v826
      %v954 = vpop.f32.mrf.mxu0
      %v955 = vadd.f32 %v665, %v954
      %956 = vmatmul.f32.gmra.mxu0 %v828
      %v957 = vpop.f32.mrf.mxu0
      %v958 = vadd.f32 %v668, %v957
      %959 = vmatmul.f32.gmra.mxu0 %v830
      %v960 = vpop.f32.mrf.mxu0
      %v961 = vadd.f32 %v671, %v960
      %962 = vmatmul.f32.gmra.mxu0 %v832
      %v963 = vpop.f32.mrf.mxu0
      %v964 = vadd.f32 %v674, %v963
      %965 = vmatmul.f32.gmra.mxu0 %v834
      %v966 = vpop.f32.mrf.mxu0
      %v967 = vadd.f32 %v677, %v966
      %968 = vmatmul.f32.gmra.mxu0 %v836
      %v969 = vpop.f32.mrf.mxu0
      %v970 = vadd.f32 %v680, %v969
      %971 = vmatmul.f32.gmra.mxu0 %v838
      %v972 = vpop.f32.mrf.mxu0
      %v973 = vadd.f32 %v683, %v972
      %974 = vmatmul.f32.gmra.mxu0 %v840
      %v975 = vpop.f32.mrf.mxu0
      %v976 = vadd.f32 %v686, %v975
      %977 = vmatmul.f32.gmra.mxu0 %v842
      %v978 = vpop.f32.mrf.mxu0
      %v979 = vadd.f32 %v689, %v978
      %980 = vmatmul.f32.gmra.mxu0 %v844
      %v981 = vpop.f32.mrf.mxu0
      %v982 = vadd.f32 %v692, %v981
      %983 = vmatmul.f32.gmra.mxu0 %v846
      %v984 = vpop.f32.mrf.mxu0
      %v985 = vadd.f32 %v695, %v984
      %986 = vmatmul.f32.gmra.mxu0 %v848
      %v987 = vpop.f32.mrf.mxu0
      %v988 = vadd.f32 %v698, %v987
      %989 = vmatmul.f32.gmra.mxu0 %v850
      %v990 = vpop.f32.mrf.mxu0
      %v991 = vadd.f32 %v701, %v990
      %992 = vmatmul.f32.gmra.mxu0 %v852
      %v993 = vpop.f32.mrf.mxu0
      %v994 = vadd.f32 %v704, %v993
      %995 = vmatmul.f32.gmra.mxu0 %v854
      %v996 = vpop.f32.mrf.mxu0
      %v997 = vadd.f32 %v707, %v996
      %998 = vmatmul.f32.gmra.mxu0 %v856
      %v999 = vpop.f32.mrf.mxu0
      %v1000 = vadd.f32 %v710, %v999
      %1001 = vmatmul.f32.gmra.mxu0 %v858
      %v1002 = vpop.f32.mrf.mxu0
      %v1003 = vadd.f32 %v713, %v1002
      %1004 = vmatmul.f32.gmra.mxu0 %v860
      %v1005 = vpop.f32.mrf.mxu0
      %v1006 = vadd.f32 %v716, %v1005
      %1007 = vmatmul.f32.gmra.mxu0 %v862
      %v1008 = vpop.f32.mrf.mxu0
      %v1009 = vadd.f32 %v719, %v1008
      %1010 = vmatmul.f32.gmra.mxu0 %v864
      %v1011 = vpop.f32.mrf.mxu0
      %v1012 = vadd.f32 %v722, %v1011
      %1013 = vmatmul.f32.gmra.mxu0 %v866
      %v1014 = vpop.f32.mrf.mxu0
      %v1015 = vadd.f32 %v725, %v1014
      %1016 = vmatmul.f32.gmra.mxu0 %v868
      %v1017 = vpop.f32.mrf.mxu0
      %v1018 = vadd.f32 %v728, %v1017
      %1019 = vmatmul.f32.gmra.mxu0 %v870
      %v1020 = vpop.f32.mrf.mxu0
      %v1021 = vadd.f32 %v731, %v1020
      %1022 = vmatmul.f32.gmra.mxu0 %v872
      %v1023 = vpop.f32.mrf.mxu0
      %v1024 = vadd.f32 %v734, %v1023
      %1025 = vmatmul.f32.gmra.mxu0 %v874
      %v1026 = vpop.f32.mrf.mxu0
      %v1027 = vadd.f32 %v737, %v1026
      %1028 = vmatmul.f32.gmra.mxu0 %v876
      %v1029 = vpop.f32.mrf.mxu0
      %v1030 = vadd.f32 %v740, %v1029
      %1031 = vmatmul.f32.gmra.mxu0 %v878
      %v1032 = vpop.f32.mrf.mxu0
      %v1033 = vadd.f32 %v743, %v1032
      %1034 = vmatmul.f32.gmra.mxu0 %v880
      %v1035 = vpop.f32.mrf.mxu0
      %v1036 = vadd.f32 %v746, %v1035
      %1037 = vmatmul.f32.gmra.mxu0 %v882
      %v1038 = vpop.f32.mrf.mxu0
      %v1039 = vadd.f32 %v749, %v1038
      %1040 = vmatmul.f32.gmra.mxu0 %v884
      %v1041 = vpop.f32.mrf.mxu0
      %v1042 = vadd.f32 %v752, %v1041
      %1043 = vmatmul.f32.gmra.mxu0 %v886
      %v1044 = vpop.f32.mrf.mxu0
      %v1045 = vadd.f32 %v755, %v1044
      %1046 = vmatmul.f32.gmra.mxu0 %v888
      %v1047 = vpop.f32.mrf.mxu0
      %v1048 = vadd.f32 %v758, %v1047
      %1049 = vmatmul.f32.gmra.mxu0 %v890
      %v1050 = vpop.f32.mrf.mxu0
      %v1051 = vadd.f32 %v761, %v1050
      %1052 = vmatmul.f32.gmra.mxu0 %v892
      %v1053 = vpop.f32.mrf.mxu0
      %v1054 = vadd.f32 %v764, %v1053
      %1055 = vmatmul.f32.gmra.mxu0 %v894
      %v1056 = vpop.f32.mrf.mxu0
      %v1057 = vadd.f32 %v767, %v1056
      %1058 = vmatmul.f32.gmra.mxu0 %v896
      %v1059 = vpop.f32.mrf.mxu0
      %v1060 = vadd.f32 %v770, %v1059
      %1061 = vmatmul.f32.gmra.mxu0 %v898
      %v1062 = vpop.f32.mrf.mxu0
      %v1063 = vadd.f32 %v773, %v1062
      %1064 = vmatmul.f32.gmra.mxu0 %v900
      %v1065 = vpop.f32.mrf.mxu0
      %v1066 = vadd.f32 %v776, %v1065
      %1067 = vmatmul.f32.gmra.mxu0 %v902
      %v1068 = vpop.f32.mrf.mxu0
      %v1069 = vadd.f32 %v779, %v1068
      %1070 = vmatmul.f32.gmra.mxu0 %v904
      %v1071 = vpop.f32.mrf.mxu0
      %v1072 = vadd.f32 %v782, %v1071
      %1073 = vmatmul.f32.gmra.mxu0 %v906
      %v1074 = vpop.f32.mrf.mxu0
      %v1075 = vadd.f32 %v785, %v1074
      %1076 = vmatmul.f32.gmra.mxu0 %v908
      %v1077 = vpop.f32.mrf.mxu0
      %v1078 = vadd.f32 %v788, %v1077
      %1079 = vmatmul.f32.gmra.mxu0 %v910
      %v1080 = vpop.f32.mrf.mxu0
      %v1081 = vadd.f32 %v791, %v1080
      %1082 = vmatmul.f32.gmra.mxu0 %v912
      %v1083 = vpop.f32.mrf.mxu0
      %v1084 = vadd.f32 %v794, %v1083
      %1085 = vmatmul.f32.gmra.mxu0 %v914
      %v1086 = vpop.f32.mrf.mxu0
      %v1087 = vadd.f32 %v797, %v1086
      %1088 = vmatmul.f32.gmra.mxu0 %v916
      %v1089 = vpop.f32.mrf.mxu0
      %v1090 = vadd.f32 %v800, %v1089
      %1091 = vmatmul.f32.gmra.mxu0 %v918
      %v1092 = vpop.f32.mrf.mxu0
      %v1093 = vadd.f32 %v803, %v1092
      %1094 = vmatmul.f32.gmra.mxu0 %v920
      %v1095 = vpop.f32.mrf.mxu0
      %v1096 = vadd.f32 %v806, %v1095
      %1097 = vmatmul.f32.gmra.mxu0 %v922
      %v1098 = vpop.f32.mrf.mxu0
      %v1099 = vadd.f32 %v809, %v1098
      %1100 = vmatmul.f32.gmra.mxu0 %v924
      %v1101 = vpop.f32.mrf.mxu0
      %v1102 = vadd.f32 %v812, %v1101
      %1103 = vmatmul.f32.gmra.mxu0 %v926
      %v1104 = vpop.f32.mrf.mxu0
      %v1105 = vadd.f32 %v815, %v1104
      %1106 = vmatmul.f32.gmra.mxu0 %v928
      %v1107 = vpop.f32.mrf.mxu0
      %v1108 = vadd.f32 %v818, %v1107
      %1109 = vmatmul.f32.gmra.mxu0 %v930
      %v1110 = vpop.f32.mrf.mxu0
      %v1111 = vadd.f32 %v821, %v1110
      %1112 = vmatmul.f32.gmra.mxu0 %v932
      %v1113 = vpop.f32.mrf.mxu0
      %v1114 = vadd.f32 %v824, %v1113
      %1115 = vdwg.mxu0
      %vm1116 = vcmask 1045504
      %v1117 = vrot.slane %v252, 2
      %v1118 = vrot.slane %v253, 2
      %v1119 = vsel %vm1116, %v1117, %v1118
      %v1120 = vrot.slane %v254, 2
      %v1121 = vsel %vm1116, %v1118, %v1120
      %v1122 = vrot.slane %v255, 2
      %v1123 = vsel %vm1116, %v1120, %v1122
      %v1124 = vrot.slane %v256, 2
      %v1125 = vrot.slane %v257, 2
      %v1126 = vsel %vm1116, %v1124, %v1125
      %v1127 = vrot.slane %v258, 2
      %v1128 = vsel %vm1116, %v1125, %v1127
      %v1129 = vrot.slane %v259, 2
      %v1130 = vsel %vm1116, %v1127, %v1129
      %v1131 = vrot.slane %v260, 2
      %v1132 = vrot.slane %v261, 2
      %v1133 = vsel %vm1116, %v1131, %v1132
      %v1134 = vrot.slane %v262, 2
      %v1135 = vsel %vm1116, %v1132, %v1134
      %v1136 = vrot.slane %v263, 2
      %v1137 = vsel %vm1116, %v1134, %v1136
      %v1138 = vrot.slane %v264, 2
      %v1139 = vrot.slane %v265, 2
      %v1140 = vsel %vm1116, %v1138, %v1139
      %v1141 = vrot.slane %v266, 2
      %v1142 = vsel %vm1116, %v1139, %v1141
      %v1143 = vrot.slane %v267, 2
      %v1144 = vsel %vm1116, %v1141, %v1143
      %v1145 = vrot.slane %v268, 2
      %v1146 = vrot.slane %v269, 2
      %v1147 = vsel %vm1116, %v1145, %v1146
      %v1148 = vrot.slane %v270, 2
      %v1149 = vsel %vm1116, %v1146, %v1148
      %v1150 = vrot.slane %v271, 2
      %v1151 = vsel %vm1116, %v1148, %v1150
      %v1152 = vrot.slane %v272, 2
      %v1153 = vrot.slane %v273, 2
      %v1154 = vsel %vm1116, %v1152, %v1153
      %v1155 = vrot.slane %v274, 2
      %v1156 = vsel %vm1116, %v1153, %v1155
      %v1157 = vrot.slane %v275, 2
      %v1158 = vsel %vm1116, %v1155, %v1157
      %v1159 = vrot.slane %v276, 2
      %v1160 = vrot.slane %v277, 2
      %v1161 = vsel %vm1116, %v1159, %v1160
      %v1162 = vrot.slane %v278, 2
      %v1163 = vsel %vm1116, %v1160, %v1162
      %v1164 = vrot.slane %v279, 2
      %v1165 = vsel %vm1116, %v1162, %v1164
      %v1166 = vrot.slane %v280, 2
      %v1167 = vrot.slane %v281, 2
      %v1168 = vsel %vm1116, %v1166, %v1167
      %v1169 = vrot.slane %v282, 2
      %v1170 = vsel %vm1116, %v1167, %v1169
      %v1171 = vrot.slane %v283, 2
      %v1172 = vsel %vm1116, %v1169, %v1171
      %v1173 = vrot.slane %v284, 2
      %v1174 = vrot.slane %v285, 2
      %v1175 = vsel %vm1116, %v1173, %v1174
      %v1176 = vrot.slane %v286, 2
      %v1177 = vsel %vm1116, %v1174, %v1176
      %v1178 = vrot.slane %v287, 2
      %v1179 = vsel %vm1116, %v1176, %v1178
      %v1180 = vrot.slane %v288, 2
      %v1181 = vrot.slane %v289, 2
      %v1182 = vsel %vm1116, %v1180, %v1181
      %v1183 = vrot.slane %v290, 2
      %v1184 = vsel %vm1116, %v1181, %v1183
      %v1185 = vrot.slane %v291, 2
      %v1186 = vsel %vm1116, %v1183, %v1185
      %v1187 = vrot.slane %v292, 2
      %v1188 = vrot.slane %v293, 2
      %v1189 = vsel %vm1116, %v1187, %v1188
      %v1190 = vrot.slane %v294, 2
      %v1191 = vsel %vm1116, %v1188, %v1190
      %v1192 = vrot.slane %v295, 2
      %v1193 = vsel %vm1116, %v1190, %v1192
      %v1194 = vrot.slane %v296, 2
      %v1195 = vrot.slane %v297, 2
      %v1196 = vsel %vm1116, %v1194, %v1195
      %v1197 = vrot.slane %v298, 2
      %v1198 = vsel %vm1116, %v1195, %v1197
      %v1199 = vrot.slane %v299, 2
      %v1200 = vsel %vm1116, %v1197, %v1199
      %v1201 = vrot.slane %v300, 2
      %v1202 = vrot.slane %v301, 2
      %v1203 = vsel %vm1116, %v1201, %v1202
      %v1204 = vrot.slane %v302, 2
      %v1205 = vsel %vm1116, %v1202, %v1204
      %v1206 = vrot.slane %v303, 2
      %v1207 = vsel %vm1116, %v1204, %v1206
      %v1208 = vrot.slane %v304, 2
      %v1209 = vrot.slane %v305, 2
      %v1210 = vsel %vm1116, %v1208, %v1209
      %v1211 = vrot.slane %v306, 2
      %v1212 = vsel %vm1116, %v1209, %v1211
      %v1213 = vrot.slane %v307, 2
      %v1214 = vsel %vm1116, %v1211, %v1213
      %v1215 = vrot.slane %v308, 2
      %v1216 = vrot.slane %v309, 2
      %v1217 = vsel %vm1116, %v1215, %v1216
      %v1218 = vrot.slane %v310, 2
      %v1219 = vsel %vm1116, %v1216, %v1218
      %v1220 = vrot.slane %v311, 2
      %v1221 = vsel %vm1116, %v1218, %v1220
      %v1222 = vrot.slane %v312, 2
      %v1223 = vrot.slane %v313, 2
      %v1224 = vsel %vm1116, %v1222, %v1223
      %v1225 = vrot.slane %v314, 2
      %v1226 = vsel %vm1116, %v1223, %v1225
      %v1227 = vrot.slane %v315, 2
      %v1228 = vsel %vm1116, %v1225, %v1227
      %v1229 = vrot.slane %v316, 2
      %v1230 = vrot.slane %v317, 2
      %v1231 = vsel %vm1116, %v1229, %v1230
      %v1232 = vrot.slane %v318, 2
      %v1233 = vsel %vm1116, %v1230, %v1232
      %v1234 = vrot.slane %v319, 2
      %v1235 = vsel %vm1116, %v1232, %v1234
      %v1236 = vrot.slane %v320, 2
      %v1237 = vrot.slane %v321, 2
      %v1238 = vsel %vm1116, %v1236, %v1237
      %v1239 = vrot.slane %v322, 2
      %v1240 = vsel %vm1116, %v1237, %v1239
      %v1241 = vrot.slane %v323, 2
      %v1242 = vsel %vm1116, %v1239, %v1241
      %s1243 = scalar_lea.vmem %s2, 8
      %v1244 = vld [vmem:[%s1243] sm:$0xf]
      %v1245 = vsel %vm534, %v1119, 0
      %v1247 = vsel %vm534, %v1121, 0
      %v1249 = vsel %vm534, %v1123, 0
      %v1251 = vsel %vm534, %v1126, 0
      %v1253 = vsel %vm534, %v1128, 0
      %v1255 = vsel %vm534, %v1130, 0
      %v1257 = vsel %vm534, %v1133, 0
      %v1259 = vsel %vm534, %v1135, 0
      %v1261 = vsel %vm534, %v1137, 0
      %v1263 = vsel %vm534, %v1140, 0
      %v1265 = vsel %vm534, %v1142, 0
      %v1267 = vsel %vm534, %v1144, 0
      %v1269 = vsel %vm534, %v1147, 0
      %v1271 = vsel %vm534, %v1149, 0
      %v1273 = vsel %vm534, %v1151, 0
      %v1275 = vsel %vm534, %v1154, 0
      %v1277 = vsel %vm534, %v1156, 0
      %v1279 = vsel %vm534, %v1158, 0
      %v1281 = vsel %vm534, %v1161, 0
      %v1283 = vsel %vm534, %v1163, 0
      %v1285 = vsel %vm534, %v1165, 0
      %v1287 = vsel %vm534, %v1168, 0
      %v1289 = vsel %vm534, %v1170, 0
      %v1291 = vsel %vm534, %v1172, 0
      %v1293 = vsel %vm534, %v1175, 0
      %v1295 = vsel %vm534, %v1177, 0
      %v1297 = vsel %vm534, %v1179, 0
      %v1299 = vsel %vm534, %v1182, 0
      %v1301 = vsel %vm534, %v1184, 0
      %v1303 = vsel %vm534, %v1186, 0
      %v1305 = vsel %vm534, %v1189, 0
      %v1307 = vsel %vm534, %v1191, 0
      %v1309 = vsel %vm534, %v1193, 0
      %v1311 = vsel %vm534, %v1196, 0
      %v1313 = vsel %vm534, %v1198, 0
      %v1315 = vsel %vm534, %v1200, 0
      %v1317 = vsel %vm534, %v1203, 0
      %v1319 = vsel %vm534, %v1205, 0
      %v1321 = vsel %vm534, %v1207, 0
      %v1323 = vsel %vm534, %v1210, 0
      %v1325 = vsel %vm534, %v1212, 0
      %v1327 = vsel %vm534, %v1214, 0
      %v1329 = vsel %vm534, %v1217, 0
      %v1331 = vsel %vm534, %v1219, 0
      %v1333 = vsel %vm534, %v1221, 0
      %v1335 = vsel %vm534, %v1224, 0
      %v1337 = vsel %vm534, %v1226, 0
      %v1339 = vsel %vm534, %v1228, 0
      %v1341 = vsel %vm534, %v1231, 0
      %v1343 = vsel %vm534, %v1233, 0
      %v1345 = vsel %vm534, %v1235, 0
      %v1347 = vsel %vm534, %v1238, 0
      %v1349 = vsel %vm534, %v1240, 0
      %v1351 = vsel %vm534, %v1242, 0
      %v1354 = vsel %vm643, %v1244, 0
      %1356 = vmatpush.msra.mxu0 0.0
      %1357 = vmatpush.msra.mxu0 0.0
      %1358 = vmatpush.msra.mxu0 0.0
      %1359 = vmatpush.msra.mxu0 0.0
      %1360 = vmatpush.msra.mxu0 0.0
      %1361 = vmatpush.msra.mxu0 0.0
      %1362 = vmatpush.msra.mxu0 0.0
      %1363 = vmatpush.msra.mxu0 0.0
      %1364 = vmatpush.msra.mxu0 0.0
      %1365 = vmatpush.msra.mxu0 0.0
      %1366 = vmatpush.msra.mxu0 0.0
      %1367 = vmatpush.msra.mxu0 0.0
      %1368 = vmatpush.msra.mxu0 0.0
      %1369 = vmatpush.msra.mxu0 0.0
      %1370 = vmatpush.msra.mxu0 0.0
      %1371 = vmatpush.msra.mxu0 %v1354
      %1372 = vmatmul.f32.gmra.mxu0 %v1245
      %v1373 = vpop.f32.mrf.mxu0
      %v1374 = vadd.f32 0.0, %v1373
      %1375 = vmatmul.f32.gmra.mxu0 %v1247
      %v1376 = vpop.f32.mrf.mxu0
      %v1377 = vadd.f32 0.0, %v1376
      %1378 = vmatmul.f32.gmra.mxu0 %v1249
      %v1379 = vpop.f32.mrf.mxu0
      %v1380 = vadd.f32 0.0, %v1379
      %1381 = vmatmul.f32.gmra.mxu0 %v1251
      %v1382 = vpop.f32.mrf.mxu0
      %v1383 = vadd.f32 0.0, %v1382
      %1384 = vmatmul.f32.gmra.mxu0 %v1253
      %v1385 = vpop.f32.mrf.mxu0
      %v1386 = vadd.f32 0.0, %v1385
      %1387 = vmatmul.f32.gmra.mxu0 %v1255
      %v1388 = vpop.f32.mrf.mxu0
      %v1389 = vadd.f32 0.0, %v1388
      %1390 = vmatmul.f32.gmra.mxu0 %v1257
      %v1391 = vpop.f32.mrf.mxu0
      %v1392 = vadd.f32 0.0, %v1391
      %1393 = vmatmul.f32.gmra.mxu0 %v1259
      %v1394 = vpop.f32.mrf.mxu0
      %v1395 = vadd.f32 0.0, %v1394
      %1396 = vmatmul.f32.gmra.mxu0 %v1261
      %v1397 = vpop.f32.mrf.mxu0
      %v1398 = vadd.f32 0.0, %v1397
      %1399 = vmatmul.f32.gmra.mxu0 %v1263
      %v1400 = vpop.f32.mrf.mxu0
      %v1401 = vadd.f32 0.0, %v1400
      %1402 = vmatmul.f32.gmra.mxu0 %v1265
      %v1403 = vpop.f32.mrf.mxu0
      %v1404 = vadd.f32 0.0, %v1403
      %1405 = vmatmul.f32.gmra.mxu0 %v1267
      %v1406 = vpop.f32.mrf.mxu0
      %v1407 = vadd.f32 0.0, %v1406
      %1408 = vmatmul.f32.gmra.mxu0 %v1269
      %v1409 = vpop.f32.mrf.mxu0
      %v1410 = vadd.f32 0.0, %v1409
      %1411 = vmatmul.f32.gmra.mxu0 %v1271
      %v1412 = vpop.f32.mrf.mxu0
      %v1413 = vadd.f32 0.0, %v1412
      %1414 = vmatmul.f32.gmra.mxu0 %v1273
      %v1415 = vpop.f32.mrf.mxu0
      %v1416 = vadd.f32 0.0, %v1415
      %1417 = vmatmul.f32.gmra.mxu0 %v1275
      %v1418 = vpop.f32.mrf.mxu0
      %v1419 = vadd.f32 0.0, %v1418
      %1420 = vmatmul.f32.gmra.mxu0 %v1277
      %v1421 = vpop.f32.mrf.mxu0
      %v1422 = vadd.f32 0.0, %v1421
      %1423 = vmatmul.f32.gmra.mxu0 %v1279
      %v1424 = vpop.f32.mrf.mxu0
      %v1425 = vadd.f32 0.0, %v1424
      %1426 = vmatmul.f32.gmra.mxu0 %v1281
      %v1427 = vpop.f32.mrf.mxu0
      %v1428 = vadd.f32 0.0, %v1427
      %1429 = vmatmul.f32.gmra.mxu0 %v1283
      %v1430 = vpop.f32.mrf.mxu0
      %v1431 = vadd.f32 0.0, %v1430
      %1432 = vmatmul.f32.gmra.mxu0 %v1285
      %v1433 = vpop.f32.mrf.mxu0
      %v1434 = vadd.f32 0.0, %v1433
      %1435 = vmatmul.f32.gmra.mxu0 %v1287
      %v1436 = vpop.f32.mrf.mxu0
      %v1437 = vadd.f32 0.0, %v1436
      %1438 = vmatmul.f32.gmra.mxu0 %v1289
      %v1439 = vpop.f32.mrf.mxu0
      %v1440 = vadd.f32 0.0, %v1439
      %1441 = vmatmul.f32.gmra.mxu0 %v1291
      %v1442 = vpop.f32.mrf.mxu0
      %v1443 = vadd.f32 0.0, %v1442
      %1444 = vmatmul.f32.gmra.mxu0 %v1293
      %v1445 = vpop.f32.mrf.mxu0
      %v1446 = vadd.f32 0.0, %v1445
      %1447 = vmatmul.f32.gmra.mxu0 %v1295
      %v1448 = vpop.f32.mrf.mxu0
      %v1449 = vadd.f32 0.0, %v1448
      %1450 = vmatmul.f32.gmra.mxu0 %v1297
      %v1451 = vpop.f32.mrf.mxu0
      %v1452 = vadd.f32 0.0, %v1451
      %1453 = vmatmul.f32.gmra.mxu0 %v1299
      %v1454 = vpop.f32.mrf.mxu0
      %v1455 = vadd.f32 0.0, %v1454
      %1456 = vmatmul.f32.gmra.mxu0 %v1301
      %v1457 = vpop.f32.mrf.mxu0
      %v1458 = vadd.f32 0.0, %v1457
      %1459 = vmatmul.f32.gmra.mxu0 %v1303
      %v1460 = vpop.f32.mrf.mxu0
      %v1461 = vadd.f32 0.0, %v1460
      %1462 = vmatmul.f32.gmra.mxu0 %v1305
      %v1463 = vpop.f32.mrf.mxu0
      %v1464 = vadd.f32 0.0, %v1463
      %1465 = vmatmul.f32.gmra.mxu0 %v1307
      %v1466 = vpop.f32.mrf.mxu0
      %v1467 = vadd.f32 0.0, %v1466
      %1468 = vmatmul.f32.gmra.mxu0 %v1309
      %v1469 = vpop.f32.mrf.mxu0
      %v1470 = vadd.f32 0.0, %v1469
      %1471 = vmatmul.f32.gmra.mxu0 %v1311
      %v1472 = vpop.f32.mrf.mxu0
      %v1473 = vadd.f32 0.0, %v1472
      %1474 = vmatmul.f32.gmra.mxu0 %v1313
      %v1475 = vpop.f32.mrf.mxu0
      %v1476 = vadd.f32 0.0, %v1475
      %1477 = vmatmul.f32.gmra.mxu0 %v1315
      %v1478 = vpop.f32.mrf.mxu0
      %v1479 = vadd.f32 0.0, %v1478
      %1480 = vmatmul.f32.gmra.mxu0 %v1317
      %v1481 = vpop.f32.mrf.mxu0
      %v1482 = vadd.f32 0.0, %v1481
      %1483 = vmatmul.f32.gmra.mxu0 %v1319
      %v1484 = vpop.f32.mrf.mxu0
      %v1485 = vadd.f32 0.0, %v1484
      %1486 = vmatmul.f32.gmra.mxu0 %v1321
      %v1487 = vpop.f32.mrf.mxu0
      %v1488 = vadd.f32 0.0, %v1487
      %1489 = vmatmul.f32.gmra.mxu0 %v1323
      %v1490 = vpop.f32.mrf.mxu0
      %v1491 = vadd.f32 0.0, %v1490
      %1492 = vmatmul.f32.gmra.mxu0 %v1325
      %v1493 = vpop.f32.mrf.mxu0
      %v1494 = vadd.f32 0.0, %v1493
      %1495 = vmatmul.f32.gmra.mxu0 %v1327
      %v1496 = vpop.f32.mrf.mxu0
      %v1497 = vadd.f32 0.0, %v1496
      %1498 = vmatmul.f32.gmra.mxu0 %v1329
      %v1499 = vpop.f32.mrf.mxu0
      %v1500 = vadd.f32 0.0, %v1499
      %1501 = vmatmul.f32.gmra.mxu0 %v1331
      %v1502 = vpop.f32.mrf.mxu0
      %v1503 = vadd.f32 0.0, %v1502
      %1504 = vmatmul.f32.gmra.mxu0 %v1333
      %v1505 = vpop.f32.mrf.mxu0
      %v1506 = vadd.f32 0.0, %v1505
      %1507 = vmatmul.f32.gmra.mxu0 %v1335
      %v1508 = vpop.f32.mrf.mxu0
      %v1509 = vadd.f32 0.0, %v1508
      %1510 = vmatmul.f32.gmra.mxu0 %v1337
      %v1511 = vpop.f32.mrf.mxu0
      %v1512 = vadd.f32 0.0, %v1511
      %1513 = vmatmul.f32.gmra.mxu0 %v1339
      %v1514 = vpop.f32.mrf.mxu0
      %v1515 = vadd.f32 0.0, %v1514
      %1516 = vmatmul.f32.gmra.mxu0 %v1341
      %v1517 = vpop.f32.mrf.mxu0
      %v1518 = vadd.f32 0.0, %v1517
      %1519 = vmatmul.f32.gmra.mxu0 %v1343
      %v1520 = vpop.f32.mrf.mxu0
      %v1521 = vadd.f32 0.0, %v1520
      %1522 = vmatmul.f32.gmra.mxu0 %v1345
      %v1523 = vpop.f32.mrf.mxu0
      %v1524 = vadd.f32 0.0, %v1523
      %1525 = vmatmul.f32.gmra.mxu0 %v1347
      %v1526 = vpop.f32.mrf.mxu0
      %v1527 = vadd.f32 0.0, %v1526
      %1528 = vmatmul.f32.gmra.mxu0 %v1349
      %v1529 = vpop.f32.mrf.mxu0
      %v1530 = vadd.f32 0.0, %v1529
      %1531 = vmatmul.f32.gmra.mxu0 %v1351
      %v1532 = vpop.f32.mrf.mxu0
      %v1533 = vadd.f32 0.0, %v1532
      %1534 = vdwg.mxu0
      %v1535 = vadd.f32 %v955, %v1374
      %v1536 = vadd.f32 %v958, %v1377
      %v1537 = vadd.f32 %v961, %v1380
      %v1538 = vadd.f32 %v964, %v1383
      %v1539 = vadd.f32 %v967, %v1386
      %v1540 = vadd.f32 %v970, %v1389
      %v1541 = vadd.f32 %v973, %v1392
      %v1542 = vadd.f32 %v976, %v1395
      %v1543 = vadd.f32 %v979, %v1398
      %v1544 = vadd.f32 %v982, %v1401
      %v1545 = vadd.f32 %v985, %v1404
      %v1546 = vadd.f32 %v988, %v1407
      %v1547 = vadd.f32 %v991, %v1410
      %v1548 = vadd.f32 %v994, %v1413
      %v1549 = vadd.f32 %v997, %v1416
      %v1550 = vadd.f32 %v1000, %v1419
      %v1551 = vadd.f32 %v1003, %v1422
      %v1552 = vadd.f32 %v1006, %v1425
      %v1553 = vadd.f32 %v1009, %v1428
      %v1554 = vadd.f32 %v1012, %v1431
      %v1555 = vadd.f32 %v1015, %v1434
      %v1556 = vadd.f32 %v1018, %v1437
      %v1557 = vadd.f32 %v1021, %v1440
      %v1558 = vadd.f32 %v1024, %v1443
      %v1559 = vadd.f32 %v1027, %v1446
      %v1560 = vadd.f32 %v1030, %v1449
      %v1561 = vadd.f32 %v1033, %v1452
      %v1562 = vadd.f32 %v1036, %v1455
      %v1563 = vadd.f32 %v1039, %v1458
      %v1564 = vadd.f32 %v1042, %v1461
      %v1565 = vadd.f32 %v1045, %v1464
      %v1566 = vadd.f32 %v1048, %v1467
      %v1567 = vadd.f32 %v1051, %v1470
      %v1568 = vadd.f32 %v1054, %v1473
      %v1569 = vadd.f32 %v1057, %v1476
      %v1570 = vadd.f32 %v1060, %v1479
      %v1571 = vadd.f32 %v1063, %v1482
      %v1572 = vadd.f32 %v1066, %v1485
      %v1573 = vadd.f32 %v1069, %v1488
      %v1574 = vadd.f32 %v1072, %v1491
      %v1575 = vadd.f32 %v1075, %v1494
      %v1576 = vadd.f32 %v1078, %v1497
      %v1577 = vadd.f32 %v1081, %v1500
      %v1578 = vadd.f32 %v1084, %v1503
      %v1579 = vadd.f32 %v1087, %v1506
      %v1580 = vadd.f32 %v1090, %v1509
      %v1581 = vadd.f32 %v1093, %v1512
      %v1582 = vadd.f32 %v1096, %v1515
      %v1583 = vadd.f32 %v1099, %v1518
      %v1584 = vadd.f32 %v1102, %v1521
      %v1585 = vadd.f32 %v1105, %v1524
      %v1586 = vadd.f32 %v1108, %v1527
      %v1587 = vadd.f32 %v1111, %v1530
      %v1588 = vadd.f32 %v1114, %v1533
      %s1589 = scalar_lea.vmem %s2, 12
      %v1590 = vld [vmem:[%s1589] sm:$0xf]
      %v1592 = vsel %vm534, %v324, 0
      %v1595 = vsel %vm534, %v325, 0
      %v1598 = vsel %vm534, %v326, 0
      %v1601 = vsel %vm643, %v1590, 0
      %1603 = vmatpush.msra.mxu0 0.0
      %1604 = vmatpush.msra.mxu0 0.0
      %1605 = vmatpush.msra.mxu0 0.0
      %1606 = vmatpush.msra.mxu0 0.0
      %1607 = vmatpush.msra.mxu0 0.0
      %1608 = vmatpush.msra.mxu0 0.0
      %1609 = vmatpush.msra.mxu0 0.0
      %1610 = vmatpush.msra.mxu0 0.0
      %1611 = vmatpush.msra.mxu0 0.0
      %1612 = vmatpush.msra.mxu0 0.0
      %1613 = vmatpush.msra.mxu0 0.0
      %1614 = vmatpush.msra.mxu0 0.0
      %1615 = vmatpush.msra.mxu0 0.0
      %1616 = vmatpush.msra.mxu0 0.0
      %1617 = vmatpush.msra.mxu0 0.0
      %1618 = vmatpush.msra.mxu0 %v1601
      %1619 = vmatmul.f32.gmra.mxu0 %v832
      %v1620 = vpop.f32.mrf.mxu0
      %v1621 = vadd.f32 0.0, %v1620
      %1622 = vmatmul.f32.gmra.mxu0 %v834
      %v1623 = vpop.f32.mrf.mxu0
      %v1624 = vadd.f32 0.0, %v1623
      %1625 = vmatmul.f32.gmra.mxu0 %v836
      %v1626 = vpop.f32.mrf.mxu0
      %v1627 = vadd.f32 0.0, %v1626
      %1628 = vmatmul.f32.gmra.mxu0 %v838
      %v1629 = vpop.f32.mrf.mxu0
      %v1630 = vadd.f32 0.0, %v1629
      %1631 = vmatmul.f32.gmra.mxu0 %v840
      %v1632 = vpop.f32.mrf.mxu0
      %v1633 = vadd.f32 0.0, %v1632
      %1634 = vmatmul.f32.gmra.mxu0 %v842
      %v1635 = vpop.f32.mrf.mxu0
      %v1636 = vadd.f32 0.0, %v1635
      %1637 = vmatmul.f32.gmra.mxu0 %v844
      %v1638 = vpop.f32.mrf.mxu0
      %v1639 = vadd.f32 0.0, %v1638
      %1640 = vmatmul.f32.gmra.mxu0 %v846
      %v1641 = vpop.f32.mrf.mxu0
      %v1642 = vadd.f32 0.0, %v1641
      %1643 = vmatmul.f32.gmra.mxu0 %v848
      %v1644 = vpop.f32.mrf.mxu0
      %v1645 = vadd.f32 0.0, %v1644
      %1646 = vmatmul.f32.gmra.mxu0 %v850
      %v1647 = vpop.f32.mrf.mxu0
      %v1648 = vadd.f32 0.0, %v1647
      %1649 = vmatmul.f32.gmra.mxu0 %v852
      %v1650 = vpop.f32.mrf.mxu0
      %v1651 = vadd.f32 0.0, %v1650
      %1652 = vmatmul.f32.gmra.mxu0 %v854
      %v1653 = vpop.f32.mrf.mxu0
      %v1654 = vadd.f32 0.0, %v1653
      %1655 = vmatmul.f32.gmra.mxu0 %v856
      %v1656 = vpop.f32.mrf.mxu0
      %v1657 = vadd.f32 0.0, %v1656
      %1658 = vmatmul.f32.gmra.mxu0 %v858
      %v1659 = vpop.f32.mrf.mxu0
      %v1660 = vadd.f32 0.0, %v1659
      %1661 = vmatmul.f32.gmra.mxu0 %v860
      %v1662 = vpop.f32.mrf.mxu0
      %v1663 = vadd.f32 0.0, %v1662
      %1664 = vmatmul.f32.gmra.mxu0 %v862
      %v1665 = vpop.f32.mrf.mxu0
      %v1666 = vadd.f32 0.0, %v1665
      %1667 = vmatmul.f32.gmra.mxu0 %v864
      %v1668 = vpop.f32.mrf.mxu0
      %v1669 = vadd.f32 0.0, %v1668
      %1670 = vmatmul.f32.gmra.mxu0 %v866
      %v1671 = vpop.f32.mrf.mxu0
      %v1672 = vadd.f32 0.0, %v1671
      %1673 = vmatmul.f32.gmra.mxu0 %v868
      %v1674 = vpop.f32.mrf.mxu0
      %v1675 = vadd.f32 0.0, %v1674
      %1676 = vmatmul.f32.gmra.mxu0 %v870
      %v1677 = vpop.f32.mrf.mxu0
      %v1678 = vadd.f32 0.0, %v1677
      %1679 = vmatmul.f32.gmra.mxu0 %v872
      %v1680 = vpop.f32.mrf.mxu0
      %v1681 = vadd.f32 0.0, %v1680
      %1682 = vmatmul.f32.gmra.mxu0 %v874
      %v1683 = vpop.f32.mrf.mxu0
      %v1684 = vadd.f32 0.0, %v1683
      %1685 = vmatmul.f32.gmra.mxu0 %v876
      %v1686 = vpop.f32.mrf.mxu0
      %v1687 = vadd.f32 0.0, %v1686
      %1688 = vmatmul.f32.gmra.mxu0 %v878
      %v1689 = vpop.f32.mrf.mxu0
      %v1690 = vadd.f32 0.0, %v1689
      %1691 = vmatmul.f32.gmra.mxu0 %v880
      %v1692 = vpop.f32.mrf.mxu0
      %v1693 = vadd.f32 0.0, %v1692
      %1694 = vmatmul.f32.gmra.mxu0 %v882
      %v1695 = vpop.f32.mrf.mxu0
      %v1696 = vadd.f32 0.0, %v1695
      %1697 = vmatmul.f32.gmra.mxu0 %v884
      %v1698 = vpop.f32.mrf.mxu0
      %v1699 = vadd.f32 0.0, %v1698
      %1700 = vmatmul.f32.gmra.mxu0 %v886
      %v1701 = vpop.f32.mrf.mxu0
      %v1702 = vadd.f32 0.0, %v1701
      %1703 = vmatmul.f32.gmra.mxu0 %v888
      %v1704 = vpop.f32.mrf.mxu0
      %v1705 = vadd.f32 0.0, %v1704
      %1706 = vmatmul.f32.gmra.mxu0 %v890
      %v1707 = vpop.f32.mrf.mxu0
      %v1708 = vadd.f32 0.0, %v1707
      %1709 = vmatmul.f32.gmra.mxu0 %v892
      %v1710 = vpop.f32.mrf.mxu0
      %v1711 = vadd.f32 0.0, %v1710
      %1712 = vmatmul.f32.gmra.mxu0 %v894
      %v1713 = vpop.f32.mrf.mxu0
      %v1714 = vadd.f32 0.0, %v1713
      %1715 = vmatmul.f32.gmra.mxu0 %v896
      %v1716 = vpop.f32.mrf.mxu0
      %v1717 = vadd.f32 0.0, %v1716
      %1718 = vmatmul.f32.gmra.mxu0 %v898
      %v1719 = vpop.f32.mrf.mxu0
      %v1720 = vadd.f32 0.0, %v1719
      %1721 = vmatmul.f32.gmra.mxu0 %v900
      %v1722 = vpop.f32.mrf.mxu0
      %v1723 = vadd.f32 0.0, %v1722
      %1724 = vmatmul.f32.gmra.mxu0 %v902
      %v1725 = vpop.f32.mrf.mxu0
      %v1726 = vadd.f32 0.0, %v1725
      %1727 = vmatmul.f32.gmra.mxu0 %v904
      %v1728 = vpop.f32.mrf.mxu0
      %v1729 = vadd.f32 0.0, %v1728
      %1730 = vmatmul.f32.gmra.mxu0 %v906
      %v1731 = vpop.f32.mrf.mxu0
      %v1732 = vadd.f32 0.0, %v1731
      %1733 = vmatmul.f32.gmra.mxu0 %v908
      %v1734 = vpop.f32.mrf.mxu0
      %v1735 = vadd.f32 0.0, %v1734
      %1736 = vmatmul.f32.gmra.mxu0 %v910
      %v1737 = vpop.f32.mrf.mxu0
      %v1738 = vadd.f32 0.0, %v1737
      %1739 = vmatmul.f32.gmra.mxu0 %v912
      %v1740 = vpop.f32.mrf.mxu0
      %v1741 = vadd.f32 0.0, %v1740
      %1742 = vmatmul.f32.gmra.mxu0 %v914
      %v1743 = vpop.f32.mrf.mxu0
      %v1744 = vadd.f32 0.0, %v1743
      %1745 = vmatmul.f32.gmra.mxu0 %v916
      %v1746 = vpop.f32.mrf.mxu0
      %v1747 = vadd.f32 0.0, %v1746
      %1748 = vmatmul.f32.gmra.mxu0 %v918
      %v1749 = vpop.f32.mrf.mxu0
      %v1750 = vadd.f32 0.0, %v1749
      %1751 = vmatmul.f32.gmra.mxu0 %v920
      %v1752 = vpop.f32.mrf.mxu0
      %v1753 = vadd.f32 0.0, %v1752
      %1754 = vmatmul.f32.gmra.mxu0 %v922
      %v1755 = vpop.f32.mrf.mxu0
      %v1756 = vadd.f32 0.0, %v1755
      %1757 = vmatmul.f32.gmra.mxu0 %v924
      %v1758 = vpop.f32.mrf.mxu0
      %v1759 = vadd.f32 0.0, %v1758
      %1760 = vmatmul.f32.gmra.mxu0 %v926
      %v1761 = vpop.f32.mrf.mxu0
      %v1762 = vadd.f32 0.0, %v1761
      %1763 = vmatmul.f32.gmra.mxu0 %v928
      %v1764 = vpop.f32.mrf.mxu0
      %v1765 = vadd.f32 0.0, %v1764
      %1766 = vmatmul.f32.gmra.mxu0 %v930
      %v1767 = vpop.f32.mrf.mxu0
      %v1768 = vadd.f32 0.0, %v1767
      %1769 = vmatmul.f32.gmra.mxu0 %v932
      %v1770 = vpop.f32.mrf.mxu0
      %v1771 = vadd.f32 0.0, %v1770
      %1772 = vmatmul.f32.gmra.mxu0 %v1592
      %v1773 = vpop.f32.mrf.mxu0
      %v1774 = vadd.f32 0.0, %v1773
      %1775 = vmatmul.f32.gmra.mxu0 %v1595
      %v1776 = vpop.f32.mrf.mxu0
      %v1777 = vadd.f32 0.0, %v1776
      %1778 = vmatmul.f32.gmra.mxu0 %v1598
      %v1779 = vpop.f32.mrf.mxu0
      %v1780 = vadd.f32 0.0, %v1779
      %1781 = vdwg.mxu0
      %v1782 = vadd.f32 %v1535, %v1621
      %v1783 = vadd.f32 %v1536, %v1624
      %v1784 = vadd.f32 %v1537, %v1627
      %v1785 = vadd.f32 %v1538, %v1630
      %v1786 = vadd.f32 %v1539, %v1633
      %v1787 = vadd.f32 %v1540, %v1636
      %v1788 = vadd.f32 %v1541, %v1639
      %v1789 = vadd.f32 %v1542, %v1642
      %v1790 = vadd.f32 %v1543, %v1645
      %v1791 = vadd.f32 %v1544, %v1648
      %v1792 = vadd.f32 %v1545, %v1651
      %v1793 = vadd.f32 %v1546, %v1654
      %v1794 = vadd.f32 %v1547, %v1657
      %v1795 = vadd.f32 %v1548, %v1660
      %v1796 = vadd.f32 %v1549, %v1663
      %v1797 = vadd.f32 %v1550, %v1666
      %v1798 = vadd.f32 %v1551, %v1669
      %v1799 = vadd.f32 %v1552, %v1672
      %v1800 = vadd.f32 %v1553, %v1675
      %v1801 = vadd.f32 %v1554, %v1678
      %v1802 = vadd.f32 %v1555, %v1681
      %v1803 = vadd.f32 %v1556, %v1684
      %v1804 = vadd.f32 %v1557, %v1687
      %v1805 = vadd.f32 %v1558, %v1690
      %v1806 = vadd.f32 %v1559, %v1693
      %v1807 = vadd.f32 %v1560, %v1696
      %v1808 = vadd.f32 %v1561, %v1699
      %v1809 = vadd.f32 %v1562, %v1702
      %v1810 = vadd.f32 %v1563, %v1705
      %v1811 = vadd.f32 %v1564, %v1708
      %v1812 = vadd.f32 %v1565, %v1711
      %v1813 = vadd.f32 %v1566, %v1714
      %v1814 = vadd.f32 %v1567, %v1717
      %v1815 = vadd.f32 %v1568, %v1720
      %v1816 = vadd.f32 %v1569, %v1723
      %v1817 = vadd.f32 %v1570, %v1726
      %v1818 = vadd.f32 %v1571, %v1729
      %v1819 = vadd.f32 %v1572, %v1732
      %v1820 = vadd.f32 %v1573, %v1735
      %v1821 = vadd.f32 %v1574, %v1738
      %v1822 = vadd.f32 %v1575, %v1741
      %v1823 = vadd.f32 %v1576, %v1744
      %v1824 = vadd.f32 %v1577, %v1747
      %v1825 = vadd.f32 %v1578, %v1750
      %v1826 = vadd.f32 %v1579, %v1753
      %v1827 = vadd.f32 %v1580, %v1756
      %v1828 = vadd.f32 %v1581, %v1759
      %v1829 = vadd.f32 %v1582, %v1762
      %v1830 = vadd.f32 %v1583, %v1765
      %v1831 = vadd.f32 %v1584, %v1768
      %v1832 = vadd.f32 %v1585, %v1771
      %v1833 = vadd.f32 %v1586, %v1774
      %v1834 = vadd.f32 %v1587, %v1777
      %v1835 = vadd.f32 %v1588, %v1780
      %v1837 = vrot.slane %v324, 1
      %v1838 = vrot.slane %v325, 1
      %v1839 = vsel %vm405, %v1837, %v1838
      %v1840 = vrot.slane %v326, 1
      %v1841 = vsel %vm405, %v1838, %v1840
      %v1842 = vrot.slane %v327, 1
      %v1843 = vsel %vm405, %v1840, %v1842
      %s1844 = scalar_lea.vmem %s2, 16
      %v1845 = vld [vmem:[%s1844] sm:$0xf]
      %v1846 = vsel %vm534, %v1839, 0
      %v1848 = vsel %vm534, %v1841, 0
      %v1850 = vsel %vm534, %v1843, 0
      %v1853 = vsel %vm643, %v1845, 0
      %1855 = vmatpush.msra.mxu0 0.0
      %1856 = vmatpush.msra.mxu0 0.0
      %1857 = vmatpush.msra.mxu0 0.0
      %1858 = vmatpush.msra.mxu0 0.0
      %1859 = vmatpush.msra.mxu0 0.0
      %1860 = vmatpush.msra.mxu0 0.0
      %1861 = vmatpush.msra.mxu0 0.0
      %1862 = vmatpush.msra.mxu0 0.0
      %1863 = vmatpush.msra.mxu0 0.0
      %1864 = vmatpush.msra.mxu0 0.0
      %1865 = vmatpush.msra.mxu0 0.0
      %1866 = vmatpush.msra.mxu0 0.0
      %1867 = vmatpush.msra.mxu0 0.0
      %1868 = vmatpush.msra.mxu0 0.0
      %1869 = vmatpush.msra.mxu0 0.0
      %1870 = vmatpush.msra.mxu0 %v1853
      %1871 = vmatmul.f32.gmra.mxu0 %v541
      %v1872 = vpop.f32.mrf.mxu0
      %v1873 = vadd.f32 0.0, %v1872
      %1874 = vmatmul.f32.gmra.mxu0 %v543
      %v1875 = vpop.f32.mrf.mxu0
      %v1876 = vadd.f32 0.0, %v1875
      %1877 = vmatmul.f32.gmra.mxu0 %v545
      %v1878 = vpop.f32.mrf.mxu0
      %v1879 = vadd.f32 0.0, %v1878
      %1880 = vmatmul.f32.gmra.mxu0 %v547
      %v1881 = vpop.f32.mrf.mxu0
      %v1882 = vadd.f32 0.0, %v1881
      %1883 = vmatmul.f32.gmra.mxu0 %v549
      %v1884 = vpop.f32.mrf.mxu0
      %v1885 = vadd.f32 0.0, %v1884
      %1886 = vmatmul.f32.gmra.mxu0 %v551
      %v1887 = vpop.f32.mrf.mxu0
      %v1888 = vadd.f32 0.0, %v1887
      %1889 = vmatmul.f32.gmra.mxu0 %v553
      %v1890 = vpop.f32.mrf.mxu0
      %v1891 = vadd.f32 0.0, %v1890
      %1892 = vmatmul.f32.gmra.mxu0 %v555
      %v1893 = vpop.f32.mrf.mxu0
      %v1894 = vadd.f32 0.0, %v1893
      %1895 = vmatmul.f32.gmra.mxu0 %v557
      %v1896 = vpop.f32.mrf.mxu0
      %v1897 = vadd.f32 0.0, %v1896
      %1898 = vmatmul.f32.gmra.mxu0 %v559
      %v1899 = vpop.f32.mrf.mxu0
      %v1900 = vadd.f32 0.0, %v1899
      %1901 = vmatmul.f32.gmra.mxu0 %v561
      %v1902 = vpop.f32.mrf.mxu0
      %v1903 = vadd.f32 0.0, %v1902
      %1904 = vmatmul.f32.gmra.mxu0 %v563
      %v1905 = vpop.f32.mrf.mxu0
      %v1906 = vadd.f32 0.0, %v1905
      %1907 = vmatmul.f32.gmra.mxu0 %v565
      %v1908 = vpop.f32.mrf.mxu0
      %v1909 = vadd.f32 0.0, %v1908
      %1910 = vmatmul.f32.gmra.mxu0 %v567
      %v1911 = vpop.f32.mrf.mxu0
      %v1912 = vadd.f32 0.0, %v1911
      %1913 = vmatmul.f32.gmra.mxu0 %v569
      %v1914 = vpop.f32.mrf.mxu0
      %v1915 = vadd.f32 0.0, %v1914
      %1916 = vmatmul.f32.gmra.mxu0 %v571
      %v1917 = vpop.f32.mrf.mxu0
      %v1918 = vadd.f32 0.0, %v1917
      %1919 = vmatmul.f32.gmra.mxu0 %v573
      %v1920 = vpop.f32.mrf.mxu0
      %v1921 = vadd.f32 0.0, %v1920
      %1922 = vmatmul.f32.gmra.mxu0 %v575
      %v1923 = vpop.f32.mrf.mxu0
      %v1924 = vadd.f32 0.0, %v1923
      %1925 = vmatmul.f32.gmra.mxu0 %v577
      %v1926 = vpop.f32.mrf.mxu0
      %v1927 = vadd.f32 0.0, %v1926
      %1928 = vmatmul.f32.gmra.mxu0 %v579
      %v1929 = vpop.f32.mrf.mxu0
      %v1930 = vadd.f32 0.0, %v1929
      %1931 = vmatmul.f32.gmra.mxu0 %v581
      %v1932 = vpop.f32.mrf.mxu0
      %v1933 = vadd.f32 0.0, %v1932
      %1934 = vmatmul.f32.gmra.mxu0 %v583
      %v1935 = vpop.f32.mrf.mxu0
      %v1936 = vadd.f32 0.0, %v1935
      %1937 = vmatmul.f32.gmra.mxu0 %v585
      %v1938 = vpop.f32.mrf.mxu0
      %v1939 = vadd.f32 0.0, %v1938
      %1940 = vmatmul.f32.gmra.mxu0 %v587
      %v1941 = vpop.f32.mrf.mxu0
      %v1942 = vadd.f32 0.0, %v1941
      %1943 = vmatmul.f32.gmra.mxu0 %v589
      %v1944 = vpop.f32.mrf.mxu0
      %v1945 = vadd.f32 0.0, %v1944
      %1946 = vmatmul.f32.gmra.mxu0 %v591
      %v1947 = vpop.f32.mrf.mxu0
      %v1948 = vadd.f32 0.0, %v1947
      %1949 = vmatmul.f32.gmra.mxu0 %v593
      %v1950 = vpop.f32.mrf.mxu0
      %v1951 = vadd.f32 0.0, %v1950
      %1952 = vmatmul.f32.gmra.mxu0 %v595
      %v1953 = vpop.f32.mrf.mxu0
      %v1954 = vadd.f32 0.0, %v1953
      %1955 = vmatmul.f32.gmra.mxu0 %v597
      %v1956 = vpop.f32.mrf.mxu0
      %v1957 = vadd.f32 0.0, %v1956
      %1958 = vmatmul.f32.gmra.mxu0 %v599
      %v1959 = vpop.f32.mrf.mxu0
      %v1960 = vadd.f32 0.0, %v1959
      %1961 = vmatmul.f32.gmra.mxu0 %v601
      %v1962 = vpop.f32.mrf.mxu0
      %v1963 = vadd.f32 0.0, %v1962
      %1964 = vmatmul.f32.gmra.mxu0 %v603
      %v1965 = vpop.f32.mrf.mxu0
      %v1966 = vadd.f32 0.0, %v1965
      %1967 = vmatmul.f32.gmra.mxu0 %v605
      %v1968 = vpop.f32.mrf.mxu0
      %v1969 = vadd.f32 0.0, %v1968
      %1970 = vmatmul.f32.gmra.mxu0 %v607
      %v1971 = vpop.f32.mrf.mxu0
      %v1972 = vadd.f32 0.0, %v1971
      %1973 = vmatmul.f32.gmra.mxu0 %v609
      %v1974 = vpop.f32.mrf.mxu0
      %v1975 = vadd.f32 0.0, %v1974
      %1976 = vmatmul.f32.gmra.mxu0 %v611
      %v1977 = vpop.f32.mrf.mxu0
      %v1978 = vadd.f32 0.0, %v1977
      %1979 = vmatmul.f32.gmra.mxu0 %v613
      %v1980 = vpop.f32.mrf.mxu0
      %v1981 = vadd.f32 0.0, %v1980
      %1982 = vmatmul.f32.gmra.mxu0 %v615
      %v1983 = vpop.f32.mrf.mxu0
      %v1984 = vadd.f32 0.0, %v1983
      %1985 = vmatmul.f32.gmra.mxu0 %v617
      %v1986 = vpop.f32.mrf.mxu0
      %v1987 = vadd.f32 0.0, %v1986
      %1988 = vmatmul.f32.gmra.mxu0 %v619
      %v1989 = vpop.f32.mrf.mxu0
      %v1990 = vadd.f32 0.0, %v1989
      %1991 = vmatmul.f32.gmra.mxu0 %v621
      %v1992 = vpop.f32.mrf.mxu0
      %v1993 = vadd.f32 0.0, %v1992
      %1994 = vmatmul.f32.gmra.mxu0 %v623
      %v1995 = vpop.f32.mrf.mxu0
      %v1996 = vadd.f32 0.0, %v1995
      %1997 = vmatmul.f32.gmra.mxu0 %v625
      %v1998 = vpop.f32.mrf.mxu0
      %v1999 = vadd.f32 0.0, %v1998
      %2000 = vmatmul.f32.gmra.mxu0 %v627
      %v2001 = vpop.f32.mrf.mxu0
      %v2002 = vadd.f32 0.0, %v2001
      %2003 = vmatmul.f32.gmra.mxu0 %v629
      %v2004 = vpop.f32.mrf.mxu0
      %v2005 = vadd.f32 0.0, %v2004
      %2006 = vmatmul.f32.gmra.mxu0 %v631
      %v2007 = vpop.f32.mrf.mxu0
      %v2008 = vadd.f32 0.0, %v2007
      %2009 = vmatmul.f32.gmra.mxu0 %v633
      %v2010 = vpop.f32.mrf.mxu0
      %v2011 = vadd.f32 0.0, %v2010
      %2012 = vmatmul.f32.gmra.mxu0 %v635
      %v2013 = vpop.f32.mrf.mxu0
      %v2014 = vadd.f32 0.0, %v2013
      %2015 = vmatmul.f32.gmra.mxu0 %v637
      %v2016 = vpop.f32.mrf.mxu0
      %v2017 = vadd.f32 0.0, %v2016
      %2018 = vmatmul.f32.gmra.mxu0 %v639
      %v2019 = vpop.f32.mrf.mxu0
      %v2020 = vadd.f32 0.0, %v2019
      %2021 = vmatmul.f32.gmra.mxu0 %v641
      %v2022 = vpop.f32.mrf.mxu0
      %v2023 = vadd.f32 0.0, %v2022
      %2024 = vmatmul.f32.gmra.mxu0 %v1846
      %v2025 = vpop.f32.mrf.mxu0
      %v2026 = vadd.f32 0.0, %v2025
      %2027 = vmatmul.f32.gmra.mxu0 %v1848
      %v2028 = vpop.f32.mrf.mxu0
      %v2029 = vadd.f32 0.0, %v2028
      %2030 = vmatmul.f32.gmra.mxu0 %v1850
      %v2031 = vpop.f32.mrf.mxu0
      %v2032 = vadd.f32 0.0, %v2031
      %2033 = vdwg.mxu0
      %v2034 = vadd.f32 %v1782, %v1873
      %v2035 = vadd.f32 %v1783, %v1876
      %v2036 = vadd.f32 %v1784, %v1879
      %v2037 = vadd.f32 %v1785, %v1882
      %v2038 = vadd.f32 %v1786, %v1885
      %v2039 = vadd.f32 %v1787, %v1888
      %v2040 = vadd.f32 %v1788, %v1891
      %v2041 = vadd.f32 %v1789, %v1894
      %v2042 = vadd.f32 %v1790, %v1897
      %v2043 = vadd.f32 %v1791, %v1900
      %v2044 = vadd.f32 %v1792, %v1903
      %v2045 = vadd.f32 %v1793, %v1906
      %v2046 = vadd.f32 %v1794, %v1909
      %v2047 = vadd.f32 %v1795, %v1912
      %v2048 = vadd.f32 %v1796, %v1915
      %v2049 = vadd.f32 %v1797, %v1918
      %v2050 = vadd.f32 %v1798, %v1921
      %v2051 = vadd.f32 %v1799, %v1924
      %v2052 = vadd.f32 %v1800, %v1927
      %v2053 = vadd.f32 %v1801, %v1930
      %v2054 = vadd.f32 %v1802, %v1933
      %v2055 = vadd.f32 %v1803, %v1936
      %v2056 = vadd.f32 %v1804, %v1939
      %v2057 = vadd.f32 %v1805, %v1942
      %v2058 = vadd.f32 %v1806, %v1945
      %v2059 = vadd.f32 %v1807, %v1948
      %v2060 = vadd.f32 %v1808, %v1951
      %v2061 = vadd.f32 %v1809, %v1954
      %v2062 = vadd.f32 %v1810, %v1957
      %v2063 = vadd.f32 %v1811, %v1960
      %v2064 = vadd.f32 %v1812, %v1963
      %v2065 = vadd.f32 %v1813, %v1966
      %v2066 = vadd.f32 %v1814, %v1969
      %v2067 = vadd.f32 %v1815, %v1972
      %v2068 = vadd.f32 %v1816, %v1975
      %v2069 = vadd.f32 %v1817, %v1978
      %v2070 = vadd.f32 %v1818, %v1981
      %v2071 = vadd.f32 %v1819, %v1984
      %v2072 = vadd.f32 %v1820, %v1987
      %v2073 = vadd.f32 %v1821, %v1990
      %v2074 = vadd.f32 %v1822, %v1993
      %v2075 = vadd.f32 %v1823, %v1996
      %v2076 = vadd.f32 %v1824, %v1999
      %v2077 = vadd.f32 %v1825, %v2002
      %v2078 = vadd.f32 %v1826, %v2005
      %v2079 = vadd.f32 %v1827, %v2008
      %v2080 = vadd.f32 %v1828, %v2011
      %v2081 = vadd.f32 %v1829, %v2014
      %v2082 = vadd.f32 %v1830, %v2017
      %v2083 = vadd.f32 %v1831, %v2020
      %v2084 = vadd.f32 %v1832, %v2023
      %v2085 = vadd.f32 %v1833, %v2026
      %v2086 = vadd.f32 %v1834, %v2029
      %v2087 = vadd.f32 %v1835, %v2032
      %v2088 = vrot.slane %v324, 2
      %v2089 = vrot.slane %v325, 2
      %v2090 = vsel %vm1116, %v2088, %v2089
      %v2091 = vrot.slane %v326, 2
      %v2092 = vsel %vm1116, %v2089, %v2091
      %v2093 = vrot.slane %v327, 2
      %v2094 = vsel %vm1116, %v2091, %v2093
      %s2095 = scalar_lea.vmem %s2, 20
      %v2096 = vld [vmem:[%s2095] sm:$0xf]
      %v2097 = vsel %vm534, %v2090, 0
      %v2099 = vsel %vm534, %v2092, 0
      %v2101 = vsel %vm534, %v2094, 0
      %v2104 = vsel %vm643, %v2096, 0
      %2106 = vmatpush.msra.mxu0 0.0
      %2107 = vmatpush.msra.mxu0 0.0
      %2108 = vmatpush.msra.mxu0 0.0
      %2109 = vmatpush.msra.mxu0 0.0
      %2110 = vmatpush.msra.mxu0 0.0
      %2111 = vmatpush.msra.mxu0 0.0
      %2112 = vmatpush.msra.mxu0 0.0
      %2113 = vmatpush.msra.mxu0 0.0
      %2114 = vmatpush.msra.mxu0 0.0
      %2115 = vmatpush.msra.mxu0 0.0
      %2116 = vmatpush.msra.mxu0 0.0
      %2117 = vmatpush.msra.mxu0 0.0
      %2118 = vmatpush.msra.mxu0 0.0
      %2119 = vmatpush.msra.mxu0 0.0
      %2120 = vmatpush.msra.mxu0 0.0
      %2121 = vmatpush.msra.mxu0 %v2104
      %2122 = vmatmul.f32.gmra.mxu0 %v1251
      %v2123 = vpop.f32.mrf.mxu0
      %v2124 = vadd.f32 0.0, %v2123
      %2125 = vmatmul.f32.gmra.mxu0 %v1253
      %v2126 = vpop.f32.mrf.mxu0
      %v2127 = vadd.f32 0.0, %v2126
      %2128 = vmatmul.f32.gmra.mxu0 %v1255
      %v2129 = vpop.f32.mrf.mxu0
      %v2130 = vadd.f32 0.0, %v2129
      %2131 = vmatmul.f32.gmra.mxu0 %v1257
      %v2132 = vpop.f32.mrf.mxu0
      %v2133 = vadd.f32 0.0, %v2132
      %2134 = vmatmul.f32.gmra.mxu0 %v1259
      %v2135 = vpop.f32.mrf.mxu0
      %v2136 = vadd.f32 0.0, %v2135
      %2137 = vmatmul.f32.gmra.mxu0 %v1261
      %v2138 = vpop.f32.mrf.mxu0
      %v2139 = vadd.f32 0.0, %v2138
      %2140 = vmatmul.f32.gmra.mxu0 %v1263
      %v2141 = vpop.f32.mrf.mxu0
      %v2142 = vadd.f32 0.0, %v2141
      %2143 = vmatmul.f32.gmra.mxu0 %v1265
      %v2144 = vpop.f32.mrf.mxu0
      %v2145 = vadd.f32 0.0, %v2144
      %2146 = vmatmul.f32.gmra.mxu0 %v1267
      %v2147 = vpop.f32.mrf.mxu0
      %v2148 = vadd.f32 0.0, %v2147
      %2149 = vmatmul.f32.gmra.mxu0 %v1269
      %v2150 = vpop.f32.mrf.mxu0
      %v2151 = vadd.f32 0.0, %v2150
      %2152 = vmatmul.f32.gmra.mxu0 %v1271
      %v2153 = vpop.f32.mrf.mxu0
      %v2154 = vadd.f32 0.0, %v2153
      %2155 = vmatmul.f32.gmra.mxu0 %v1273
      %v2156 = vpop.f32.mrf.mxu0
      %v2157 = vadd.f32 0.0, %v2156
      %2158 = vmatmul.f32.gmra.mxu0 %v1275
      %v2159 = vpop.f32.mrf.mxu0
      %v2160 = vadd.f32 0.0, %v2159
      %2161 = vmatmul.f32.gmra.mxu0 %v1277
      %v2162 = vpop.f32.mrf.mxu0
      %v2163 = vadd.f32 0.0, %v2162
      %2164 = vmatmul.f32.gmra.mxu0 %v1279
      %v2165 = vpop.f32.mrf.mxu0
      %v2166 = vadd.f32 0.0, %v2165
      %2167 = vmatmul.f32.gmra.mxu0 %v1281
      %v2168 = vpop.f32.mrf.mxu0
      %v2169 = vadd.f32 0.0, %v2168
      %2170 = vmatmul.f32.gmra.mxu0 %v1283
      %v2171 = vpop.f32.mrf.mxu0
      %v2172 = vadd.f32 0.0, %v2171
      %2173 = vmatmul.f32.gmra.mxu0 %v1285
      %v2174 = vpop.f32.mrf.mxu0
      %v2175 = vadd.f32 0.0, %v2174
      %2176 = vmatmul.f32.gmra.mxu0 %v1287
      %v2177 = vpop.f32.mrf.mxu0
      %v2178 = vadd.f32 0.0, %v2177
      %2179 = vmatmul.f32.gmra.mxu0 %v1289
      %v2180 = vpop.f32.mrf.mxu0
      %v2181 = vadd.f32 0.0, %v2180
      %2182 = vmatmul.f32.gmra.mxu0 %v1291
      %v2183 = vpop.f32.mrf.mxu0
      %v2184 = vadd.f32 0.0, %v2183
      %2185 = vmatmul.f32.gmra.mxu0 %v1293
      %v2186 = vpop.f32.mrf.mxu0
      %v2187 = vadd.f32 0.0, %v2186
      %2188 = vmatmul.f32.gmra.mxu0 %v1295
      %v2189 = vpop.f32.mrf.mxu0
      %v2190 = vadd.f32 0.0, %v2189
      %2191 = vmatmul.f32.gmra.mxu0 %v1297
      %v2192 = vpop.f32.mrf.mxu0
      %v2193 = vadd.f32 0.0, %v2192
      %2194 = vmatmul.f32.gmra.mxu0 %v1299
      %v2195 = vpop.f32.mrf.mxu0
      %v2196 = vadd.f32 0.0, %v2195
      %2197 = vmatmul.f32.gmra.mxu0 %v1301
      %v2198 = vpop.f32.mrf.mxu0
      %v2199 = vadd.f32 0.0, %v2198
      %2200 = vmatmul.f32.gmra.mxu0 %v1303
      %v2201 = vpop.f32.mrf.mxu0
      %v2202 = vadd.f32 0.0, %v2201
      %2203 = vmatmul.f32.gmra.mxu0 %v1305
      %v2204 = vpop.f32.mrf.mxu0
      %v2205 = vadd.f32 0.0, %v2204
      %2206 = vmatmul.f32.gmra.mxu0 %v1307
      %v2207 = vpop.f32.mrf.mxu0
      %v2208 = vadd.f32 0.0, %v2207
      %2209 = vmatmul.f32.gmra.mxu0 %v1309
      %v2210 = vpop.f32.mrf.mxu0
      %v2211 = vadd.f32 0.0, %v2210
      %2212 = vmatmul.f32.gmra.mxu0 %v1311
      %v2213 = vpop.f32.mrf.mxu0
      %v2214 = vadd.f32 0.0, %v2213
      %2215 = vmatmul.f32.gmra.mxu0 %v1313
      %v2216 = vpop.f32.mrf.mxu0
      %v2217 = vadd.f32 0.0, %v2216
      %2218 = vmatmul.f32.gmra.mxu0 %v1315
      %v2219 = vpop.f32.mrf.mxu0
      %v2220 = vadd.f32 0.0, %v2219
      %2221 = vmatmul.f32.gmra.mxu0 %v1317
      %v2222 = vpop.f32.mrf.mxu0
      %v2223 = vadd.f32 0.0, %v2222
      %2224 = vmatmul.f32.gmra.mxu0 %v1319
      %v2225 = vpop.f32.mrf.mxu0
      %v2226 = vadd.f32 0.0, %v2225
      %2227 = vmatmul.f32.gmra.mxu0 %v1321
      %v2228 = vpop.f32.mrf.mxu0
      %v2229 = vadd.f32 0.0, %v2228
      %2230 = vmatmul.f32.gmra.mxu0 %v1323
      %v2231 = vpop.f32.mrf.mxu0
      %v2232 = vadd.f32 0.0, %v2231
      %2233 = vmatmul.f32.gmra.mxu0 %v1325
      %v2234 = vpop.f32.mrf.mxu0
      %v2235 = vadd.f32 0.0, %v2234
      %2236 = vmatmul.f32.gmra.mxu0 %v1327
      %v2237 = vpop.f32.mrf.mxu0
      %v2238 = vadd.f32 0.0, %v2237
      %2239 = vmatmul.f32.gmra.mxu0 %v1329
      %v2240 = vpop.f32.mrf.mxu0
      %v2241 = vadd.f32 0.0, %v2240
      %2242 = vmatmul.f32.gmra.mxu0 %v1331
      %v2243 = vpop.f32.mrf.mxu0
      %v2244 = vadd.f32 0.0, %v2243
      %2245 = vmatmul.f32.gmra.mxu0 %v1333
      %v2246 = vpop.f32.mrf.mxu0
      %v2247 = vadd.f32 0.0, %v2246
      %2248 = vmatmul.f32.gmra.mxu0 %v1335
      %v2249 = vpop.f32.mrf.mxu0
      %v2250 = vadd.f32 0.0, %v2249
      %2251 = vmatmul.f32.gmra.mxu0 %v1337
      %v2252 = vpop.f32.mrf.mxu0
      %v2253 = vadd.f32 0.0, %v2252
      %2254 = vmatmul.f32.gmra.mxu0 %v1339
      %v2255 = vpop.f32.mrf.mxu0
      %v2256 = vadd.f32 0.0, %v2255
      %2257 = vmatmul.f32.gmra.mxu0 %v1341
      %v2258 = vpop.f32.mrf.mxu0
      %v2259 = vadd.f32 0.0, %v2258
      %2260 = vmatmul.f32.gmra.mxu0 %v1343
      %v2261 = vpop.f32.mrf.mxu0
      %v2262 = vadd.f32 0.0, %v2261
      %2263 = vmatmul.f32.gmra.mxu0 %v1345
      %v2264 = vpop.f32.mrf.mxu0
      %v2265 = vadd.f32 0.0, %v2264
      %2266 = vmatmul.f32.gmra.mxu0 %v1347
      %v2267 = vpop.f32.mrf.mxu0
      %v2268 = vadd.f32 0.0, %v2267
      %2269 = vmatmul.f32.gmra.mxu0 %v1349
      %v2270 = vpop.f32.mrf.mxu0
      %v2271 = vadd.f32 0.0, %v2270
      %2272 = vmatmul.f32.gmra.mxu0 %v1351
      %v2273 = vpop.f32.mrf.mxu0
      %v2274 = vadd.f32 0.0, %v2273
      %2275 = vmatmul.f32.gmra.mxu0 %v2097
      %v2276 = vpop.f32.mrf.mxu0
      %v2277 = vadd.f32 0.0, %v2276
      %2278 = vmatmul.f32.gmra.mxu0 %v2099
      %v2279 = vpop.f32.mrf.mxu0
      %v2280 = vadd.f32 0.0, %v2279
      %2281 = vmatmul.f32.gmra.mxu0 %v2101
      %v2282 = vpop.f32.mrf.mxu0
      %v2283 = vadd.f32 0.0, %v2282
      %2284 = vdwg.mxu0
      %v2285 = vadd.f32 %v2034, %v2124
      %v2286 = vadd.f32 %v2035, %v2127
      %v2287 = vadd.f32 %v2036, %v2130
      %v2288 = vadd.f32 %v2037, %v2133
      %v2289 = vadd.f32 %v2038, %v2136
      %v2290 = vadd.f32 %v2039, %v2139
      %v2291 = vadd.f32 %v2040, %v2142
      %v2292 = vadd.f32 %v2041, %v2145
      %v2293 = vadd.f32 %v2042, %v2148
      %v2294 = vadd.f32 %v2043, %v2151
      %v2295 = vadd.f32 %v2044, %v2154
      %v2296 = vadd.f32 %v2045, %v2157
      %v2297 = vadd.f32 %v2046, %v2160
      %v2298 = vadd.f32 %v2047, %v2163
      %v2299 = vadd.f32 %v2048, %v2166
      %v2300 = vadd.f32 %v2049, %v2169
      %v2301 = vadd.f32 %v2050, %v2172
      %v2302 = vadd.f32 %v2051, %v2175
      %v2303 = vadd.f32 %v2052, %v2178
      %v2304 = vadd.f32 %v2053, %v2181
      %v2305 = vadd.f32 %v2054, %v2184
      %v2306 = vadd.f32 %v2055, %v2187
      %v2307 = vadd.f32 %v2056, %v2190
      %v2308 = vadd.f32 %v2057, %v2193
      %v2309 = vadd.f32 %v2058, %v2196
      %v2310 = vadd.f32 %v2059, %v2199
      %v2311 = vadd.f32 %v2060, %v2202
      %v2312 = vadd.f32 %v2061, %v2205
      %v2313 = vadd.f32 %v2062, %v2208
      %v2314 = vadd.f32 %v2063, %v2211
      %v2315 = vadd.f32 %v2064, %v2214
      %v2316 = vadd.f32 %v2065, %v2217
      %v2317 = vadd.f32 %v2066, %v2220
      %v2318 = vadd.f32 %v2067, %v2223
      %v2319 = vadd.f32 %v2068, %v2226
      %v2320 = vadd.f32 %v2069, %v2229
      %v2321 = vadd.f32 %v2070, %v2232
      %v2322 = vadd.f32 %v2071, %v2235
      %v2323 = vadd.f32 %v2072, %v2238
      %v2324 = vadd.f32 %v2073, %v2241
      %v2325 = vadd.f32 %v2074, %v2244
      %v2326 = vadd.f32 %v2075, %v2247
      %v2327 = vadd.f32 %v2076, %v2250
      %v2328 = vadd.f32 %v2077, %v2253
      %v2329 = vadd.f32 %v2078, %v2256
      %v2330 = vadd.f32 %v2079, %v2259
      %v2331 = vadd.f32 %v2080, %v2262
      %v2332 = vadd.f32 %v2081, %v2265
      %v2333 = vadd.f32 %v2082, %v2268
      %v2334 = vadd.f32 %v2083, %v2271
      %v2335 = vadd.f32 %v2084, %v2274
      %v2336 = vadd.f32 %v2085, %v2277
      %v2337 = vadd.f32 %v2086, %v2280
      %v2338 = vadd.f32 %v2087, %v2283
      %s2339 = scalar_lea.vmem %s2, 24
      %v2340 = vld [vmem:[%s2339] sm:$0xf]
      %v2342 = vsel %vm534, %v328, 0
      %v2345 = vsel %vm534, %v329, 0
      %v2348 = vsel %vm534, %v330, 0
      %v2351 = vsel %vm643, %v2340, 0
      %2353 = vmatpush.msra.mxu0 0.0
      %2354 = vmatpush.msra.mxu0 0.0
      %2355 = vmatpush.msra.mxu0 0.0
      %2356 = vmatpush.msra.mxu0 0.0
      %2357 = vmatpush.msra.mxu0 0.0
      %2358 = vmatpush.msra.mxu0 0.0
      %2359 = vmatpush.msra.mxu0 0.0
      %2360 = vmatpush.msra.mxu0 0.0
      %2361 = vmatpush.msra.mxu0 0.0
      %2362 = vmatpush.msra.mxu0 0.0
      %2363 = vmatpush.msra.mxu0 0.0
      %2364 = vmatpush.msra.mxu0 0.0
      %2365 = vmatpush.msra.mxu0 0.0
      %2366 = vmatpush.msra.mxu0 0.0
      %2367 = vmatpush.msra.mxu0 0.0
      %2368 = vmatpush.msra.mxu0 %v2351
      %2369 = vmatmul.f32.gmra.mxu0 %v838
      %v2370 = vpop.f32.mrf.mxu0
      %v2371 = vadd.f32 0.0, %v2370
      %2372 = vmatmul.f32.gmra.mxu0 %v840
      %v2373 = vpop.f32.mrf.mxu0
      %v2374 = vadd.f32 0.0, %v2373
      %2375 = vmatmul.f32.gmra.mxu0 %v842
      %v2376 = vpop.f32.mrf.mxu0
      %v2377 = vadd.f32 0.0, %v2376
      %2378 = vmatmul.f32.gmra.mxu0 %v844
      %v2379 = vpop.f32.mrf.mxu0
      %v2380 = vadd.f32 0.0, %v2379
      %2381 = vmatmul.f32.gmra.mxu0 %v846
      %v2382 = vpop.f32.mrf.mxu0
      %v2383 = vadd.f32 0.0, %v2382
      %2384 = vmatmul.f32.gmra.mxu0 %v848
      %v2385 = vpop.f32.mrf.mxu0
      %v2386 = vadd.f32 0.0, %v2385
      %2387 = vmatmul.f32.gmra.mxu0 %v850
      %v2388 = vpop.f32.mrf.mxu0
      %v2389 = vadd.f32 0.0, %v2388
      %2390 = vmatmul.f32.gmra.mxu0 %v852
      %v2391 = vpop.f32.mrf.mxu0
      %v2392 = vadd.f32 0.0, %v2391
      %2393 = vmatmul.f32.gmra.mxu0 %v854
      %v2394 = vpop.f32.mrf.mxu0
      %v2395 = vadd.f32 0.0, %v2394
      %2396 = vmatmul.f32.gmra.mxu0 %v856
      %v2397 = vpop.f32.mrf.mxu0
      %v2398 = vadd.f32 0.0, %v2397
      %2399 = vmatmul.f32.gmra.mxu0 %v858
      %v2400 = vpop.f32.mrf.mxu0
      %v2401 = vadd.f32 0.0, %v2400
      %2402 = vmatmul.f32.gmra.mxu0 %v860
      %v2403 = vpop.f32.mrf.mxu0
      %v2404 = vadd.f32 0.0, %v2403
      %2405 = vmatmul.f32.gmra.mxu0 %v862
      %v2406 = vpop.f32.mrf.mxu0
      %v2407 = vadd.f32 0.0, %v2406
      %2408 = vmatmul.f32.gmra.mxu0 %v864
      %v2409 = vpop.f32.mrf.mxu0
      %v2410 = vadd.f32 0.0, %v2409
      %2411 = vmatmul.f32.gmra.mxu0 %v866
      %v2412 = vpop.f32.mrf.mxu0
      %v2413 = vadd.f32 0.0, %v2412
      %2414 = vmatmul.f32.gmra.mxu0 %v868
      %v2415 = vpop.f32.mrf.mxu0
      %v2416 = vadd.f32 0.0, %v2415
      %2417 = vmatmul.f32.gmra.mxu0 %v870
      %v2418 = vpop.f32.mrf.mxu0
      %v2419 = vadd.f32 0.0, %v2418
      %2420 = vmatmul.f32.gmra.mxu0 %v872
      %v2421 = vpop.f32.mrf.mxu0
      %v2422 = vadd.f32 0.0, %v2421
      %2423 = vmatmul.f32.gmra.mxu0 %v874
      %v2424 = vpop.f32.mrf.mxu0
      %v2425 = vadd.f32 0.0, %v2424
      %2426 = vmatmul.f32.gmra.mxu0 %v876
      %v2427 = vpop.f32.mrf.mxu0
      %v2428 = vadd.f32 0.0, %v2427
      %2429 = vmatmul.f32.gmra.mxu0 %v878
      %v2430 = vpop.f32.mrf.mxu0
      %v2431 = vadd.f32 0.0, %v2430
      %2432 = vmatmul.f32.gmra.mxu0 %v880
      %v2433 = vpop.f32.mrf.mxu0
      %v2434 = vadd.f32 0.0, %v2433
      %2435 = vmatmul.f32.gmra.mxu0 %v882
      %v2436 = vpop.f32.mrf.mxu0
      %v2437 = vadd.f32 0.0, %v2436
      %2438 = vmatmul.f32.gmra.mxu0 %v884
      %v2439 = vpop.f32.mrf.mxu0
      %v2440 = vadd.f32 0.0, %v2439
      %2441 = vmatmul.f32.gmra.mxu0 %v886
      %v2442 = vpop.f32.mrf.mxu0
      %v2443 = vadd.f32 0.0, %v2442
      %2444 = vmatmul.f32.gmra.mxu0 %v888
      %v2445 = vpop.f32.mrf.mxu0
      %v2446 = vadd.f32 0.0, %v2445
      %2447 = vmatmul.f32.gmra.mxu0 %v890
      %v2448 = vpop.f32.mrf.mxu0
      %v2449 = vadd.f32 0.0, %v2448
      %2450 = vmatmul.f32.gmra.mxu0 %v892
      %v2451 = vpop.f32.mrf.mxu0
      %v2452 = vadd.f32 0.0, %v2451
      %2453 = vmatmul.f32.gmra.mxu0 %v894
      %v2454 = vpop.f32.mrf.mxu0
      %v2455 = vadd.f32 0.0, %v2454
      %2456 = vmatmul.f32.gmra.mxu0 %v896
      %v2457 = vpop.f32.mrf.mxu0
      %v2458 = vadd.f32 0.0, %v2457
      %2459 = vmatmul.f32.gmra.mxu0 %v898
      %v2460 = vpop.f32.mrf.mxu0
      %v2461 = vadd.f32 0.0, %v2460
      %2462 = vmatmul.f32.gmra.mxu0 %v900
      %v2463 = vpop.f32.mrf.mxu0
      %v2464 = vadd.f32 0.0, %v2463
      %2465 = vmatmul.f32.gmra.mxu0 %v902
      %v2466 = vpop.f32.mrf.mxu0
      %v2467 = vadd.f32 0.0, %v2466
      %2468 = vmatmul.f32.gmra.mxu0 %v904
      %v2469 = vpop.f32.mrf.mxu0
      %v2470 = vadd.f32 0.0, %v2469
      %2471 = vmatmul.f32.gmra.mxu0 %v906
      %v2472 = vpop.f32.mrf.mxu0
      %v2473 = vadd.f32 0.0, %v2472
      %2474 = vmatmul.f32.gmra.mxu0 %v908
      %v2475 = vpop.f32.mrf.mxu0
      %v2476 = vadd.f32 0.0, %v2475
      %2477 = vmatmul.f32.gmra.mxu0 %v910
      %v2478 = vpop.f32.mrf.mxu0
      %v2479 = vadd.f32 0.0, %v2478
      %2480 = vmatmul.f32.gmra.mxu0 %v912
      %v2481 = vpop.f32.mrf.mxu0
      %v2482 = vadd.f32 0.0, %v2481
      %2483 = vmatmul.f32.gmra.mxu0 %v914
      %v2484 = vpop.f32.mrf.mxu0
      %v2485 = vadd.f32 0.0, %v2484
      %2486 = vmatmul.f32.gmra.mxu0 %v916
      %v2487 = vpop.f32.mrf.mxu0
      %v2488 = vadd.f32 0.0, %v2487
      %2489 = vmatmul.f32.gmra.mxu0 %v918
      %v2490 = vpop.f32.mrf.mxu0
      %v2491 = vadd.f32 0.0, %v2490
      %2492 = vmatmul.f32.gmra.mxu0 %v920
      %v2493 = vpop.f32.mrf.mxu0
      %v2494 = vadd.f32 0.0, %v2493
      %2495 = vmatmul.f32.gmra.mxu0 %v922
      %v2496 = vpop.f32.mrf.mxu0
      %v2497 = vadd.f32 0.0, %v2496
      %2498 = vmatmul.f32.gmra.mxu0 %v924
      %v2499 = vpop.f32.mrf.mxu0
      %v2500 = vadd.f32 0.0, %v2499
      %2501 = vmatmul.f32.gmra.mxu0 %v926
      %v2502 = vpop.f32.mrf.mxu0
      %v2503 = vadd.f32 0.0, %v2502
      %2504 = vmatmul.f32.gmra.mxu0 %v928
      %v2505 = vpop.f32.mrf.mxu0
      %v2506 = vadd.f32 0.0, %v2505
      %2507 = vmatmul.f32.gmra.mxu0 %v930
      %v2508 = vpop.f32.mrf.mxu0
      %v2509 = vadd.f32 0.0, %v2508
      %2510 = vmatmul.f32.gmra.mxu0 %v932
      %v2511 = vpop.f32.mrf.mxu0
      %v2512 = vadd.f32 0.0, %v2511
      %2513 = vmatmul.f32.gmra.mxu0 %v1592
      %v2514 = vpop.f32.mrf.mxu0
      %v2515 = vadd.f32 0.0, %v2514
      %2516 = vmatmul.f32.gmra.mxu0 %v1595
      %v2517 = vpop.f32.mrf.mxu0
      %v2518 = vadd.f32 0.0, %v2517
      %2519 = vmatmul.f32.gmra.mxu0 %v1598
      %v2520 = vpop.f32.mrf.mxu0
      %v2521 = vadd.f32 0.0, %v2520
      %2522 = vmatmul.f32.gmra.mxu0 %v2342
      %v2523 = vpop.f32.mrf.mxu0
      %v2524 = vadd.f32 0.0, %v2523
      %2525 = vmatmul.f32.gmra.mxu0 %v2345
      %v2526 = vpop.f32.mrf.mxu0
      %v2527 = vadd.f32 0.0, %v2526
      %2528 = vmatmul.f32.gmra.mxu0 %v2348
      %v2529 = vpop.f32.mrf.mxu0
      %v2530 = vadd.f32 0.0, %v2529
      %2531 = vdwg.mxu0
      %v2532 = vadd.f32 %v2285, %v2371
      %v2533 = vadd.f32 %v2286, %v2374
      %v2534 = vadd.f32 %v2287, %v2377
      %v2535 = vadd.f32 %v2288, %v2380
      %v2536 = vadd.f32 %v2289, %v2383
      %v2537 = vadd.f32 %v2290, %v2386
      %v2538 = vadd.f32 %v2291, %v2389
      %v2539 = vadd.f32 %v2292, %v2392
      %v2540 = vadd.f32 %v2293, %v2395
      %v2541 = vadd.f32 %v2294, %v2398
      %v2542 = vadd.f32 %v2295, %v2401
      %v2543 = vadd.f32 %v2296, %v2404
      %v2544 = vadd.f32 %v2297, %v2407
      %v2545 = vadd.f32 %v2298, %v2410
      %v2546 = vadd.f32 %v2299, %v2413
      %v2547 = vadd.f32 %v2300, %v2416
      %v2548 = vadd.f32 %v2301, %v2419
      %v2549 = vadd.f32 %v2302, %v2422
      %v2550 = vadd.f32 %v2303, %v2425
      %v2551 = vadd.f32 %v2304, %v2428
      %v2552 = vadd.f32 %v2305, %v2431
      %v2553 = vadd.f32 %v2306, %v2434
      %v2554 = vadd.f32 %v2307, %v2437
      %v2555 = vadd.f32 %v2308, %v2440
      %v2556 = vadd.f32 %v2309, %v2443
      %v2557 = vadd.f32 %v2310, %v2446
      %v2558 = vadd.f32 %v2311, %v2449
      %v2559 = vadd.f32 %v2312, %v2452
      %v2560 = vadd.f32 %v2313, %v2455
      %v2561 = vadd.f32 %v2314, %v2458
      %v2562 = vadd.f32 %v2315, %v2461
      %v2563 = vadd.f32 %v2316, %v2464
      %v2564 = vadd.f32 %v2317, %v2467
      %v2565 = vadd.f32 %v2318, %v2470
      %v2566 = vadd.f32 %v2319, %v2473
      %v2567 = vadd.f32 %v2320, %v2476
      %v2568 = vadd.f32 %v2321, %v2479
      %v2569 = vadd.f32 %v2322, %v2482
      %v2570 = vadd.f32 %v2323, %v2485
      %v2571 = vadd.f32 %v2324, %v2488
      %v2572 = vadd.f32 %v2325, %v2491
      %v2573 = vadd.f32 %v2326, %v2494
      %v2574 = vadd.f32 %v2327, %v2497
      %v2575 = vadd.f32 %v2328, %v2500
      %v2576 = vadd.f32 %v2329, %v2503
      %v2577 = vadd.f32 %v2330, %v2506
      %v2578 = vadd.f32 %v2331, %v2509
      %v2579 = vadd.f32 %v2332, %v2512
      %v2580 = vadd.f32 %v2333, %v2515
      %v2581 = vadd.f32 %v2334, %v2518
      %v2582 = vadd.f32 %v2335, %v2521
      %v2583 = vadd.f32 %v2336, %v2524
      %v2584 = vadd.f32 %v2337, %v2527
      %v2585 = vadd.f32 %v2338, %v2530
      %v2587 = vrot.slane %v328, 1
      %v2588 = vrot.slane %v329, 1
      %v2589 = vsel %vm405, %v2587, %v2588
      %v2590 = vrot.slane %v330, 1
      %v2591 = vsel %vm405, %v2588, %v2590
      %v2592 = vrot.slane %v331, 1
      %v2593 = vsel %vm405, %v2590, %v2592
      %s2594 = scalar_lea.vmem %s2, 28
      %v2595 = vld [vmem:[%s2594] sm:$0xf]
      %v2596 = vsel %vm534, %v2589, 0
      %v2598 = vsel %vm534, %v2591, 0
      %v2600 = vsel %vm534, %v2593, 0
      %v2603 = vsel %vm643, %v2595, 0
      %2605 = vmatpush.msra.mxu0 0.0
      %2606 = vmatpush.msra.mxu0 0.0
      %2607 = vmatpush.msra.mxu0 0.0
      %2608 = vmatpush.msra.mxu0 0.0
      %2609 = vmatpush.msra.mxu0 0.0
      %2610 = vmatpush.msra.mxu0 0.0
      %2611 = vmatpush.msra.mxu0 0.0
      %2612 = vmatpush.msra.mxu0 0.0
      %2613 = vmatpush.msra.mxu0 0.0
      %2614 = vmatpush.msra.mxu0 0.0
      %2615 = vmatpush.msra.mxu0 0.0
      %2616 = vmatpush.msra.mxu0 0.0
      %2617 = vmatpush.msra.mxu0 0.0
      %2618 = vmatpush.msra.mxu0 0.0
      %2619 = vmatpush.msra.mxu0 0.0
      %2620 = vmatpush.msra.mxu0 %v2603
      %2621 = vmatmul.f32.gmra.mxu0 %v547
      %v2622 = vpop.f32.mrf.mxu0
      %v2623 = vadd.f32 0.0, %v2622
      %2624 = vmatmul.f32.gmra.mxu0 %v549
      %v2625 = vpop.f32.mrf.mxu0
      %v2626 = vadd.f32 0.0, %v2625
      %2627 = vmatmul.f32.gmra.mxu0 %v551
      %v2628 = vpop.f32.mrf.mxu0
      %v2629 = vadd.f32 0.0, %v2628
      %2630 = vmatmul.f32.gmra.mxu0 %v553
      %v2631 = vpop.f32.mrf.mxu0
      %v2632 = vadd.f32 0.0, %v2631
      %2633 = vmatmul.f32.gmra.mxu0 %v555
      %v2634 = vpop.f32.mrf.mxu0
      %v2635 = vadd.f32 0.0, %v2634
      %2636 = vmatmul.f32.gmra.mxu0 %v557
      %v2637 = vpop.f32.mrf.mxu0
      %v2638 = vadd.f32 0.0, %v2637
      %2639 = vmatmul.f32.gmra.mxu0 %v559
      %v2640 = vpop.f32.mrf.mxu0
      %v2641 = vadd.f32 0.0, %v2640
      %2642 = vmatmul.f32.gmra.mxu0 %v561
      %v2643 = vpop.f32.mrf.mxu0
      %v2644 = vadd.f32 0.0, %v2643
      %2645 = vmatmul.f32.gmra.mxu0 %v563
      %v2646 = vpop.f32.mrf.mxu0
      %v2647 = vadd.f32 0.0, %v2646
      %2648 = vmatmul.f32.gmra.mxu0 %v565
      %v2649 = vpop.f32.mrf.mxu0
      %v2650 = vadd.f32 0.0, %v2649
      %2651 = vmatmul.f32.gmra.mxu0 %v567
      %v2652 = vpop.f32.mrf.mxu0
      %v2653 = vadd.f32 0.0, %v2652
      %2654 = vmatmul.f32.gmra.mxu0 %v569
      %v2655 = vpop.f32.mrf.mxu0
      %v2656 = vadd.f32 0.0, %v2655
      %2657 = vmatmul.f32.gmra.mxu0 %v571
      %v2658 = vpop.f32.mrf.mxu0
      %v2659 = vadd.f32 0.0, %v2658
      %2660 = vmatmul.f32.gmra.mxu0 %v573
      %v2661 = vpop.f32.mrf.mxu0
      %v2662 = vadd.f32 0.0, %v2661
      %2663 = vmatmul.f32.gmra.mxu0 %v575
      %v2664 = vpop.f32.mrf.mxu0
      %v2665 = vadd.f32 0.0, %v2664
      %2666 = vmatmul.f32.gmra.mxu0 %v577
      %v2667 = vpop.f32.mrf.mxu0
      %v2668 = vadd.f32 0.0, %v2667
      %2669 = vmatmul.f32.gmra.mxu0 %v579
      %v2670 = vpop.f32.mrf.mxu0
      %v2671 = vadd.f32 0.0, %v2670
      %2672 = vmatmul.f32.gmra.mxu0 %v581
      %v2673 = vpop.f32.mrf.mxu0
      %v2674 = vadd.f32 0.0, %v2673
      %2675 = vmatmul.f32.gmra.mxu0 %v583
      %v2676 = vpop.f32.mrf.mxu0
      %v2677 = vadd.f32 0.0, %v2676
      %2678 = vmatmul.f32.gmra.mxu0 %v585
      %v2679 = vpop.f32.mrf.mxu0
      %v2680 = vadd.f32 0.0, %v2679
      %2681 = vmatmul.f32.gmra.mxu0 %v587
      %v2682 = vpop.f32.mrf.mxu0
      %v2683 = vadd.f32 0.0, %v2682
      %2684 = vmatmul.f32.gmra.mxu0 %v589
      %v2685 = vpop.f32.mrf.mxu0
      %v2686 = vadd.f32 0.0, %v2685
      %2687 = vmatmul.f32.gmra.mxu0 %v591
      %v2688 = vpop.f32.mrf.mxu0
      %v2689 = vadd.f32 0.0, %v2688
      %2690 = vmatmul.f32.gmra.mxu0 %v593
      %v2691 = vpop.f32.mrf.mxu0
      %v2692 = vadd.f32 0.0, %v2691
      %2693 = vmatmul.f32.gmra.mxu0 %v595
      %v2694 = vpop.f32.mrf.mxu0
      %v2695 = vadd.f32 0.0, %v2694
      %2696 = vmatmul.f32.gmra.mxu0 %v597
      %v2697 = vpop.f32.mrf.mxu0
      %v2698 = vadd.f32 0.0, %v2697
      %2699 = vmatmul.f32.gmra.mxu0 %v599
      %v2700 = vpop.f32.mrf.mxu0
      %v2701 = vadd.f32 0.0, %v2700
      %2702 = vmatmul.f32.gmra.mxu0 %v601
      %v2703 = vpop.f32.mrf.mxu0
      %v2704 = vadd.f32 0.0, %v2703
      %2705 = vmatmul.f32.gmra.mxu0 %v603
      %v2706 = vpop.f32.mrf.mxu0
      %v2707 = vadd.f32 0.0, %v2706
      %2708 = vmatmul.f32.gmra.mxu0 %v605
      %v2709 = vpop.f32.mrf.mxu0
      %v2710 = vadd.f32 0.0, %v2709
      %2711 = vmatmul.f32.gmra.mxu0 %v607
      %v2712 = vpop.f32.mrf.mxu0
      %v2713 = vadd.f32 0.0, %v2712
      %2714 = vmatmul.f32.gmra.mxu0 %v609
      %v2715 = vpop.f32.mrf.mxu0
      %v2716 = vadd.f32 0.0, %v2715
      %2717 = vmatmul.f32.gmra.mxu0 %v611
      %v2718 = vpop.f32.mrf.mxu0
      %v2719 = vadd.f32 0.0, %v2718
      %2720 = vmatmul.f32.gmra.mxu0 %v613
      %v2721 = vpop.f32.mrf.mxu0
      %v2722 = vadd.f32 0.0, %v2721
      %2723 = vmatmul.f32.gmra.mxu0 %v615
      %v2724 = vpop.f32.mrf.mxu0
      %v2725 = vadd.f32 0.0, %v2724
      %2726 = vmatmul.f32.gmra.mxu0 %v617
      %v2727 = vpop.f32.mrf.mxu0
      %v2728 = vadd.f32 0.0, %v2727
      %2729 = vmatmul.f32.gmra.mxu0 %v619
      %v2730 = vpop.f32.mrf.mxu0
      %v2731 = vadd.f32 0.0, %v2730
      %2732 = vmatmul.f32.gmra.mxu0 %v621
      %v2733 = vpop.f32.mrf.mxu0
      %v2734 = vadd.f32 0.0, %v2733
      %2735 = vmatmul.f32.gmra.mxu0 %v623
      %v2736 = vpop.f32.mrf.mxu0
      %v2737 = vadd.f32 0.0, %v2736
      %2738 = vmatmul.f32.gmra.mxu0 %v625
      %v2739 = vpop.f32.mrf.mxu0
      %v2740 = vadd.f32 0.0, %v2739
      %2741 = vmatmul.f32.gmra.mxu0 %v627
      %v2742 = vpop.f32.mrf.mxu0
      %v2743 = vadd.f32 0.0, %v2742
      %2744 = vmatmul.f32.gmra.mxu0 %v629
      %v2745 = vpop.f32.mrf.mxu0
      %v2746 = vadd.f32 0.0, %v2745
      %2747 = vmatmul.f32.gmra.mxu0 %v631
      %v2748 = vpop.f32.mrf.mxu0
      %v2749 = vadd.f32 0.0, %v2748
      %2750 = vmatmul.f32.gmra.mxu0 %v633
      %v2751 = vpop.f32.mrf.mxu0
      %v2752 = vadd.f32 0.0, %v2751
      %2753 = vmatmul.f32.gmra.mxu0 %v635
      %v2754 = vpop.f32.mrf.mxu0
      %v2755 = vadd.f32 0.0, %v2754
      %2756 = vmatmul.f32.gmra.mxu0 %v637
      %v2757 = vpop.f32.mrf.mxu0
      %v2758 = vadd.f32 0.0, %v2757
      %2759 = vmatmul.f32.gmra.mxu0 %v639
      %v2760 = vpop.f32.mrf.mxu0
      %v2761 = vadd.f32 0.0, %v2760
      %2762 = vmatmul.f32.gmra.mxu0 %v641
      %v2763 = vpop.f32.mrf.mxu0
      %v2764 = vadd.f32 0.0, %v2763
      %2765 = vmatmul.f32.gmra.mxu0 %v1846
      %v2766 = vpop.f32.mrf.mxu0
      %v2767 = vadd.f32 0.0, %v2766
      %2768 = vmatmul.f32.gmra.mxu0 %v1848
      %v2769 = vpop.f32.mrf.mxu0
      %v2770 = vadd.f32 0.0, %v2769
      %2771 = vmatmul.f32.gmra.mxu0 %v1850
      %v2772 = vpop.f32.mrf.mxu0
      %v2773 = vadd.f32 0.0, %v2772
      %2774 = vmatmul.f32.gmra.mxu0 %v2596
      %v2775 = vpop.f32.mrf.mxu0
      %v2776 = vadd.f32 0.0, %v2775
      %2777 = vmatmul.f32.gmra.mxu0 %v2598
      %v2778 = vpop.f32.mrf.mxu0
      %v2779 = vadd.f32 0.0, %v2778
      %2780 = vmatmul.f32.gmra.mxu0 %v2600
      %v2781 = vpop.f32.mrf.mxu0
      %v2782 = vadd.f32 0.0, %v2781
      %2783 = vdwg.mxu0
      %v2784 = vadd.f32 %v2532, %v2623
      %v2785 = vadd.f32 %v2533, %v2626
      %v2786 = vadd.f32 %v2534, %v2629
      %v2787 = vadd.f32 %v2535, %v2632
      %v2788 = vadd.f32 %v2536, %v2635
      %v2789 = vadd.f32 %v2537, %v2638
      %v2790 = vadd.f32 %v2538, %v2641
      %v2791 = vadd.f32 %v2539, %v2644
      %v2792 = vadd.f32 %v2540, %v2647
      %v2793 = vadd.f32 %v2541, %v2650
      %v2794 = vadd.f32 %v2542, %v2653
      %v2795 = vadd.f32 %v2543, %v2656
      %v2796 = vadd.f32 %v2544, %v2659
      %v2797 = vadd.f32 %v2545, %v2662
      %v2798 = vadd.f32 %v2546, %v2665
      %v2799 = vadd.f32 %v2547, %v2668
      %v2800 = vadd.f32 %v2548, %v2671
      %v2801 = vadd.f32 %v2549, %v2674
      %v2802 = vadd.f32 %v2550, %v2677
      %v2803 = vadd.f32 %v2551, %v2680
      %v2804 = vadd.f32 %v2552, %v2683
      %v2805 = vadd.f32 %v2553, %v2686
      %v2806 = vadd.f32 %v2554, %v2689
      %v2807 = vadd.f32 %v2555, %v2692
      %v2808 = vadd.f32 %v2556, %v2695
      %v2809 = vadd.f32 %v2557, %v2698
      %v2810 = vadd.f32 %v2558, %v2701
      %v2811 = vadd.f32 %v2559, %v2704
      %v2812 = vadd.f32 %v2560, %v2707
      %v2813 = vadd.f32 %v2561, %v2710
      %v2814 = vadd.f32 %v2562, %v2713
      %v2815 = vadd.f32 %v2563, %v2716
      %v2816 = vadd.f32 %v2564, %v2719
      %v2817 = vadd.f32 %v2565, %v2722
      %v2818 = vadd.f32 %v2566, %v2725
      %v2819 = vadd.f32 %v2567, %v2728
      %v2820 = vadd.f32 %v2568, %v2731
      %v2821 = vadd.f32 %v2569, %v2734
      %v2822 = vadd.f32 %v2570, %v2737
      %v2823 = vadd.f32 %v2571, %v2740
      %v2824 = vadd.f32 %v2572, %v2743
      %v2825 = vadd.f32 %v2573, %v2746
      %v2826 = vadd.f32 %v2574, %v2749
      %v2827 = vadd.f32 %v2575, %v2752
      %v2828 = vadd.f32 %v2576, %v2755
      %v2829 = vadd.f32 %v2577, %v2758
      %v2830 = vadd.f32 %v2578, %v2761
      %v2831 = vadd.f32 %v2579, %v2764
      %v2832 = vadd.f32 %v2580, %v2767
      %v2833 = vadd.f32 %v2581, %v2770
      %v2834 = vadd.f32 %v2582, %v2773
      %v2835 = vadd.f32 %v2583, %v2776
      %v2836 = vadd.f32 %v2584, %v2779
      %v2837 = vadd.f32 %v2585, %v2782
      %v2838 = vrot.slane %v328, 2
      %v2839 = vrot.slane %v329, 2
      %v2840 = vsel %vm1116, %v2838, %v2839
      %v2841 = vrot.slane %v330, 2
      %v2842 = vsel %vm1116, %v2839, %v2841
      %v2843 = vrot.slane %v331, 2
      %v2844 = vsel %vm1116, %v2841, %v2843
      %s2845 = scalar_lea.vmem %s2, 32
      %v2846 = vld [vmem:[%s2845] sm:$0xf]
      %v2847 = vsel %vm534, %v2840, 0
      %v2849 = vsel %vm534, %v2842, 0
      %v2851 = vsel %vm534, %v2844, 0
      %v2854 = vsel %vm643, %v2846, 0
      %2856 = vmatpush.msra.mxu0 0.0
      %2857 = vmatpush.msra.mxu0 0.0
      %2858 = vmatpush.msra.mxu0 0.0
      %2859 = vmatpush.msra.mxu0 0.0
      %2860 = vmatpush.msra.mxu0 0.0
      %2861 = vmatpush.msra.mxu0 0.0
      %2862 = vmatpush.msra.mxu0 0.0
      %2863 = vmatpush.msra.mxu0 0.0
      %2864 = vmatpush.msra.mxu0 0.0
      %2865 = vmatpush.msra.mxu0 0.0
      %2866 = vmatpush.msra.mxu0 0.0
      %2867 = vmatpush.msra.mxu0 0.0
      %2868 = vmatpush.msra.mxu0 0.0
      %2869 = vmatpush.msra.mxu0 0.0
      %2870 = vmatpush.msra.mxu0 0.0
      %2871 = vmatpush.msra.mxu0 %v2854
      %2872 = vmatmul.f32.gmra.mxu0 %v1257
      %v2873 = vpop.f32.mrf.mxu0
      %v2874 = vadd.f32 0.0, %v2873
      %2875 = vmatmul.f32.gmra.mxu0 %v1259
      %v2876 = vpop.f32.mrf.mxu0
      %v2877 = vadd.f32 0.0, %v2876
      %2878 = vmatmul.f32.gmra.mxu0 %v1261
      %v2879 = vpop.f32.mrf.mxu0
      %v2880 = vadd.f32 0.0, %v2879
      %2881 = vmatmul.f32.gmra.mxu0 %v1263
      %v2882 = vpop.f32.mrf.mxu0
      %v2883 = vadd.f32 0.0, %v2882
      %2884 = vmatmul.f32.gmra.mxu0 %v1265
      %v2885 = vpop.f32.mrf.mxu0
      %v2886 = vadd.f32 0.0, %v2885
      %2887 = vmatmul.f32.gmra.mxu0 %v1267
      %v2888 = vpop.f32.mrf.mxu0
      %v2889 = vadd.f32 0.0, %v2888
      %2890 = vmatmul.f32.gmra.mxu0 %v1269
      %v2891 = vpop.f32.mrf.mxu0
      %v2892 = vadd.f32 0.0, %v2891
      %2893 = vmatmul.f32.gmra.mxu0 %v1271
      %v2894 = vpop.f32.mrf.mxu0
      %v2895 = vadd.f32 0.0, %v2894
      %2896 = vmatmul.f32.gmra.mxu0 %v1273
      %v2897 = vpop.f32.mrf.mxu0
      %v2898 = vadd.f32 0.0, %v2897
      %2899 = vmatmul.f32.gmra.mxu0 %v1275
      %v2900 = vpop.f32.mrf.mxu0
      %v2901 = vadd.f32 0.0, %v2900
      %2902 = vmatmul.f32.gmra.mxu0 %v1277
      %v2903 = vpop.f32.mrf.mxu0
      %v2904 = vadd.f32 0.0, %v2903
      %2905 = vmatmul.f32.gmra.mxu0 %v1279
      %v2906 = vpop.f32.mrf.mxu0
      %v2907 = vadd.f32 0.0, %v2906
      %2908 = vmatmul.f32.gmra.mxu0 %v1281
      %v2909 = vpop.f32.mrf.mxu0
      %v2910 = vadd.f32 0.0, %v2909
      %2911 = vmatmul.f32.gmra.mxu0 %v1283
      %v2912 = vpop.f32.mrf.mxu0
      %v2913 = vadd.f32 0.0, %v2912
      %2914 = vmatmul.f32.gmra.mxu0 %v1285
      %v2915 = vpop.f32.mrf.mxu0
      %v2916 = vadd.f32 0.0, %v2915
      %2917 = vmatmul.f32.gmra.mxu0 %v1287
      %v2918 = vpop.f32.mrf.mxu0
      %v2919 = vadd.f32 0.0, %v2918
      %2920 = vmatmul.f32.gmra.mxu0 %v1289
      %v2921 = vpop.f32.mrf.mxu0
      %v2922 = vadd.f32 0.0, %v2921
      %2923 = vmatmul.f32.gmra.mxu0 %v1291
      %v2924 = vpop.f32.mrf.mxu0
      %v2925 = vadd.f32 0.0, %v2924
      %2926 = vmatmul.f32.gmra.mxu0 %v1293
      %v2927 = vpop.f32.mrf.mxu0
      %v2928 = vadd.f32 0.0, %v2927
      %2929 = vmatmul.f32.gmra.mxu0 %v1295
      %v2930 = vpop.f32.mrf.mxu0
      %v2931 = vadd.f32 0.0, %v2930
      %2932 = vmatmul.f32.gmra.mxu0 %v1297
      %v2933 = vpop.f32.mrf.mxu0
      %v2934 = vadd.f32 0.0, %v2933
      %2935 = vmatmul.f32.gmra.mxu0 %v1299
      %v2936 = vpop.f32.mrf.mxu0
      %v2937 = vadd.f32 0.0, %v2936
      %2938 = vmatmul.f32.gmra.mxu0 %v1301
      %v2939 = vpop.f32.mrf.mxu0
      %v2940 = vadd.f32 0.0, %v2939
      %2941 = vmatmul.f32.gmra.mxu0 %v1303
      %v2942 = vpop.f32.mrf.mxu0
      %v2943 = vadd.f32 0.0, %v2942
      %2944 = vmatmul.f32.gmra.mxu0 %v1305
      %v2945 = vpop.f32.mrf.mxu0
      %v2946 = vadd.f32 0.0, %v2945
      %2947 = vmatmul.f32.gmra.mxu0 %v1307
      %v2948 = vpop.f32.mrf.mxu0
      %v2949 = vadd.f32 0.0, %v2948
      %2950 = vmatmul.f32.gmra.mxu0 %v1309
      %v2951 = vpop.f32.mrf.mxu0
      %v2952 = vadd.f32 0.0, %v2951
      %2953 = vmatmul.f32.gmra.mxu0 %v1311
      %v2954 = vpop.f32.mrf.mxu0
      %v2955 = vadd.f32 0.0, %v2954
      %2956 = vmatmul.f32.gmra.mxu0 %v1313
      %v2957 = vpop.f32.mrf.mxu0
      %v2958 = vadd.f32 0.0, %v2957
      %2959 = vmatmul.f32.gmra.mxu0 %v1315
      %v2960 = vpop.f32.mrf.mxu0
      %v2961 = vadd.f32 0.0, %v2960
      %2962 = vmatmul.f32.gmra.mxu0 %v1317
      %v2963 = vpop.f32.mrf.mxu0
      %v2964 = vadd.f32 0.0, %v2963
      %2965 = vmatmul.f32.gmra.mxu0 %v1319
      %v2966 = vpop.f32.mrf.mxu0
      %v2967 = vadd.f32 0.0, %v2966
      %2968 = vmatmul.f32.gmra.mxu0 %v1321
      %v2969 = vpop.f32.mrf.mxu0
      %v2970 = vadd.f32 0.0, %v2969
      %2971 = vmatmul.f32.gmra.mxu0 %v1323
      %v2972 = vpop.f32.mrf.mxu0
      %v2973 = vadd.f32 0.0, %v2972
      %2974 = vmatmul.f32.gmra.mxu0 %v1325
      %v2975 = vpop.f32.mrf.mxu0
      %v2976 = vadd.f32 0.0, %v2975
      %2977 = vmatmul.f32.gmra.mxu0 %v1327
      %v2978 = vpop.f32.mrf.mxu0
      %v2979 = vadd.f32 0.0, %v2978
      %2980 = vmatmul.f32.gmra.mxu0 %v1329
      %v2981 = vpop.f32.mrf.mxu0
      %v2982 = vadd.f32 0.0, %v2981
      %2983 = vmatmul.f32.gmra.mxu0 %v1331
      %v2984 = vpop.f32.mrf.mxu0
      %v2985 = vadd.f32 0.0, %v2984
      %2986 = vmatmul.f32.gmra.mxu0 %v1333
      %v2987 = vpop.f32.mrf.mxu0
      %v2988 = vadd.f32 0.0, %v2987
      %2989 = vmatmul.f32.gmra.mxu0 %v1335
      %v2990 = vpop.f32.mrf.mxu0
      %v2991 = vadd.f32 0.0, %v2990
      %2992 = vmatmul.f32.gmra.mxu0 %v1337
      %v2993 = vpop.f32.mrf.mxu0
      %v2994 = vadd.f32 0.0, %v2993
      %2995 = vmatmul.f32.gmra.mxu0 %v1339
      %v2996 = vpop.f32.mrf.mxu0
      %v2997 = vadd.f32 0.0, %v2996
      %2998 = vmatmul.f32.gmra.mxu0 %v1341
      %v2999 = vpop.f32.mrf.mxu0
      %v3000 = vadd.f32 0.0, %v2999
      %3001 = vmatmul.f32.gmra.mxu0 %v1343
      %v3002 = vpop.f32.mrf.mxu0
      %v3003 = vadd.f32 0.0, %v3002
      %3004 = vmatmul.f32.gmra.mxu0 %v1345
      %v3005 = vpop.f32.mrf.mxu0
      %v3006 = vadd.f32 0.0, %v3005
      %3007 = vmatmul.f32.gmra.mxu0 %v1347
      %v3008 = vpop.f32.mrf.mxu0
      %v3009 = vadd.f32 0.0, %v3008
      %3010 = vmatmul.f32.gmra.mxu0 %v1349
      %v3011 = vpop.f32.mrf.mxu0
      %v3012 = vadd.f32 0.0, %v3011
      %3013 = vmatmul.f32.gmra.mxu0 %v1351
      %v3014 = vpop.f32.mrf.mxu0
      %v3015 = vadd.f32 0.0, %v3014
      %3016 = vmatmul.f32.gmra.mxu0 %v2097
      %v3017 = vpop.f32.mrf.mxu0
      %v3018 = vadd.f32 0.0, %v3017
      %3019 = vmatmul.f32.gmra.mxu0 %v2099
      %v3020 = vpop.f32.mrf.mxu0
      %v3021 = vadd.f32 0.0, %v3020
      %3022 = vmatmul.f32.gmra.mxu0 %v2101
      %v3023 = vpop.f32.mrf.mxu0
      %v3024 = vadd.f32 0.0, %v3023
      %3025 = vmatmul.f32.gmra.mxu0 %v2847
      %v3026 = vpop.f32.mrf.mxu0
      %v3027 = vadd.f32 0.0, %v3026
      %3028 = vmatmul.f32.gmra.mxu0 %v2849
      %v3029 = vpop.f32.mrf.mxu0
      %v3030 = vadd.f32 0.0, %v3029
      %3031 = vmatmul.f32.gmra.mxu0 %v2851
      %v3032 = vpop.f32.mrf.mxu0
      %v3033 = vadd.f32 0.0, %v3032
      %3034 = vdwg.mxu0
      %v3035 = vadd.f32 %v2784, %v2874
      %v3036 = vadd.f32 %v2785, %v2877
      %v3037 = vadd.f32 %v2786, %v2880
      %v3038 = vadd.f32 %v2787, %v2883
      %v3039 = vadd.f32 %v2788, %v2886
      %v3040 = vadd.f32 %v2789, %v2889
      %v3041 = vadd.f32 %v2790, %v2892
      %v3042 = vadd.f32 %v2791, %v2895
      %v3043 = vadd.f32 %v2792, %v2898
      %v3044 = vadd.f32 %v2793, %v2901
      %v3045 = vadd.f32 %v2794, %v2904
      %v3046 = vadd.f32 %v2795, %v2907
      %v3047 = vadd.f32 %v2796, %v2910
      %v3048 = vadd.f32 %v2797, %v2913
      %v3049 = vadd.f32 %v2798, %v2916
      %v3050 = vadd.f32 %v2799, %v2919
      %v3051 = vadd.f32 %v2800, %v2922
      %v3052 = vadd.f32 %v2801, %v2925
      %v3053 = vadd.f32 %v2802, %v2928
      %v3054 = vadd.f32 %v2803, %v2931
      %v3055 = vadd.f32 %v2804, %v2934
      %v3056 = vadd.f32 %v2805, %v2937
      %v3057 = vadd.f32 %v2806, %v2940
      %v3058 = vadd.f32 %v2807, %v2943
      %v3059 = vadd.f32 %v2808, %v2946
      %v3060 = vadd.f32 %v2809, %v2949
      %v3061 = vadd.f32 %v2810, %v2952
      %v3062 = vadd.f32 %v2811, %v2955
      %v3063 = vadd.f32 %v2812, %v2958
      %v3064 = vadd.f32 %v2813, %v2961
      %v3065 = vadd.f32 %v2814, %v2964
      %v3066 = vadd.f32 %v2815, %v2967
      %v3067 = vadd.f32 %v2816, %v2970
      %v3068 = vadd.f32 %v2817, %v2973
      %v3069 = vadd.f32 %v2818, %v2976
      %v3070 = vadd.f32 %v2819, %v2979
      %v3071 = vadd.f32 %v2820, %v2982
      %v3072 = vadd.f32 %v2821, %v2985
      %v3073 = vadd.f32 %v2822, %v2988
      %v3074 = vadd.f32 %v2823, %v2991
      %v3075 = vadd.f32 %v2824, %v2994
      %v3076 = vadd.f32 %v2825, %v2997
      %v3077 = vadd.f32 %v2826, %v3000
      %v3078 = vadd.f32 %v2827, %v3003
      %v3079 = vadd.f32 %v2828, %v3006
      %v3080 = vadd.f32 %v2829, %v3009
      %v3081 = vadd.f32 %v2830, %v3012
      %v3082 = vadd.f32 %v2831, %v3015
      %v3083 = vadd.f32 %v2832, %v3018
      %v3084 = vadd.f32 %v2833, %v3021
      %v3085 = vadd.f32 %v2834, %v3024
      %v3086 = vadd.f32 %v2835, %v3027
      %v3087 = vadd.f32 %v2836, %v3030
      %v3088 = vadd.f32 %v2837, %v3033
      %v3089 = vld [vmem:[%s3] sm:$0x1]
      %v3091 = vperm.slane %v3089, 0
      %v3093 = vadd.f32 %v3035, %v3091
      %v3094 = vadd.f32 %v3036, %v3091
      %v3095 = vadd.f32 %v3037, %v3091
      %v3096 = vadd.f32 %v3038, %v3091
      %v3097 = vadd.f32 %v3039, %v3091
      %v3098 = vadd.f32 %v3040, %v3091
      %v3099 = vadd.f32 %v3041, %v3091
      %v3100 = vadd.f32 %v3042, %v3091
      %v3101 = vadd.f32 %v3043, %v3091
      %v3102 = vadd.f32 %v3044, %v3091
      %v3103 = vadd.f32 %v3045, %v3091
      %v3104 = vadd.f32 %v3046, %v3091
      %v3105 = vadd.f32 %v3047, %v3091
      %v3106 = vadd.f32 %v3048, %v3091
      %v3107 = vadd.f32 %v3049, %v3091
      %v3108 = vadd.f32 %v3050, %v3091
      %v3109 = vadd.f32 %v3051, %v3091
      %v3110 = vadd.f32 %v3052, %v3091
      %v3111 = vadd.f32 %v3053, %v3091
      %v3112 = vadd.f32 %v3054, %v3091
      %v3113 = vadd.f32 %v3055, %v3091
      %v3114 = vadd.f32 %v3056, %v3091
      %v3115 = vadd.f32 %v3057, %v3091
      %v3116 = vadd.f32 %v3058, %v3091
      %v3117 = vadd.f32 %v3059, %v3091
      %v3118 = vadd.f32 %v3060, %v3091
      %v3119 = vadd.f32 %v3061, %v3091
      %v3120 = vadd.f32 %v3062, %v3091
      %v3121 = vadd.f32 %v3063, %v3091
      %v3122 = vadd.f32 %v3064, %v3091
      %v3123 = vadd.f32 %v3065, %v3091
      %v3124 = vadd.f32 %v3066, %v3091
      %v3125 = vadd.f32 %v3067, %v3091
      %v3126 = vadd.f32 %v3068, %v3091
      %v3127 = vadd.f32 %v3069, %v3091
      %v3128 = vadd.f32 %v3070, %v3091
      %v3129 = vadd.f32 %v3071, %v3091
      %v3130 = vadd.f32 %v3072, %v3091
      %v3131 = vadd.f32 %v3073, %v3091
      %v3132 = vadd.f32 %v3074, %v3091
      %v3133 = vadd.f32 %v3075, %v3091
      %v3134 = vadd.f32 %v3076, %v3091
      %v3135 = vadd.f32 %v3077, %v3091
      %v3136 = vadd.f32 %v3078, %v3091
      %v3137 = vadd.f32 %v3079, %v3091
      %v3138 = vadd.f32 %v3080, %v3091
      %v3139 = vadd.f32 %v3081, %v3091
      %v3140 = vadd.f32 %v3082, %v3091
      %v3141 = vadd.f32 %v3083, %v3091
      %v3142 = vadd.f32 %v3084, %v3091
      %v3143 = vadd.f32 %v3085, %v3091
      %v3144 = vadd.f32 %v3086, %v3091
      %v3145 = vadd.f32 %v3087, %v3091
      %v3146 = vadd.f32 %v3088, %v3091
      %v3147 = vmax.f32 %v3093, 0.0
      %v3148 = vmax.f32 %v3094, 0.0
      %v3149 = vmax.f32 %v3095, 0.0
      %v3150 = vmax.f32 %v3096, 0.0
      %v3151 = vmax.f32 %v3097, 0.0
      %v3152 = vmax.f32 %v3098, 0.0
      %v3153 = vmax.f32 %v3099, 0.0
      %v3154 = vmax.f32 %v3100, 0.0
      %v3155 = vmax.f32 %v3101, 0.0
      %v3156 = vmax.f32 %v3102, 0.0
      %v3157 = vmax.f32 %v3103, 0.0
      %v3158 = vmax.f32 %v3104, 0.0
      %v3159 = vmax.f32 %v3105, 0.0
      %v3160 = vmax.f32 %v3106, 0.0
      %v3161 = vmax.f32 %v3107, 0.0
      %v3162 = vmax.f32 %v3108, 0.0
      %v3163 = vmax.f32 %v3109, 0.0
      %v3164 = vmax.f32 %v3110, 0.0
      %v3165 = vmax.f32 %v3111, 0.0
      %v3166 = vmax.f32 %v3112, 0.0
      %v3167 = vmax.f32 %v3113, 0.0
      %v3168 = vmax.f32 %v3114, 0.0
      %v3169 = vmax.f32 %v3115, 0.0
      %v3170 = vmax.f32 %v3116, 0.0
      %v3171 = vmax.f32 %v3117, 0.0
      %v3172 = vmax.f32 %v3118, 0.0
      %v3173 = vmax.f32 %v3119, 0.0
      %v3174 = vmax.f32 %v3120, 0.0
      %v3175 = vmax.f32 %v3121, 0.0
      %v3176 = vmax.f32 %v3122, 0.0
      %v3177 = vmax.f32 %v3123, 0.0
      %v3178 = vmax.f32 %v3124, 0.0
      %v3179 = vmax.f32 %v3125, 0.0
      %v3180 = vmax.f32 %v3126, 0.0
      %v3181 = vmax.f32 %v3127, 0.0
      %v3182 = vmax.f32 %v3128, 0.0
      %v3183 = vmax.f32 %v3129, 0.0
      %v3184 = vmax.f32 %v3130, 0.0
      %v3185 = vmax.f32 %v3131, 0.0
      %v3186 = vmax.f32 %v3132, 0.0
      %v3187 = vmax.f32 %v3133, 0.0
      %v3188 = vmax.f32 %v3134, 0.0
      %v3189 = vmax.f32 %v3135, 0.0
      %v3190 = vmax.f32 %v3136, 0.0
      %v3191 = vmax.f32 %v3137, 0.0
      %v3192 = vmax.f32 %v3138, 0.0
      %v3193 = vmax.f32 %v3139, 0.0
      %v3194 = vmax.f32 %v3140, 0.0
      %v3195 = vmax.f32 %v3141, 0.0
      %v3196 = vmax.f32 %v3142, 0.0
      %v3197 = vmax.f32 %v3143, 0.0
      %v3198 = vmax.f32 %v3144, 0.0
      %v3199 = vmax.f32 %v3145, 0.0
      %v3200 = vmax.f32 %v3146, 0.0
      %v3201 = vld [vmem:[%s1] sm:$0xff]
      %v3202 = vld [vmem:[%s1 + $0x8] sm:$0xff]
      %v3203 = vld [vmem:[%s1 + $0x10] sm:$0xff]
      %v3204 = vld [vmem:[%s1 + $0x18] sm:$0xff]
      %v3205 = vld [vmem:[%s1 + $0x20] sm:$0xff]
      %v3206 = vld [vmem:[%s1 + $0x28] sm:$0xff]
      %v3207 = vld [vmem:[%s1 + $0x30] sm:$0xff]
      %v3208 = vld [vmem:[%s1 + $0x38] sm:$0xff]
      %v3209 = vld [vmem:[%s1 + $0x40] sm:$0xff]
      %v3210 = vld [vmem:[%s1 + $0x48] sm:$0xff]
      %v3211 = vld [vmem:[%s1 + $0x50] sm:$0xff]
      %v3212 = vld [vmem:[%s1 + $0x58] sm:$0xff]
      %v3213 = vld [vmem:[%s1 + $0x60] sm:$0xff]
      %v3214 = vld [vmem:[%s1 + $0x68] sm:$0xff]
      %v3215 = vld [vmem:[%s1 + $0x70] sm:$0xff]
      %v3216 = vld [vmem:[%s1 + $0x78] sm:$0xff]
      %v3217 = vld [vmem:[%s1 + $0x80] sm:$0xff]
      %v3218 = vld [vmem:[%s1 + $0x88] sm:$0xff]
      %v3219 = vld [vmem:[%s1 + $0x90] sm:$0xff]
      %v3220 = vld [vmem:[%s1 + $0x98] sm:$0xff]
      %v3221 = vld [vmem:[%s1 + $0xa0] sm:$0xff]
      %v3222 = vld [vmem:[%s1 + $0xa8] sm:$0xff]
      %v3223 = vld [vmem:[%s1 + $0xb0] sm:$0xff]
      %v3224 = vld [vmem:[%s1 + $0xb8] sm:$0xff]
      %v3225 = vld [vmem:[%s1 + $0xc0] sm:$0xff]
      %v3226 = vld [vmem:[%s1 + $0xc8] sm:$0xff]
      %v3227 = vld [vmem:[%s1 + $0xd0] sm:$0xff]
      %v3228 = vld [vmem:[%s1 + $0xd8] sm:$0xff]
      %v3229 = vld [vmem:[%s1 + $0xe0] sm:$0xff]
      %v3230 = vld [vmem:[%s1 + $0xe8] sm:$0xff]
      %v3231 = vld [vmem:[%s1 + $0xf0] sm:$0xff]
      %v3232 = vld [vmem:[%s1 + $0xf8] sm:$0xff]
      %v3233 = vld [vmem:[%s1 + $0x100] sm:$0xff]
      %v3234 = vld [vmem:[%s1 + $0x108] sm:$0xff]
      %v3235 = vld [vmem:[%s1 + $0x110] sm:$0xff]
      %v3236 = vld [vmem:[%s1 + $0x118] sm:$0xff]
      %v3237 = vld [vmem:[%s1 + $0x120] sm:$0xff]
      %v3238 = vld [vmem:[%s1 + $0x128] sm:$0xff]
      %v3239 = vld [vmem:[%s1 + $0x130] sm:$0xff]
      %v3240 = vld [vmem:[%s1 + $0x138] sm:$0xff]
      %v3241 = vld [vmem:[%s1 + $0x140] sm:$0xff]
      %v3242 = vld [vmem:[%s1 + $0x148] sm:$0xff]
      %v3243 = vld [vmem:[%s1 + $0x150] sm:$0xff]
      %v3244 = vld [vmem:[%s1 + $0x158] sm:$0xff]
      %v3245 = vld [vmem:[%s1 + $0x160] sm:$0xff]
      %v3246 = vld [vmem:[%s1 + $0x168] sm:$0xff]
      %v3247 = vld [vmem:[%s1 + $0x170] sm:$0xff]
      %v3248 = vld [vmem:[%s1 + $0x178] sm:$0xff]
      %v3249 = vld [vmem:[%s1 + $0x180] sm:$0xff]
      %v3250 = vld [vmem:[%s1 + $0x188] sm:$0xff]
      %v3251 = vld [vmem:[%s1 + $0x190] sm:$0xff]
      %v3252 = vld [vmem:[%s1 + $0x198] sm:$0xff]
      %v3253 = vld [vmem:[%s1 + $0x1a0] sm:$0xff]
      %v3254 = vld [vmem:[%s1 + $0x1a8] sm:$0xff]
      %3256 = vset.pattern.permute.xlu0 0
      %3257 = vperm.xlu0 %3256, %v3201
      %v3258 = vpop.permute.xlu0 %3257
      %3261 = vset.pattern.permute.xlu0 0
      %3262 = vperm.xlu0 %3261, %v3202
      %v3263 = vpop.permute.xlu0 %3262
      %3266 = vset.pattern.permute.xlu0 0
      %3267 = vperm.xlu0 %3266, %v3203
      %v3268 = vpop.permute.xlu0 %3267
      %3271 = vset.pattern.permute.xlu0 0
      %3272 = vperm.xlu0 %3271, %v3204
      %v3273 = vpop.permute.xlu0 %3272
      %3276 = vset.pattern.permute.xlu0 0
      %3277 = vperm.xlu0 %3276, %v3205
      %v3278 = vpop.permute.xlu0 %3277
      %3281 = vset.pattern.permute.xlu0 0
      %3282 = vperm.xlu0 %3281, %v3206
      %v3283 = vpop.permute.xlu0 %3282
      %3286 = vset.pattern.permute.xlu0 0
      %3287 = vperm.xlu0 %3286, %v3207
      %v3288 = vpop.permute.xlu0 %3287
      %3291 = vset.pattern.permute.xlu0 0
      %3292 = vperm.xlu0 %3291, %v3208
      %v3293 = vpop.permute.xlu0 %3292
      %3296 = vset.pattern.permute.xlu0 0
      %3297 = vperm.xlu0 %3296, %v3209
      %v3298 = vpop.permute.xlu0 %3297
      %3301 = vset.pattern.permute.xlu0 0
      %3302 = vperm.xlu0 %3301, %v3210
      %v3303 = vpop.permute.xlu0 %3302
      %3306 = vset.pattern.permute.xlu0 0
      %3307 = vperm.xlu0 %3306, %v3211
      %v3308 = vpop.permute.xlu0 %3307
      %3311 = vset.pattern.permute.xlu0 0
      %3312 = vperm.xlu0 %3311, %v3212
      %v3313 = vpop.permute.xlu0 %3312
      %3316 = vset.pattern.permute.xlu0 0
      %3317 = vperm.xlu0 %3316, %v3213
      %v3318 = vpop.permute.xlu0 %3317
      %3321 = vset.pattern.permute.xlu0 0
      %3322 = vperm.xlu0 %3321, %v3214
      %v3323 = vpop.permute.xlu0 %3322
      %3326 = vset.pattern.permute.xlu0 0
      %3327 = vperm.xlu0 %3326, %v3215
      %v3328 = vpop.permute.xlu0 %3327
      %3331 = vset.pattern.permute.xlu0 0
      %3332 = vperm.xlu0 %3331, %v3216
      %v3333 = vpop.permute.xlu0 %3332
      %3336 = vset.pattern.permute.xlu0 0
      %3337 = vperm.xlu0 %3336, %v3217
      %v3338 = vpop.permute.xlu0 %3337
      %3341 = vset.pattern.permute.xlu0 0
      %3342 = vperm.xlu0 %3341, %v3218
      %v3343 = vpop.permute.xlu0 %3342
      %3346 = vset.pattern.permute.xlu0 0
      %3347 = vperm.xlu0 %3346, %v3219
      %v3348 = vpop.permute.xlu0 %3347
      %3351 = vset.pattern.permute.xlu0 0
      %3352 = vperm.xlu0 %3351, %v3220
      %v3353 = vpop.permute.xlu0 %3352
      %3356 = vset.pattern.permute.xlu0 0
      %3357 = vperm.xlu0 %3356, %v3221
      %v3358 = vpop.permute.xlu0 %3357
      %3361 = vset.pattern.permute.xlu0 0
      %3362 = vperm.xlu0 %3361, %v3222
      %v3363 = vpop.permute.xlu0 %3362
      %3366 = vset.pattern.permute.xlu0 0
      %3367 = vperm.xlu0 %3366, %v3223
      %v3368 = vpop.permute.xlu0 %3367
      %3371 = vset.pattern.permute.xlu0 0
      %3372 = vperm.xlu0 %3371, %v3224
      %v3373 = vpop.permute.xlu0 %3372
      %3376 = vset.pattern.permute.xlu0 0
      %3377 = vperm.xlu0 %3376, %v3225
      %v3378 = vpop.permute.xlu0 %3377
      %3381 = vset.pattern.permute.xlu0 0
      %3382 = vperm.xlu0 %3381, %v3226
      %v3383 = vpop.permute.xlu0 %3382
      %3386 = vset.pattern.permute.xlu0 0
      %3387 = vperm.xlu0 %3386, %v3227
      %v3388 = vpop.permute.xlu0 %3387
      %3391 = vset.pattern.permute.xlu0 0
      %3392 = vperm.xlu0 %3391, %v3228
      %v3393 = vpop.permute.xlu0 %3392
      %3396 = vset.pattern.permute.xlu0 0
      %3397 = vperm.xlu0 %3396, %v3229
      %v3398 = vpop.permute.xlu0 %3397
      %3401 = vset.pattern.permute.xlu0 0
      %3402 = vperm.xlu0 %3401, %v3230
      %v3403 = vpop.permute.xlu0 %3402
      %3406 = vset.pattern.permute.xlu0 0
      %3407 = vperm.xlu0 %3406, %v3231
      %v3408 = vpop.permute.xlu0 %3407
      %3411 = vset.pattern.permute.xlu0 0
      %3412 = vperm.xlu0 %3411, %v3232
      %v3413 = vpop.permute.xlu0 %3412
      %3416 = vset.pattern.permute.xlu0 0
      %3417 = vperm.xlu0 %3416, %v3233
      %v3418 = vpop.permute.xlu0 %3417
      %3421 = vset.pattern.permute.xlu0 0
      %3422 = vperm.xlu0 %3421, %v3234
      %v3423 = vpop.permute.xlu0 %3422
      %3426 = vset.pattern.permute.xlu0 0
      %3427 = vperm.xlu0 %3426, %v3235
      %v3428 = vpop.permute.xlu0 %3427
      %3431 = vset.pattern.permute.xlu0 0
      %3432 = vperm.xlu0 %3431, %v3236
      %v3433 = vpop.permute.xlu0 %3432
      %3436 = vset.pattern.permute.xlu0 0
      %3437 = vperm.xlu0 %3436, %v3237
      %v3438 = vpop.permute.xlu0 %3437
      %3441 = vset.pattern.permute.xlu0 0
      %3442 = vperm.xlu0 %3441, %v3238
      %v3443 = vpop.permute.xlu0 %3442
      %3446 = vset.pattern.permute.xlu0 0
      %3447 = vperm.xlu0 %3446, %v3239
      %v3448 = vpop.permute.xlu0 %3447
      %3451 = vset.pattern.permute.xlu0 0
      %3452 = vperm.xlu0 %3451, %v3240
      %v3453 = vpop.permute.xlu0 %3452
      %3456 = vset.pattern.permute.xlu0 0
      %3457 = vperm.xlu0 %3456, %v3241
      %v3458 = vpop.permute.xlu0 %3457
      %3461 = vset.pattern.permute.xlu0 0
      %3462 = vperm.xlu0 %3461, %v3242
      %v3463 = vpop.permute.xlu0 %3462
      %3466 = vset.pattern.permute.xlu0 0
      %3467 = vperm.xlu0 %3466, %v3243
      %v3468 = vpop.permute.xlu0 %3467
      %3471 = vset.pattern.permute.xlu0 0
      %3472 = vperm.xlu0 %3471, %v3244
      %v3473 = vpop.permute.xlu0 %3472
      %3476 = vset.pattern.permute.xlu0 0
      %3477 = vperm.xlu0 %3476, %v3245
      %v3478 = vpop.permute.xlu0 %3477
      %3481 = vset.pattern.permute.xlu0 0
      %3482 = vperm.xlu0 %3481, %v3246
      %v3483 = vpop.permute.xlu0 %3482
      %3486 = vset.pattern.permute.xlu0 0
      %3487 = vperm.xlu0 %3486, %v3247
      %v3488 = vpop.permute.xlu0 %3487
      %3491 = vset.pattern.permute.xlu0 0
      %3492 = vperm.xlu0 %3491, %v3248
      %v3493 = vpop.permute.xlu0 %3492
      %3496 = vset.pattern.permute.xlu0 0
      %3497 = vperm.xlu0 %3496, %v3249
      %v3498 = vpop.permute.xlu0 %3497
      %3501 = vset.pattern.permute.xlu0 0
      %3502 = vperm.xlu0 %3501, %v3250
      %v3503 = vpop.permute.xlu0 %3502
      %3506 = vset.pattern.permute.xlu0 0
      %3507 = vperm.xlu0 %3506, %v3251
      %v3508 = vpop.permute.xlu0 %3507
      %3511 = vset.pattern.permute.xlu0 0
      %3512 = vperm.xlu0 %3511, %v3252
      %v3513 = vpop.permute.xlu0 %3512
      %3516 = vset.pattern.permute.xlu0 0
      %3517 = vperm.xlu0 %3516, %v3253
      %v3518 = vpop.permute.xlu0 %3517
      %3521 = vset.pattern.permute.xlu0 0
      %3522 = vperm.xlu0 %3521, %v3254
      %v3523 = vpop.permute.xlu0 %3522
      %v3525 = vmul.f32 %v3147, %v3258
      %v3526 = vmul.f32 %v3148, %v3263
      %v3527 = vmul.f32 %v3149, %v3268
      %v3528 = vmul.f32 %v3150, %v3273
      %v3529 = vmul.f32 %v3151, %v3278
      %v3530 = vmul.f32 %v3152, %v3283
      %v3531 = vmul.f32 %v3153, %v3288
      %v3532 = vmul.f32 %v3154, %v3293
      %v3533 = vmul.f32 %v3155, %v3298
      %v3534 = vmul.f32 %v3156, %v3303
      %v3535 = vmul.f32 %v3157, %v3308
      %v3536 = vmul.f32 %v3158, %v3313
      %v3537 = vmul.f32 %v3159, %v3318
      %v3538 = vmul.f32 %v3160, %v3323
      %v3539 = vmul.f32 %v3161, %v3328
      %v3540 = vmul.f32 %v3162, %v3333
      %v3541 = vmul.f32 %v3163, %v3338
      %v3542 = vmul.f32 %v3164, %v3343
      %v3543 = vmul.f32 %v3165, %v3348
      %v3544 = vmul.f32 %v3166, %v3353
      %v3545 = vmul.f32 %v3167, %v3358
      %v3546 = vmul.f32 %v3168, %v3363
      %v3547 = vmul.f32 %v3169, %v3368
      %v3548 = vmul.f32 %v3170, %v3373
      %v3549 = vmul.f32 %v3171, %v3378
      %v3550 = vmul.f32 %v3172, %v3383
      %v3551 = vmul.f32 %v3173, %v3388
      %v3552 = vmul.f32 %v3174, %v3393
      %v3553 = vmul.f32 %v3175, %v3398
      %v3554 = vmul.f32 %v3176, %v3403
      %v3555 = vmul.f32 %v3177, %v3408
      %v3556 = vmul.f32 %v3178, %v3413
      %v3557 = vmul.f32 %v3179, %v3418
      %v3558 = vmul.f32 %v3180, %v3423
      %v3559 = vmul.f32 %v3181, %v3428
      %v3560 = vmul.f32 %v3182, %v3433
      %v3561 = vmul.f32 %v3183, %v3438
      %v3562 = vmul.f32 %v3184, %v3443
      %v3563 = vmul.f32 %v3185, %v3448
      %v3564 = vmul.f32 %v3186, %v3453
      %v3565 = vmul.f32 %v3187, %v3458
      %v3566 = vmul.f32 %v3188, %v3463
      %v3567 = vmul.f32 %v3189, %v3468
      %v3568 = vmul.f32 %v3190, %v3473
      %v3569 = vmul.f32 %v3191, %v3478
      %v3570 = vmul.f32 %v3192, %v3483
      %v3571 = vmul.f32 %v3193, %v3488
      %v3572 = vmul.f32 %v3194, %v3493
      %v3573 = vmul.f32 %v3195, %v3498
      %v3574 = vmul.f32 %v3196, %v3503
      %v3575 = vmul.f32 %v3197, %v3508
      %v3576 = vmul.f32 %v3198, %v3513
      %v3577 = vmul.f32 %v3199, %v3518
      %v3578 = vmul.f32 %v3200, %v3523
      %v3579 = vld [vmem:[%s4] sm:$0xf]
      %v3628 = vrot.slane %v3525, 1
      %v3629 = vrot.slane %v3526, 1
      %v3630 = vsel %vm405, %v3628, %v3629
      %v3631 = vrot.slane %v3527, 1
      %v3632 = vsel %vm405, %v3629, %v3631
      %v3633 = vrot.slane %v3528, 1
      %v3634 = vrot.slane %v3529, 1
      %v3635 = vsel %vm405, %v3633, %v3634
      %v3636 = vrot.slane %v3530, 1
      %v3637 = vsel %vm405, %v3634, %v3636
      %v3638 = vrot.slane %v3531, 1
      %v3639 = vrot.slane %v3532, 1
      %v3640 = vsel %vm405, %v3638, %v3639
      %v3641 = vrot.slane %v3533, 1
      %v3642 = vsel %vm405, %v3639, %v3641
      %v3643 = vrot.slane %v3534, 1
      %v3644 = vrot.slane %v3535, 1
      %v3645 = vsel %vm405, %v3643, %v3644
      %v3646 = vrot.slane %v3536, 1
      %v3647 = vsel %vm405, %v3644, %v3646
      %v3648 = vrot.slane %v3537, 1
      %v3649 = vrot.slane %v3538, 1
      %v3650 = vsel %vm405, %v3648, %v3649
      %v3651 = vrot.slane %v3539, 1
      %v3652 = vsel %vm405, %v3649, %v3651
      %v3653 = vrot.slane %v3540, 1
      %v3654 = vrot.slane %v3541, 1
      %v3655 = vsel %vm405, %v3653, %v3654
      %v3656 = vrot.slane %v3542, 1
      %v3657 = vsel %vm405, %v3654, %v3656
      %v3658 = vrot.slane %v3543, 1
      %v3659 = vrot.slane %v3544, 1
      %v3660 = vsel %vm405, %v3658, %v3659
      %v3661 = vrot.slane %v3545, 1
      %v3662 = vsel %vm405, %v3659, %v3661
      %v3663 = vrot.slane %v3546, 1
      %v3664 = vrot.slane %v3547, 1
      %v3665 = vsel %vm405, %v3663, %v3664
      %v3666 = vrot.slane %v3548, 1
      %v3667 = vsel %vm405, %v3664, %v3666
      %v3668 = vrot.slane %v3549, 1
      %v3669 = vrot.slane %v3550, 1
      %v3670 = vsel %vm405, %v3668, %v3669
      %v3671 = vrot.slane %v3551, 1
      %v3672 = vsel %vm405, %v3669, %v3671
      %v3673 = vrot.slane %v3552, 1
      %v3674 = vrot.slane %v3553, 1
      %v3675 = vsel %vm405, %v3673, %v3674
      %v3676 = vrot.slane %v3554, 1
      %v3677 = vsel %vm405, %v3674, %v3676
      %v3678 = vrot.slane %v3555, 1
      %v3679 = vrot.slane %v3556, 1
      %v3680 = vsel %vm405, %v3678, %v3679
      %v3681 = vrot.slane %v3557, 1
      %v3682 = vsel %vm405, %v3679, %v3681
      %v3683 = vrot.slane %v3558, 1
      %v3684 = vrot.slane %v3559, 1
      %v3685 = vsel %vm405, %v3683, %v3684
      %v3686 = vrot.slane %v3560, 1
      %v3687 = vsel %vm405, %v3684, %v3686
      %v3688 = vrot.slane %v3561, 1
      %v3689 = vrot.slane %v3562, 1
      %v3690 = vsel %vm405, %v3688, %v3689
      %v3691 = vrot.slane %v3563, 1
      %v3692 = vsel %vm405, %v3689, %v3691
      %v3693 = vrot.slane %v3564, 1
      %v3694 = vrot.slane %v3565, 1
      %v3695 = vsel %vm405, %v3693, %v3694
      %v3696 = vrot.slane %v3566, 1
      %v3697 = vsel %vm405, %v3694, %v3696
      %v3698 = vrot.slane %v3567, 1
      %v3699 = vrot.slane %v3568, 1
      %v3700 = vsel %vm405, %v3698, %v3699
      %v3701 = vrot.slane %v3569, 1
      %v3702 = vsel %vm405, %v3699, %v3701
      %v3703 = vrot.slane %v3570, 1
      %v3704 = vrot.slane %v3571, 1
      %v3705 = vsel %vm405, %v3703, %v3704
      %v3706 = vrot.slane %v3572, 1
      %v3707 = vsel %vm405, %v3704, %v3706
      %s3708 = scalar_lea.vmem %s4, 4
      %v3709 = vld [vmem:[%s3708] sm:$0xf]
      %v3710 = vsel %vm534, %v3630, 0
      %v3712 = vsel %vm534, %v3632, 0
      %v3714 = vsel %vm534, %v3635, 0
      %v3716 = vsel %vm534, %v3637, 0
      %v3718 = vsel %vm534, %v3640, 0
      %v3720 = vsel %vm534, %v3642, 0
      %v3722 = vsel %vm534, %v3645, 0
      %v3724 = vsel %vm534, %v3647, 0
      %v3726 = vsel %vm534, %v3650, 0
      %v3728 = vsel %vm534, %v3652, 0
      %v3730 = vsel %vm534, %v3655, 0
      %v3732 = vsel %vm534, %v3657, 0
      %v3734 = vsel %vm534, %v3660, 0
      %v3736 = vsel %vm534, %v3662, 0
      %v3738 = vsel %vm534, %v3665, 0
      %v3740 = vsel %vm534, %v3667, 0
      %v3742 = vsel %vm534, %v3670, 0
      %v3744 = vsel %vm534, %v3672, 0
      %v3746 = vsel %vm534, %v3675, 0
      %v3748 = vsel %vm534, %v3677, 0
      %v3750 = vsel %vm534, %v3680, 0
      %v3752 = vsel %vm534, %v3682, 0
      %v3754 = vsel %vm534, %v3685, 0
      %v3756 = vsel %vm534, %v3687, 0
      %v3758 = vsel %vm534, %v3690, 0
      %v3760 = vsel %vm534, %v3692, 0
      %v3762 = vsel %vm534, %v3695, 0
      %v3764 = vsel %vm534, %v3697, 0
      %v3766 = vsel %vm534, %v3700, 0
      %v3768 = vsel %vm534, %v3702, 0
      %v3770 = vsel %vm534, %v3705, 0
      %v3772 = vsel %vm534, %v3707, 0
      %v3775 = vsel %vm643, %v3709, 0
      %3777 = vmatpush.msra.mxu0 0.0
      %3778 = vmatpush.msra.mxu0 0.0
      %3779 = vmatpush.msra.mxu0 0.0
      %3780 = vmatpush.msra.mxu0 0.0
      %3781 = vmatpush.msra.mxu0 0.0
      %3782 = vmatpush.msra.mxu0 0.0
      %3783 = vmatpush.msra.mxu0 0.0
      %3784 = vmatpush.msra.mxu0 0.0
      %3785 = vmatpush.msra.mxu0 0.0
      %3786 = vmatpush.msra.mxu0 0.0
      %3787 = vmatpush.msra.mxu0 0.0
      %3788 = vmatpush.msra.mxu0 0.0
      %3789 = vmatpush.msra.mxu0 0.0
      %3790 = vmatpush.msra.mxu0 0.0
      %3791 = vmatpush.msra.mxu0 0.0
      %3792 = vmatpush.msra.mxu0 %v3775
      %3793 = vmatmul.f32.gmra.mxu0 %v3710
      %v3794 = vpop.f32.mrf.mxu0
      %v3795 = vadd.f32 0.0, %v3794
      %3796 = vmatmul.f32.gmra.mxu0 %v3712
      %v3797 = vpop.f32.mrf.mxu0
      %v3798 = vadd.f32 0.0, %v3797
      %3799 = vmatmul.f32.gmra.mxu0 %v3714
      %v3800 = vpop.f32.mrf.mxu0
      %v3801 = vadd.f32 0.0, %v3800
      %3802 = vmatmul.f32.gmra.mxu0 %v3716
      %v3803 = vpop.f32.mrf.mxu0
      %v3804 = vadd.f32 0.0, %v3803
      %3805 = vmatmul.f32.gmra.mxu0 %v3718
      %v3806 = vpop.f32.mrf.mxu0
      %v3807 = vadd.f32 0.0, %v3806
      %3808 = vmatmul.f32.gmra.mxu0 %v3720
      %v3809 = vpop.f32.mrf.mxu0
      %v3810 = vadd.f32 0.0, %v3809
      %3811 = vmatmul.f32.gmra.mxu0 %v3722
      %v3812 = vpop.f32.mrf.mxu0
      %v3813 = vadd.f32 0.0, %v3812
      %3814 = vmatmul.f32.gmra.mxu0 %v3724
      %v3815 = vpop.f32.mrf.mxu0
      %v3816 = vadd.f32 0.0, %v3815
      %3817 = vmatmul.f32.gmra.mxu0 %v3726
      %v3818 = vpop.f32.mrf.mxu0
      %v3819 = vadd.f32 0.0, %v3818
      %3820 = vmatmul.f32.gmra.mxu0 %v3728
      %v3821 = vpop.f32.mrf.mxu0
      %v3822 = vadd.f32 0.0, %v3821
      %3823 = vmatmul.f32.gmra.mxu0 %v3730
      %v3824 = vpop.f32.mrf.mxu0
      %v3825 = vadd.f32 0.0, %v3824
      %3826 = vmatmul.f32.gmra.mxu0 %v3732
      %v3827 = vpop.f32.mrf.mxu0
      %v3828 = vadd.f32 0.0, %v3827
      %3829 = vmatmul.f32.gmra.mxu0 %v3734
      %v3830 = vpop.f32.mrf.mxu0
      %v3831 = vadd.f32 0.0, %v3830
      %3832 = vmatmul.f32.gmra.mxu0 %v3736
      %v3833 = vpop.f32.mrf.mxu0
      %v3834 = vadd.f32 0.0, %v3833
      %3835 = vmatmul.f32.gmra.mxu0 %v3738
      %v3836 = vpop.f32.mrf.mxu0
      %v3837 = vadd.f32 0.0, %v3836
      %3838 = vmatmul.f32.gmra.mxu0 %v3740
      %v3839 = vpop.f32.mrf.mxu0
      %v3840 = vadd.f32 0.0, %v3839
      %3841 = vmatmul.f32.gmra.mxu0 %v3742
      %v3842 = vpop.f32.mrf.mxu0
      %v3843 = vadd.f32 0.0, %v3842
      %3844 = vmatmul.f32.gmra.mxu0 %v3744
      %v3845 = vpop.f32.mrf.mxu0
      %v3846 = vadd.f32 0.0, %v3845
      %3847 = vmatmul.f32.gmra.mxu0 %v3746
      %v3848 = vpop.f32.mrf.mxu0
      %v3849 = vadd.f32 0.0, %v3848
      %3850 = vmatmul.f32.gmra.mxu0 %v3748
      %v3851 = vpop.f32.mrf.mxu0
      %v3852 = vadd.f32 0.0, %v3851
      %3853 = vmatmul.f32.gmra.mxu0 %v3750
      %v3854 = vpop.f32.mrf.mxu0
      %v3855 = vadd.f32 0.0, %v3854
      %3856 = vmatmul.f32.gmra.mxu0 %v3752
      %v3857 = vpop.f32.mrf.mxu0
      %v3858 = vadd.f32 0.0, %v3857
      %3859 = vmatmul.f32.gmra.mxu0 %v3754
      %v3860 = vpop.f32.mrf.mxu0
      %v3861 = vadd.f32 0.0, %v3860
      %3862 = vmatmul.f32.gmra.mxu0 %v3756
      %v3863 = vpop.f32.mrf.mxu0
      %v3864 = vadd.f32 0.0, %v3863
      %3865 = vmatmul.f32.gmra.mxu0 %v3758
      %v3866 = vpop.f32.mrf.mxu0
      %v3867 = vadd.f32 0.0, %v3866
      %3868 = vmatmul.f32.gmra.mxu0 %v3760
      %v3869 = vpop.f32.mrf.mxu0
      %v3870 = vadd.f32 0.0, %v3869
      %3871 = vmatmul.f32.gmra.mxu0 %v3762
      %v3872 = vpop.f32.mrf.mxu0
      %v3873 = vadd.f32 0.0, %v3872
      %3874 = vmatmul.f32.gmra.mxu0 %v3764
      %v3875 = vpop.f32.mrf.mxu0
      %v3876 = vadd.f32 0.0, %v3875
      %3877 = vmatmul.f32.gmra.mxu0 %v3766
      %v3878 = vpop.f32.mrf.mxu0
      %v3879 = vadd.f32 0.0, %v3878
      %3880 = vmatmul.f32.gmra.mxu0 %v3768
      %v3881 = vpop.f32.mrf.mxu0
      %v3882 = vadd.f32 0.0, %v3881
      %3883 = vmatmul.f32.gmra.mxu0 %v3770
      %v3884 = vpop.f32.mrf.mxu0
      %v3885 = vadd.f32 0.0, %v3884
      %3886 = vmatmul.f32.gmra.mxu0 %v3772
      %v3887 = vpop.f32.mrf.mxu0
      %v3888 = vadd.f32 0.0, %v3887
      %3889 = vdwg.mxu0
      %v3890 = vsel %vm534, %v3525, 0
      %v3892 = vsel %vm534, %v3526, 0
      %v3894 = vsel %vm534, %v3528, 0
      %v3896 = vsel %vm534, %v3529, 0
      %v3898 = vsel %vm534, %v3531, 0
      %v3900 = vsel %vm534, %v3532, 0
      %v3902 = vsel %vm534, %v3534, 0
      %v3904 = vsel %vm534, %v3535, 0
      %v3906 = vsel %vm534, %v3537, 0
      %v3908 = vsel %vm534, %v3538, 0
      %v3910 = vsel %vm534, %v3540, 0
      %v3912 = vsel %vm534, %v3541, 0
      %v3914 = vsel %vm534, %v3543, 0
      %v3916 = vsel %vm534, %v3544, 0
      %v3918 = vsel %vm534, %v3546, 0
      %v3920 = vsel %vm534, %v3547, 0
      %v3922 = vsel %vm534, %v3549, 0
      %v3924 = vsel %vm534, %v3550, 0
      %v3926 = vsel %vm534, %v3552, 0
      %v3928 = vsel %vm534, %v3553, 0
      %v3930 = vsel %vm534, %v3555, 0
      %v3932 = vsel %vm534, %v3556, 0
      %v3934 = vsel %vm534, %v3558, 0
      %v3936 = vsel %vm534, %v3559, 0
      %v3938 = vsel %vm534, %v3561, 0
      %v3940 = vsel %vm534, %v3562, 0
      %v3942 = vsel %vm534, %v3564, 0
      %v3944 = vsel %vm534, %v3565, 0
      %v3946 = vsel %vm534, %v3567, 0
      %v3948 = vsel %vm534, %v3568, 0
      %v3950 = vsel %vm534, %v3570, 0
      %v3952 = vsel %vm534, %v3571, 0
      %v3955 = vsel %vm643, %v3579, 0
      %3957 = vmatpush.msra.mxu0 0.0
      %3958 = vmatpush.msra.mxu0 0.0
      %3959 = vmatpush.msra.mxu0 0.0
      %3960 = vmatpush.msra.mxu0 0.0
      %3961 = vmatpush.msra.mxu0 0.0
      %3962 = vmatpush.msra.mxu0 0.0
      %3963 = vmatpush.msra.mxu0 0.0
      %3964 = vmatpush.msra.mxu0 0.0
      %3965 = vmatpush.msra.mxu0 0.0
      %3966 = vmatpush.msra.mxu0 0.0
      %3967 = vmatpush.msra.mxu0 0.0
      %3968 = vmatpush.msra.mxu0 0.0
      %3969 = vmatpush.msra.mxu0 0.0
      %3970 = vmatpush.msra.mxu0 0.0
      %3971 = vmatpush.msra.mxu0 0.0
      %3972 = vmatpush.msra.mxu0 %v3955
      %3973 = vmatmul.f32.gmra.mxu0 %v3890
      %v3974 = vpop.f32.mrf.mxu0
      %v3975 = vadd.f32 %v3795, %v3974
      %3976 = vmatmul.f32.gmra.mxu0 %v3892
      %v3977 = vpop.f32.mrf.mxu0
      %v3978 = vadd.f32 %v3798, %v3977
      %3979 = vmatmul.f32.gmra.mxu0 %v3894
      %v3980 = vpop.f32.mrf.mxu0
      %v3981 = vadd.f32 %v3801, %v3980
      %3982 = vmatmul.f32.gmra.mxu0 %v3896
      %v3983 = vpop.f32.mrf.mxu0
      %v3984 = vadd.f32 %v3804, %v3983
      %3985 = vmatmul.f32.gmra.mxu0 %v3898
      %v3986 = vpop.f32.mrf.mxu0
      %v3987 = vadd.f32 %v3807, %v3986
      %3988 = vmatmul.f32.gmra.mxu0 %v3900
      %v3989 = vpop.f32.mrf.mxu0
      %v3990 = vadd.f32 %v3810, %v3989
      %3991 = vmatmul.f32.gmra.mxu0 %v3902
      %v3992 = vpop.f32.mrf.mxu0
      %v3993 = vadd.f32 %v3813, %v3992
      %3994 = vmatmul.f32.gmra.mxu0 %v3904
      %v3995 = vpop.f32.mrf.mxu0
      %v3996 = vadd.f32 %v3816, %v3995
      %3997 = vmatmul.f32.gmra.mxu0 %v3906
      %v3998 = vpop.f32.mrf.mxu0
      %v3999 = vadd.f32 %v3819, %v3998
      %4000 = vmatmul.f32.gmra.mxu0 %v3908
      %v4001 = vpop.f32.mrf.mxu0
      %v4002 = vadd.f32 %v3822, %v4001
      %4003 = vmatmul.f32.gmra.mxu0 %v3910
      %v4004 = vpop.f32.mrf.mxu0
      %v4005 = vadd.f32 %v3825, %v4004
      %4006 = vmatmul.f32.gmra.mxu0 %v3912
      %v4007 = vpop.f32.mrf.mxu0
      %v4008 = vadd.f32 %v3828, %v4007
      %4009 = vmatmul.f32.gmra.mxu0 %v3914
      %v4010 = vpop.f32.mrf.mxu0
      %v4011 = vadd.f32 %v3831, %v4010
      %4012 = vmatmul.f32.gmra.mxu0 %v3916
      %v4013 = vpop.f32.mrf.mxu0
      %v4014 = vadd.f32 %v3834, %v4013
      %4015 = vmatmul.f32.gmra.mxu0 %v3918
      %v4016 = vpop.f32.mrf.mxu0
      %v4017 = vadd.f32 %v3837, %v4016
      %4018 = vmatmul.f32.gmra.mxu0 %v3920
      %v4019 = vpop.f32.mrf.mxu0
      %v4020 = vadd.f32 %v3840, %v4019
      %4021 = vmatmul.f32.gmra.mxu0 %v3922
      %v4022 = vpop.f32.mrf.mxu0
      %v4023 = vadd.f32 %v3843, %v4022
      %4024 = vmatmul.f32.gmra.mxu0 %v3924
      %v4025 = vpop.f32.mrf.mxu0
      %v4026 = vadd.f32 %v3846, %v4025
      %4027 = vmatmul.f32.gmra.mxu0 %v3926
      %v4028 = vpop.f32.mrf.mxu0
      %v4029 = vadd.f32 %v3849, %v4028
      %4030 = vmatmul.f32.gmra.mxu0 %v3928
      %v4031 = vpop.f32.mrf.mxu0
      %v4032 = vadd.f32 %v3852, %v4031
      %4033 = vmatmul.f32.gmra.mxu0 %v3930
      %v4034 = vpop.f32.mrf.mxu0
      %v4035 = vadd.f32 %v3855, %v4034
      %4036 = vmatmul.f32.gmra.mxu0 %v3932
      %v4037 = vpop.f32.mrf.mxu0
      %v4038 = vadd.f32 %v3858, %v4037
      %4039 = vmatmul.f32.gmra.mxu0 %v3934
      %v4040 = vpop.f32.mrf.mxu0
      %v4041 = vadd.f32 %v3861, %v4040
      %4042 = vmatmul.f32.gmra.mxu0 %v3936
      %v4043 = vpop.f32.mrf.mxu0
      %v4044 = vadd.f32 %v3864, %v4043
      %4045 = vmatmul.f32.gmra.mxu0 %v3938
      %v4046 = vpop.f32.mrf.mxu0
      %v4047 = vadd.f32 %v3867, %v4046
      %4048 = vmatmul.f32.gmra.mxu0 %v3940
      %v4049 = vpop.f32.mrf.mxu0
      %v4050 = vadd.f32 %v3870, %v4049
      %4051 = vmatmul.f32.gmra.mxu0 %v3942
      %v4052 = vpop.f32.mrf.mxu0
      %v4053 = vadd.f32 %v3873, %v4052
      %4054 = vmatmul.f32.gmra.mxu0 %v3944
      %v4055 = vpop.f32.mrf.mxu0
      %v4056 = vadd.f32 %v3876, %v4055
      %4057 = vmatmul.f32.gmra.mxu0 %v3946
      %v4058 = vpop.f32.mrf.mxu0
      %v4059 = vadd.f32 %v3879, %v4058
      %4060 = vmatmul.f32.gmra.mxu0 %v3948
      %v4061 = vpop.f32.mrf.mxu0
      %v4062 = vadd.f32 %v3882, %v4061
      %4063 = vmatmul.f32.gmra.mxu0 %v3950
      %v4064 = vpop.f32.mrf.mxu0
      %v4065 = vadd.f32 %v3885, %v4064
      %4066 = vmatmul.f32.gmra.mxu0 %v3952
      %v4067 = vpop.f32.mrf.mxu0
      %v4068 = vadd.f32 %v3888, %v4067
      %4069 = vdwg.mxu0
      %v4070 = vrot.slane %v3525, 2
      %v4071 = vrot.slane %v3526, 2
      %v4072 = vsel %vm1116, %v4070, %v4071
      %v4073 = vrot.slane %v3527, 2
      %v4074 = vsel %vm1116, %v4071, %v4073
      %v4075 = vrot.slane %v3528, 2
      %v4076 = vrot.slane %v3529, 2
      %v4077 = vsel %vm1116, %v4075, %v4076
      %v4078 = vrot.slane %v3530, 2
      %v4079 = vsel %vm1116, %v4076, %v4078
      %v4080 = vrot.slane %v3531, 2
      %v4081 = vrot.slane %v3532, 2
      %v4082 = vsel %vm1116, %v4080, %v4081
      %v4083 = vrot.slane %v3533, 2
      %v4084 = vsel %vm1116, %v4081, %v4083
      %v4085 = vrot.slane %v3534, 2
      %v4086 = vrot.slane %v3535, 2
      %v4087 = vsel %vm1116, %v4085, %v4086
      %v4088 = vrot.slane %v3536, 2
      %v4089 = vsel %vm1116, %v4086, %v4088
      %v4090 = vrot.slane %v3537, 2
      %v4091 = vrot.slane %v3538, 2
      %v4092 = vsel %vm1116, %v4090, %v4091
      %v4093 = vrot.slane %v3539, 2
      %v4094 = vsel %vm1116, %v4091, %v4093
      %v4095 = vrot.slane %v3540, 2
      %v4096 = vrot.slane %v3541, 2
      %v4097 = vsel %vm1116, %v4095, %v4096
      %v4098 = vrot.slane %v3542, 2
      %v4099 = vsel %vm1116, %v4096, %v4098
      %v4100 = vrot.slane %v3543, 2
      %v4101 = vrot.slane %v3544, 2
      %v4102 = vsel %vm1116, %v4100, %v4101
      %v4103 = vrot.slane %v3545, 2
      %v4104 = vsel %vm1116, %v4101, %v4103
      %v4105 = vrot.slane %v3546, 2
      %v4106 = vrot.slane %v3547, 2
      %v4107 = vsel %vm1116, %v4105, %v4106
      %v4108 = vrot.slane %v3548, 2
      %v4109 = vsel %vm1116, %v4106, %v4108
      %v4110 = vrot.slane %v3549, 2
      %v4111 = vrot.slane %v3550, 2
      %v4112 = vsel %vm1116, %v4110, %v4111
      %v4113 = vrot.slane %v3551, 2
      %v4114 = vsel %vm1116, %v4111, %v4113
      %v4115 = vrot.slane %v3552, 2
      %v4116 = vrot.slane %v3553, 2
      %v4117 = vsel %vm1116, %v4115, %v4116
      %v4118 = vrot.slane %v3554, 2
      %v4119 = vsel %vm1116, %v4116, %v4118
      %v4120 = vrot.slane %v3555, 2
      %v4121 = vrot.slane %v3556, 2
      %v4122 = vsel %vm1116, %v4120, %v4121
      %v4123 = vrot.slane %v3557, 2
      %v4124 = vsel %vm1116, %v4121, %v4123
      %v4125 = vrot.slane %v3558, 2
      %v4126 = vrot.slane %v3559, 2
      %v4127 = vsel %vm1116, %v4125, %v4126
      %v4128 = vrot.slane %v3560, 2
      %v4129 = vsel %vm1116, %v4126, %v4128
      %v4130 = vrot.slane %v3561, 2
      %v4131 = vrot.slane %v3562, 2
      %v4132 = vsel %vm1116, %v4130, %v4131
      %v4133 = vrot.slane %v3563, 2
      %v4134 = vsel %vm1116, %v4131, %v4133
      %v4135 = vrot.slane %v3564, 2
      %v4136 = vrot.slane %v3565, 2
      %v4137 = vsel %vm1116, %v4135, %v4136
      %v4138 = vrot.slane %v3566, 2
      %v4139 = vsel %vm1116, %v4136, %v4138
      %v4140 = vrot.slane %v3567, 2
      %v4141 = vrot.slane %v3568, 2
      %v4142 = vsel %vm1116, %v4140, %v4141
      %v4143 = vrot.slane %v3569, 2
      %v4144 = vsel %vm1116, %v4141, %v4143
      %v4145 = vrot.slane %v3570, 2
      %v4146 = vrot.slane %v3571, 2
      %v4147 = vsel %vm1116, %v4145, %v4146
      %v4148 = vrot.slane %v3572, 2
      %v4149 = vsel %vm1116, %v4146, %v4148
      %s4150 = scalar_lea.vmem %s4, 8
      %v4151 = vld [vmem:[%s4150] sm:$0xf]
      %v4152 = vsel %vm534, %v4072, 0
      %v4154 = vsel %vm534, %v4074, 0
      %v4156 = vsel %vm534, %v4077, 0
      %v4158 = vsel %vm534, %v4079, 0
      %v4160 = vsel %vm534, %v4082, 0
      %v4162 = vsel %vm534, %v4084, 0
      %v4164 = vsel %vm534, %v4087, 0
      %v4166 = vsel %vm534, %v4089, 0
      %v4168 = vsel %vm534, %v4092, 0
      %v4170 = vsel %vm534, %v4094, 0
      %v4172 = vsel %vm534, %v4097, 0
      %v4174 = vsel %vm534, %v4099, 0
      %v4176 = vsel %vm534, %v4102, 0
      %v4178 = vsel %vm534, %v4104, 0
      %v4180 = vsel %vm534, %v4107, 0
      %v4182 = vsel %vm534, %v4109, 0
      %v4184 = vsel %vm534, %v4112, 0
      %v4186 = vsel %vm534, %v4114, 0
      %v4188 = vsel %vm534, %v4117, 0
      %v4190 = vsel %vm534, %v4119, 0
      %v4192 = vsel %vm534, %v4122, 0
      %v4194 = vsel %vm534, %v4124, 0
      %v4196 = vsel %vm534, %v4127, 0
      %v4198 = vsel %vm534, %v4129, 0
      %v4200 = vsel %vm534, %v4132, 0
      %v4202 = vsel %vm534, %v4134, 0
      %v4204 = vsel %vm534, %v4137, 0
      %v4206 = vsel %vm534, %v4139, 0
      %v4208 = vsel %vm534, %v4142, 0
      %v4210 = vsel %vm534, %v4144, 0
      %v4212 = vsel %vm534, %v4147, 0
      %v4214 = vsel %vm534, %v4149, 0
      %v4217 = vsel %vm643, %v4151, 0
      %4219 = vmatpush.msra.mxu0 0.0
      %4220 = vmatpush.msra.mxu0 0.0
      %4221 = vmatpush.msra.mxu0 0.0
      %4222 = vmatpush.msra.mxu0 0.0
      %4223 = vmatpush.msra.mxu0 0.0
      %4224 = vmatpush.msra.mxu0 0.0
      %4225 = vmatpush.msra.mxu0 0.0
      %4226 = vmatpush.msra.mxu0 0.0
      %4227 = vmatpush.msra.mxu0 0.0
      %4228 = vmatpush.msra.mxu0 0.0
      %4229 = vmatpush.msra.mxu0 0.0
      %4230 = vmatpush.msra.mxu0 0.0
      %4231 = vmatpush.msra.mxu0 0.0
      %4232 = vmatpush.msra.mxu0 0.0
      %4233 = vmatpush.msra.mxu0 0.0
      %4234 = vmatpush.msra.mxu0 %v4217
      %4235 = vmatmul.f32.gmra.mxu0 %v4152
      %v4236 = vpop.f32.mrf.mxu0
      %v4237 = vadd.f32 0.0, %v4236
      %4238 = vmatmul.f32.gmra.mxu0 %v4154
      %v4239 = vpop.f32.mrf.mxu0
      %v4240 = vadd.f32 0.0, %v4239
      %4241 = vmatmul.f32.gmra.mxu0 %v4156
      %v4242 = vpop.f32.mrf.mxu0
      %v4243 = vadd.f32 0.0, %v4242
      %4244 = vmatmul.f32.gmra.mxu0 %v4158
      %v4245 = vpop.f32.mrf.mxu0
      %v4246 = vadd.f32 0.0, %v4245
      %4247 = vmatmul.f32.gmra.mxu0 %v4160
      %v4248 = vpop.f32.mrf.mxu0
      %v4249 = vadd.f32 0.0, %v4248
      %4250 = vmatmul.f32.gmra.mxu0 %v4162
      %v4251 = vpop.f32.mrf.mxu0
      %v4252 = vadd.f32 0.0, %v4251
      %4253 = vmatmul.f32.gmra.mxu0 %v4164
      %v4254 = vpop.f32.mrf.mxu0
      %v4255 = vadd.f32 0.0, %v4254
      %4256 = vmatmul.f32.gmra.mxu0 %v4166
      %v4257 = vpop.f32.mrf.mxu0
      %v4258 = vadd.f32 0.0, %v4257
      %4259 = vmatmul.f32.gmra.mxu0 %v4168
      %v4260 = vpop.f32.mrf.mxu0
      %v4261 = vadd.f32 0.0, %v4260
      %4262 = vmatmul.f32.gmra.mxu0 %v4170
      %v4263 = vpop.f32.mrf.mxu0
      %v4264 = vadd.f32 0.0, %v4263
      %4265 = vmatmul.f32.gmra.mxu0 %v4172
      %v4266 = vpop.f32.mrf.mxu0
      %v4267 = vadd.f32 0.0, %v4266
      %4268 = vmatmul.f32.gmra.mxu0 %v4174
      %v4269 = vpop.f32.mrf.mxu0
      %v4270 = vadd.f32 0.0, %v4269
      %4271 = vmatmul.f32.gmra.mxu0 %v4176
      %v4272 = vpop.f32.mrf.mxu0
      %v4273 = vadd.f32 0.0, %v4272
      %4274 = vmatmul.f32.gmra.mxu0 %v4178
      %v4275 = vpop.f32.mrf.mxu0
      %v4276 = vadd.f32 0.0, %v4275
      %4277 = vmatmul.f32.gmra.mxu0 %v4180
      %v4278 = vpop.f32.mrf.mxu0
      %v4279 = vadd.f32 0.0, %v4278
      %4280 = vmatmul.f32.gmra.mxu0 %v4182
      %v4281 = vpop.f32.mrf.mxu0
      %v4282 = vadd.f32 0.0, %v4281
      %4283 = vmatmul.f32.gmra.mxu0 %v4184
      %v4284 = vpop.f32.mrf.mxu0
      %v4285 = vadd.f32 0.0, %v4284
      %4286 = vmatmul.f32.gmra.mxu0 %v4186
      %v4287 = vpop.f32.mrf.mxu0
      %v4288 = vadd.f32 0.0, %v4287
      %4289 = vmatmul.f32.gmra.mxu0 %v4188
      %v4290 = vpop.f32.mrf.mxu0
      %v4291 = vadd.f32 0.0, %v4290
      %4292 = vmatmul.f32.gmra.mxu0 %v4190
      %v4293 = vpop.f32.mrf.mxu0
      %v4294 = vadd.f32 0.0, %v4293
      %4295 = vmatmul.f32.gmra.mxu0 %v4192
      %v4296 = vpop.f32.mrf.mxu0
      %v4297 = vadd.f32 0.0, %v4296
      %4298 = vmatmul.f32.gmra.mxu0 %v4194
      %v4299 = vpop.f32.mrf.mxu0
      %v4300 = vadd.f32 0.0, %v4299
      %4301 = vmatmul.f32.gmra.mxu0 %v4196
      %v4302 = vpop.f32.mrf.mxu0
      %v4303 = vadd.f32 0.0, %v4302
      %4304 = vmatmul.f32.gmra.mxu0 %v4198
      %v4305 = vpop.f32.mrf.mxu0
      %v4306 = vadd.f32 0.0, %v4305
      %4307 = vmatmul.f32.gmra.mxu0 %v4200
      %v4308 = vpop.f32.mrf.mxu0
      %v4309 = vadd.f32 0.0, %v4308
      %4310 = vmatmul.f32.gmra.mxu0 %v4202
      %v4311 = vpop.f32.mrf.mxu0
      %v4312 = vadd.f32 0.0, %v4311
      %4313 = vmatmul.f32.gmra.mxu0 %v4204
      %v4314 = vpop.f32.mrf.mxu0
      %v4315 = vadd.f32 0.0, %v4314
      %4316 = vmatmul.f32.gmra.mxu0 %v4206
      %v4317 = vpop.f32.mrf.mxu0
      %v4318 = vadd.f32 0.0, %v4317
      %4319 = vmatmul.f32.gmra.mxu0 %v4208
      %v4320 = vpop.f32.mrf.mxu0
      %v4321 = vadd.f32 0.0, %v4320
      %4322 = vmatmul.f32.gmra.mxu0 %v4210
      %v4323 = vpop.f32.mrf.mxu0
      %v4324 = vadd.f32 0.0, %v4323
      %4325 = vmatmul.f32.gmra.mxu0 %v4212
      %v4326 = vpop.f32.mrf.mxu0
      %v4327 = vadd.f32 0.0, %v4326
      %4328 = vmatmul.f32.gmra.mxu0 %v4214
      %v4329 = vpop.f32.mrf.mxu0
      %v4330 = vadd.f32 0.0, %v4329
      %4331 = vdwg.mxu0
      %v4332 = vadd.f32 %v3975, %v4237
      %v4333 = vadd.f32 %v3978, %v4240
      %v4334 = vadd.f32 %v3981, %v4243
      %v4335 = vadd.f32 %v3984, %v4246
      %v4336 = vadd.f32 %v3987, %v4249
      %v4337 = vadd.f32 %v3990, %v4252
      %v4338 = vadd.f32 %v3993, %v4255
      %v4339 = vadd.f32 %v3996, %v4258
      %v4340 = vadd.f32 %v3999, %v4261
      %v4341 = vadd.f32 %v4002, %v4264
      %v4342 = vadd.f32 %v4005, %v4267
      %v4343 = vadd.f32 %v4008, %v4270
      %v4344 = vadd.f32 %v4011, %v4273
      %v4345 = vadd.f32 %v4014, %v4276
      %v4346 = vadd.f32 %v4017, %v4279
      %v4347 = vadd.f32 %v4020, %v4282
      %v4348 = vadd.f32 %v4023, %v4285
      %v4349 = vadd.f32 %v4026, %v4288
      %v4350 = vadd.f32 %v4029, %v4291
      %v4351 = vadd.f32 %v4032, %v4294
      %v4352 = vadd.f32 %v4035, %v4297
      %v4353 = vadd.f32 %v4038, %v4300
      %v4354 = vadd.f32 %v4041, %v4303
      %v4355 = vadd.f32 %v4044, %v4306
      %v4356 = vadd.f32 %v4047, %v4309
      %v4357 = vadd.f32 %v4050, %v4312
      %v4358 = vadd.f32 %v4053, %v4315
      %v4359 = vadd.f32 %v4056, %v4318
      %v4360 = vadd.f32 %v4059, %v4321
      %v4361 = vadd.f32 %v4062, %v4324
      %v4362 = vadd.f32 %v4065, %v4327
      %v4363 = vadd.f32 %v4068, %v4330
      %s4364 = scalar_lea.vmem %s4, 12
      %v4365 = vld [vmem:[%s4364] sm:$0xf]
      %v4367 = vsel %vm534, %v3573, 0
      %v4370 = vsel %vm534, %v3574, 0
      %v4373 = vsel %vm643, %v4365, 0
      %4375 = vmatpush.msra.mxu0 0.0
      %4376 = vmatpush.msra.mxu0 0.0
      %4377 = vmatpush.msra.mxu0 0.0
      %4378 = vmatpush.msra.mxu0 0.0
      %4379 = vmatpush.msra.mxu0 0.0
      %4380 = vmatpush.msra.mxu0 0.0
      %4381 = vmatpush.msra.mxu0 0.0
      %4382 = vmatpush.msra.mxu0 0.0
      %4383 = vmatpush.msra.mxu0 0.0
      %4384 = vmatpush.msra.mxu0 0.0
      %4385 = vmatpush.msra.mxu0 0.0
      %4386 = vmatpush.msra.mxu0 0.0
      %4387 = vmatpush.msra.mxu0 0.0
      %4388 = vmatpush.msra.mxu0 0.0
      %4389 = vmatpush.msra.mxu0 0.0
      %4390 = vmatpush.msra.mxu0 %v4373
      %4391 = vmatmul.f32.gmra.mxu0 %v3894
      %v4392 = vpop.f32.mrf.mxu0
      %v4393 = vadd.f32 0.0, %v4392
      %4394 = vmatmul.f32.gmra.mxu0 %v3896
      %v4395 = vpop.f32.mrf.mxu0
      %v4396 = vadd.f32 0.0, %v4395
      %4397 = vmatmul.f32.gmra.mxu0 %v3898
      %v4398 = vpop.f32.mrf.mxu0
      %v4399 = vadd.f32 0.0, %v4398
      %4400 = vmatmul.f32.gmra.mxu0 %v3900
      %v4401 = vpop.f32.mrf.mxu0
      %v4402 = vadd.f32 0.0, %v4401
      %4403 = vmatmul.f32.gmra.mxu0 %v3902
      %v4404 = vpop.f32.mrf.mxu0
      %v4405 = vadd.f32 0.0, %v4404
      %4406 = vmatmul.f32.gmra.mxu0 %v3904
      %v4407 = vpop.f32.mrf.mxu0
      %v4408 = vadd.f32 0.0, %v4407
      %4409 = vmatmul.f32.gmra.mxu0 %v3906
      %v4410 = vpop.f32.mrf.mxu0
      %v4411 = vadd.f32 0.0, %v4410
      %4412 = vmatmul.f32.gmra.mxu0 %v3908
      %v4413 = vpop.f32.mrf.mxu0
      %v4414 = vadd.f32 0.0, %v4413
      %4415 = vmatmul.f32.gmra.mxu0 %v3910
      %v4416 = vpop.f32.mrf.mxu0
      %v4417 = vadd.f32 0.0, %v4416
      %4418 = vmatmul.f32.gmra.mxu0 %v3912
      %v4419 = vpop.f32.mrf.mxu0
      %v4420 = vadd.f32 0.0, %v4419
      %4421 = vmatmul.f32.gmra.mxu0 %v3914
      %v4422 = vpop.f32.mrf.mxu0
      %v4423 = vadd.f32 0.0, %v4422
      %4424 = vmatmul.f32.gmra.mxu0 %v3916
      %v4425 = vpop.f32.mrf.mxu0
      %v4426 = vadd.f32 0.0, %v4425
      %4427 = vmatmul.f32.gmra.mxu0 %v3918
      %v4428 = vpop.f32.mrf.mxu0
      %v4429 = vadd.f32 0.0, %v4428
      %4430 = vmatmul.f32.gmra.mxu0 %v3920
      %v4431 = vpop.f32.mrf.mxu0
      %v4432 = vadd.f32 0.0, %v4431
      %4433 = vmatmul.f32.gmra.mxu0 %v3922
      %v4434 = vpop.f32.mrf.mxu0
      %v4435 = vadd.f32 0.0, %v4434
      %4436 = vmatmul.f32.gmra.mxu0 %v3924
      %v4437 = vpop.f32.mrf.mxu0
      %v4438 = vadd.f32 0.0, %v4437
      %4439 = vmatmul.f32.gmra.mxu0 %v3926
      %v4440 = vpop.f32.mrf.mxu0
      %v4441 = vadd.f32 0.0, %v4440
      %4442 = vmatmul.f32.gmra.mxu0 %v3928
      %v4443 = vpop.f32.mrf.mxu0
      %v4444 = vadd.f32 0.0, %v4443
      %4445 = vmatmul.f32.gmra.mxu0 %v3930
      %v4446 = vpop.f32.mrf.mxu0
      %v4447 = vadd.f32 0.0, %v4446
      %4448 = vmatmul.f32.gmra.mxu0 %v3932
      %v4449 = vpop.f32.mrf.mxu0
      %v4450 = vadd.f32 0.0, %v4449
      %4451 = vmatmul.f32.gmra.mxu0 %v3934
      %v4452 = vpop.f32.mrf.mxu0
      %v4453 = vadd.f32 0.0, %v4452
      %4454 = vmatmul.f32.gmra.mxu0 %v3936
      %v4455 = vpop.f32.mrf.mxu0
      %v4456 = vadd.f32 0.0, %v4455
      %4457 = vmatmul.f32.gmra.mxu0 %v3938
      %v4458 = vpop.f32.mrf.mxu0
      %v4459 = vadd.f32 0.0, %v4458
      %4460 = vmatmul.f32.gmra.mxu0 %v3940
      %v4461 = vpop.f32.mrf.mxu0
      %v4462 = vadd.f32 0.0, %v4461
      %4463 = vmatmul.f32.gmra.mxu0 %v3942
      %v4464 = vpop.f32.mrf.mxu0
      %v4465 = vadd.f32 0.0, %v4464
      %4466 = vmatmul.f32.gmra.mxu0 %v3944
      %v4467 = vpop.f32.mrf.mxu0
      %v4468 = vadd.f32 0.0, %v4467
      %4469 = vmatmul.f32.gmra.mxu0 %v3946
      %v4470 = vpop.f32.mrf.mxu0
      %v4471 = vadd.f32 0.0, %v4470
      %4472 = vmatmul.f32.gmra.mxu0 %v3948
      %v4473 = vpop.f32.mrf.mxu0
      %v4474 = vadd.f32 0.0, %v4473
      %4475 = vmatmul.f32.gmra.mxu0 %v3950
      %v4476 = vpop.f32.mrf.mxu0
      %v4477 = vadd.f32 0.0, %v4476
      %4478 = vmatmul.f32.gmra.mxu0 %v3952
      %v4479 = vpop.f32.mrf.mxu0
      %v4480 = vadd.f32 0.0, %v4479
      %4481 = vmatmul.f32.gmra.mxu0 %v4367
      %v4482 = vpop.f32.mrf.mxu0
      %v4483 = vadd.f32 0.0, %v4482
      %4484 = vmatmul.f32.gmra.mxu0 %v4370
      %v4485 = vpop.f32.mrf.mxu0
      %v4486 = vadd.f32 0.0, %v4485
      %4487 = vdwg.mxu0
      %v4488 = vadd.f32 %v4332, %v4393
      %v4489 = vadd.f32 %v4333, %v4396
      %v4490 = vadd.f32 %v4334, %v4399
      %v4491 = vadd.f32 %v4335, %v4402
      %v4492 = vadd.f32 %v4336, %v4405
      %v4493 = vadd.f32 %v4337, %v4408
      %v4494 = vadd.f32 %v4338, %v4411
      %v4495 = vadd.f32 %v4339, %v4414
      %v4496 = vadd.f32 %v4340, %v4417
      %v4497 = vadd.f32 %v4341, %v4420
      %v4498 = vadd.f32 %v4342, %v4423
      %v4499 = vadd.f32 %v4343, %v4426
      %v4500 = vadd.f32 %v4344, %v4429
      %v4501 = vadd.f32 %v4345, %v4432
      %v4502 = vadd.f32 %v4346, %v4435
      %v4503 = vadd.f32 %v4347, %v4438
      %v4504 = vadd.f32 %v4348, %v4441
      %v4505 = vadd.f32 %v4349, %v4444
      %v4506 = vadd.f32 %v4350, %v4447
      %v4507 = vadd.f32 %v4351, %v4450
      %v4508 = vadd.f32 %v4352, %v4453
      %v4509 = vadd.f32 %v4353, %v4456
      %v4510 = vadd.f32 %v4354, %v4459
      %v4511 = vadd.f32 %v4355, %v4462
      %v4512 = vadd.f32 %v4356, %v4465
      %v4513 = vadd.f32 %v4357, %v4468
      %v4514 = vadd.f32 %v4358, %v4471
      %v4515 = vadd.f32 %v4359, %v4474
      %v4516 = vadd.f32 %v4360, %v4477
      %v4517 = vadd.f32 %v4361, %v4480
      %v4518 = vadd.f32 %v4362, %v4483
      %v4519 = vadd.f32 %v4363, %v4486
      %v4521 = vrot.slane %v3573, 1
      %v4522 = vrot.slane %v3574, 1
      %v4523 = vsel %vm405, %v4521, %v4522
      %v4524 = vrot.slane %v3575, 1
      %v4525 = vsel %vm405, %v4522, %v4524
      %s4526 = scalar_lea.vmem %s4, 16
      %v4527 = vld [vmem:[%s4526] sm:$0xf]
      %v4528 = vsel %vm534, %v4523, 0
      %v4530 = vsel %vm534, %v4525, 0
      %v4533 = vsel %vm643, %v4527, 0
      %4535 = vmatpush.msra.mxu0 0.0
      %4536 = vmatpush.msra.mxu0 0.0
      %4537 = vmatpush.msra.mxu0 0.0
      %4538 = vmatpush.msra.mxu0 0.0
      %4539 = vmatpush.msra.mxu0 0.0
      %4540 = vmatpush.msra.mxu0 0.0
      %4541 = vmatpush.msra.mxu0 0.0
      %4542 = vmatpush.msra.mxu0 0.0
      %4543 = vmatpush.msra.mxu0 0.0
      %4544 = vmatpush.msra.mxu0 0.0
      %4545 = vmatpush.msra.mxu0 0.0
      %4546 = vmatpush.msra.mxu0 0.0
      %4547 = vmatpush.msra.mxu0 0.0
      %4548 = vmatpush.msra.mxu0 0.0
      %4549 = vmatpush.msra.mxu0 0.0
      %4550 = vmatpush.msra.mxu0 %v4533
      %4551 = vmatmul.f32.gmra.mxu0 %v3714
      %v4552 = vpop.f32.mrf.mxu0
      %v4553 = vadd.f32 0.0, %v4552
      %4554 = vmatmul.f32.gmra.mxu0 %v3716
      %v4555 = vpop.f32.mrf.mxu0
      %v4556 = vadd.f32 0.0, %v4555
      %4557 = vmatmul.f32.gmra.mxu0 %v3718
      %v4558 = vpop.f32.mrf.mxu0
      %v4559 = vadd.f32 0.0, %v4558
      %4560 = vmatmul.f32.gmra.mxu0 %v3720
      %v4561 = vpop.f32.mrf.mxu0
      %v4562 = vadd.f32 0.0, %v4561
      %4563 = vmatmul.f32.gmra.mxu0 %v3722
      %v4564 = vpop.f32.mrf.mxu0
      %v4565 = vadd.f32 0.0, %v4564
      %4566 = vmatmul.f32.gmra.mxu0 %v3724
      %v4567 = vpop.f32.mrf.mxu0
      %v4568 = vadd.f32 0.0, %v4567
      %4569 = vmatmul.f32.gmra.mxu0 %v3726
      %v4570 = vpop.f32.mrf.mxu0
      %v4571 = vadd.f32 0.0, %v4570
      %4572 = vmatmul.f32.gmra.mxu0 %v3728
      %v4573 = vpop.f32.mrf.mxu0
      %v4574 = vadd.f32 0.0, %v4573
      %4575 = vmatmul.f32.gmra.mxu0 %v3730
      %v4576 = vpop.f32.mrf.mxu0
      %v4577 = vadd.f32 0.0, %v4576
      %4578 = vmatmul.f32.gmra.mxu0 %v3732
      %v4579 = vpop.f32.mrf.mxu0
      %v4580 = vadd.f32 0.0, %v4579
      %4581 = vmatmul.f32.gmra.mxu0 %v3734
      %v4582 = vpop.f32.mrf.mxu0
      %v4583 = vadd.f32 0.0, %v4582
      %4584 = vmatmul.f32.gmra.mxu0 %v3736
      %v4585 = vpop.f32.mrf.mxu0
      %v4586 = vadd.f32 0.0, %v4585
      %4587 = vmatmul.f32.gmra.mxu0 %v3738
      %v4588 = vpop.f32.mrf.mxu0
      %v4589 = vadd.f32 0.0, %v4588
      %4590 = vmatmul.f32.gmra.mxu0 %v3740
      %v4591 = vpop.f32.mrf.mxu0
      %v4592 = vadd.f32 0.0, %v4591
      %4593 = vmatmul.f32.gmra.mxu0 %v3742
      %v4594 = vpop.f32.mrf.mxu0
      %v4595 = vadd.f32 0.0, %v4594
      %4596 = vmatmul.f32.gmra.mxu0 %v3744
      %v4597 = vpop.f32.mrf.mxu0
      %v4598 = vadd.f32 0.0, %v4597
      %4599 = vmatmul.f32.gmra.mxu0 %v3746
      %v4600 = vpop.f32.mrf.mxu0
      %v4601 = vadd.f32 0.0, %v4600
      %4602 = vmatmul.f32.gmra.mxu0 %v3748
      %v4603 = vpop.f32.mrf.mxu0
      %v4604 = vadd.f32 0.0, %v4603
      %4605 = vmatmul.f32.gmra.mxu0 %v3750
      %v4606 = vpop.f32.mrf.mxu0
      %v4607 = vadd.f32 0.0, %v4606
      %4608 = vmatmul.f32.gmra.mxu0 %v3752
      %v4609 = vpop.f32.mrf.mxu0
      %v4610 = vadd.f32 0.0, %v4609
      %4611 = vmatmul.f32.gmra.mxu0 %v3754
      %v4612 = vpop.f32.mrf.mxu0
      %v4613 = vadd.f32 0.0, %v4612
      %4614 = vmatmul.f32.gmra.mxu0 %v3756
      %v4615 = vpop.f32.mrf.mxu0
      %v4616 = vadd.f32 0.0, %v4615
      %4617 = vmatmul.f32.gmra.mxu0 %v3758
      %v4618 = vpop.f32.mrf.mxu0
      %v4619 = vadd.f32 0.0, %v4618
      %4620 = vmatmul.f32.gmra.mxu0 %v3760
      %v4621 = vpop.f32.mrf.mxu0
      %v4622 = vadd.f32 0.0, %v4621
      %4623 = vmatmul.f32.gmra.mxu0 %v3762
      %v4624 = vpop.f32.mrf.mxu0
      %v4625 = vadd.f32 0.0, %v4624
      %4626 = vmatmul.f32.gmra.mxu0 %v3764
      %v4627 = vpop.f32.mrf.mxu0
      %v4628 = vadd.f32 0.0, %v4627
      %4629 = vmatmul.f32.gmra.mxu0 %v3766
      %v4630 = vpop.f32.mrf.mxu0
      %v4631 = vadd.f32 0.0, %v4630
      %4632 = vmatmul.f32.gmra.mxu0 %v3768
      %v4633 = vpop.f32.mrf.mxu0
      %v4634 = vadd.f32 0.0, %v4633
      %4635 = vmatmul.f32.gmra.mxu0 %v3770
      %v4636 = vpop.f32.mrf.mxu0
      %v4637 = vadd.f32 0.0, %v4636
      %4638 = vmatmul.f32.gmra.mxu0 %v3772
      %v4639 = vpop.f32.mrf.mxu0
      %v4640 = vadd.f32 0.0, %v4639
      %4641 = vmatmul.f32.gmra.mxu0 %v4528
      %v4642 = vpop.f32.mrf.mxu0
      %v4643 = vadd.f32 0.0, %v4642
      %4644 = vmatmul.f32.gmra.mxu0 %v4530
      %v4645 = vpop.f32.mrf.mxu0
      %v4646 = vadd.f32 0.0, %v4645
      %4647 = vdwg.mxu0
      %v4648 = vadd.f32 %v4488, %v4553
      %v4649 = vadd.f32 %v4489, %v4556
      %v4650 = vadd.f32 %v4490, %v4559
      %v4651 = vadd.f32 %v4491, %v4562
      %v4652 = vadd.f32 %v4492, %v4565
      %v4653 = vadd.f32 %v4493, %v4568
      %v4654 = vadd.f32 %v4494, %v4571
      %v4655 = vadd.f32 %v4495, %v4574
      %v4656 = vadd.f32 %v4496, %v4577
      %v4657 = vadd.f32 %v4497, %v4580
      %v4658 = vadd.f32 %v4498, %v4583
      %v4659 = vadd.f32 %v4499, %v4586
      %v4660 = vadd.f32 %v4500, %v4589
      %v4661 = vadd.f32 %v4501, %v4592
      %v4662 = vadd.f32 %v4502, %v4595
      %v4663 = vadd.f32 %v4503, %v4598
      %v4664 = vadd.f32 %v4504, %v4601
      %v4665 = vadd.f32 %v4505, %v4604
      %v4666 = vadd.f32 %v4506, %v4607
      %v4667 = vadd.f32 %v4507, %v4610
      %v4668 = vadd.f32 %v4508, %v4613
      %v4669 = vadd.f32 %v4509, %v4616
      %v4670 = vadd.f32 %v4510, %v4619
      %v4671 = vadd.f32 %v4511, %v4622
      %v4672 = vadd.f32 %v4512, %v4625
      %v4673 = vadd.f32 %v4513, %v4628
      %v4674 = vadd.f32 %v4514, %v4631
      %v4675 = vadd.f32 %v4515, %v4634
      %v4676 = vadd.f32 %v4516, %v4637
      %v4677 = vadd.f32 %v4517, %v4640
      %v4678 = vadd.f32 %v4518, %v4643
      %v4679 = vadd.f32 %v4519, %v4646
      %v4680 = vrot.slane %v3573, 2
      %v4681 = vrot.slane %v3574, 2
      %v4682 = vsel %vm1116, %v4680, %v4681
      %v4683 = vrot.slane %v3575, 2
      %v4684 = vsel %vm1116, %v4681, %v4683
      %s4685 = scalar_lea.vmem %s4, 20
      %v4686 = vld [vmem:[%s4685] sm:$0xf]
      %v4687 = vsel %vm534, %v4682, 0
      %v4689 = vsel %vm534, %v4684, 0
      %v4692 = vsel %vm643, %v4686, 0
      %4694 = vmatpush.msra.mxu0 0.0
      %4695 = vmatpush.msra.mxu0 0.0
      %4696 = vmatpush.msra.mxu0 0.0
      %4697 = vmatpush.msra.mxu0 0.0
      %4698 = vmatpush.msra.mxu0 0.0
      %4699 = vmatpush.msra.mxu0 0.0
      %4700 = vmatpush.msra.mxu0 0.0
      %4701 = vmatpush.msra.mxu0 0.0
      %4702 = vmatpush.msra.mxu0 0.0
      %4703 = vmatpush.msra.mxu0 0.0
      %4704 = vmatpush.msra.mxu0 0.0
      %4705 = vmatpush.msra.mxu0 0.0
      %4706 = vmatpush.msra.mxu0 0.0
      %4707 = vmatpush.msra.mxu0 0.0
      %4708 = vmatpush.msra.mxu0 0.0
      %4709 = vmatpush.msra.mxu0 %v4692
      %4710 = vmatmul.f32.gmra.mxu0 %v4156
      %v4711 = vpop.f32.mrf.mxu0
      %v4712 = vadd.f32 0.0, %v4711
      %4713 = vmatmul.f32.gmra.mxu0 %v4158
      %v4714 = vpop.f32.mrf.mxu0
      %v4715 = vadd.f32 0.0, %v4714
      %4716 = vmatmul.f32.gmra.mxu0 %v4160
      %v4717 = vpop.f32.mrf.mxu0
      %v4718 = vadd.f32 0.0, %v4717
      %4719 = vmatmul.f32.gmra.mxu0 %v4162
      %v4720 = vpop.f32.mrf.mxu0
      %v4721 = vadd.f32 0.0, %v4720
      %4722 = vmatmul.f32.gmra.mxu0 %v4164
      %v4723 = vpop.f32.mrf.mxu0
      %v4724 = vadd.f32 0.0, %v4723
      %4725 = vmatmul.f32.gmra.mxu0 %v4166
      %v4726 = vpop.f32.mrf.mxu0
      %v4727 = vadd.f32 0.0, %v4726
      %4728 = vmatmul.f32.gmra.mxu0 %v4168
      %v4729 = vpop.f32.mrf.mxu0
      %v4730 = vadd.f32 0.0, %v4729
      %4731 = vmatmul.f32.gmra.mxu0 %v4170
      %v4732 = vpop.f32.mrf.mxu0
      %v4733 = vadd.f32 0.0, %v4732
      %4734 = vmatmul.f32.gmra.mxu0 %v4172
      %v4735 = vpop.f32.mrf.mxu0
      %v4736 = vadd.f32 0.0, %v4735
      %4737 = vmatmul.f32.gmra.mxu0 %v4174
      %v4738 = vpop.f32.mrf.mxu0
      %v4739 = vadd.f32 0.0, %v4738
      %4740 = vmatmul.f32.gmra.mxu0 %v4176
      %v4741 = vpop.f32.mrf.mxu0
      %v4742 = vadd.f32 0.0, %v4741
      %4743 = vmatmul.f32.gmra.mxu0 %v4178
      %v4744 = vpop.f32.mrf.mxu0
      %v4745 = vadd.f32 0.0, %v4744
      %4746 = vmatmul.f32.gmra.mxu0 %v4180
      %v4747 = vpop.f32.mrf.mxu0
      %v4748 = vadd.f32 0.0, %v4747
      %4749 = vmatmul.f32.gmra.mxu0 %v4182
      %v4750 = vpop.f32.mrf.mxu0
      %v4751 = vadd.f32 0.0, %v4750
      %4752 = vmatmul.f32.gmra.mxu0 %v4184
      %v4753 = vpop.f32.mrf.mxu0
      %v4754 = vadd.f32 0.0, %v4753
      %4755 = vmatmul.f32.gmra.mxu0 %v4186
      %v4756 = vpop.f32.mrf.mxu0
      %v4757 = vadd.f32 0.0, %v4756
      %4758 = vmatmul.f32.gmra.mxu0 %v4188
      %v4759 = vpop.f32.mrf.mxu0
      %v4760 = vadd.f32 0.0, %v4759
      %4761 = vmatmul.f32.gmra.mxu0 %v4190
      %v4762 = vpop.f32.mrf.mxu0
      %v4763 = vadd.f32 0.0, %v4762
      %4764 = vmatmul.f32.gmra.mxu0 %v4192
      %v4765 = vpop.f32.mrf.mxu0
      %v4766 = vadd.f32 0.0, %v4765
      %4767 = vmatmul.f32.gmra.mxu0 %v4194
      %v4768 = vpop.f32.mrf.mxu0
      %v4769 = vadd.f32 0.0, %v4768
      %4770 = vmatmul.f32.gmra.mxu0 %v4196
      %v4771 = vpop.f32.mrf.mxu0
      %v4772 = vadd.f32 0.0, %v4771
      %4773 = vmatmul.f32.gmra.mxu0 %v4198
      %v4774 = vpop.f32.mrf.mxu0
      %v4775 = vadd.f32 0.0, %v4774
      %4776 = vmatmul.f32.gmra.mxu0 %v4200
      %v4777 = vpop.f32.mrf.mxu0
      %v4778 = vadd.f32 0.0, %v4777
      %4779 = vmatmul.f32.gmra.mxu0 %v4202
      %v4780 = vpop.f32.mrf.mxu0
      %v4781 = vadd.f32 0.0, %v4780
      %4782 = vmatmul.f32.gmra.mxu0 %v4204
      %v4783 = vpop.f32.mrf.mxu0
      %v4784 = vadd.f32 0.0, %v4783
      %4785 = vmatmul.f32.gmra.mxu0 %v4206
      %v4786 = vpop.f32.mrf.mxu0
      %v4787 = vadd.f32 0.0, %v4786
      %4788 = vmatmul.f32.gmra.mxu0 %v4208
      %v4789 = vpop.f32.mrf.mxu0
      %v4790 = vadd.f32 0.0, %v4789
      %4791 = vmatmul.f32.gmra.mxu0 %v4210
      %v4792 = vpop.f32.mrf.mxu0
      %v4793 = vadd.f32 0.0, %v4792
      %4794 = vmatmul.f32.gmra.mxu0 %v4212
      %v4795 = vpop.f32.mrf.mxu0
      %v4796 = vadd.f32 0.0, %v4795
      %4797 = vmatmul.f32.gmra.mxu0 %v4214
      %v4798 = vpop.f32.mrf.mxu0
      %v4799 = vadd.f32 0.0, %v4798
      %4800 = vmatmul.f32.gmra.mxu0 %v4687
      %v4801 = vpop.f32.mrf.mxu0
      %v4802 = vadd.f32 0.0, %v4801
      %4803 = vmatmul.f32.gmra.mxu0 %v4689
      %v4804 = vpop.f32.mrf.mxu0
      %v4805 = vadd.f32 0.0, %v4804
      %4806 = vdwg.mxu0
      %v4807 = vadd.f32 %v4648, %v4712
      %v4808 = vadd.f32 %v4649, %v4715
      %v4809 = vadd.f32 %v4650, %v4718
      %v4810 = vadd.f32 %v4651, %v4721
      %v4811 = vadd.f32 %v4652, %v4724
      %v4812 = vadd.f32 %v4653, %v4727
      %v4813 = vadd.f32 %v4654, %v4730
      %v4814 = vadd.f32 %v4655, %v4733
      %v4815 = vadd.f32 %v4656, %v4736
      %v4816 = vadd.f32 %v4657, %v4739
      %v4817 = vadd.f32 %v4658, %v4742
      %v4818 = vadd.f32 %v4659, %v4745
      %v4819 = vadd.f32 %v4660, %v4748
      %v4820 = vadd.f32 %v4661, %v4751
      %v4821 = vadd.f32 %v4662, %v4754
      %v4822 = vadd.f32 %v4663, %v4757
      %v4823 = vadd.f32 %v4664, %v4760
      %v4824 = vadd.f32 %v4665, %v4763
      %v4825 = vadd.f32 %v4666, %v4766
      %v4826 = vadd.f32 %v4667, %v4769
      %v4827 = vadd.f32 %v4668, %v4772
      %v4828 = vadd.f32 %v4669, %v4775
      %v4829 = vadd.f32 %v4670, %v4778
      %v4830 = vadd.f32 %v4671, %v4781
      %v4831 = vadd.f32 %v4672, %v4784
      %v4832 = vadd.f32 %v4673, %v4787
      %v4833 = vadd.f32 %v4674, %v4790
      %v4834 = vadd.f32 %v4675, %v4793
      %v4835 = vadd.f32 %v4676, %v4796
      %v4836 = vadd.f32 %v4677, %v4799
      %v4837 = vadd.f32 %v4678, %v4802
      %v4838 = vadd.f32 %v4679, %v4805
      %s4839 = scalar_lea.vmem %s4, 24
      %v4840 = vld [vmem:[%s4839] sm:$0xf]
      %v4842 = vsel %vm534, %v3576, 0
      %v4845 = vsel %vm534, %v3577, 0
      %v4848 = vsel %vm643, %v4840, 0
      %4850 = vmatpush.msra.mxu0 0.0
      %4851 = vmatpush.msra.mxu0 0.0
      %4852 = vmatpush.msra.mxu0 0.0
      %4853 = vmatpush.msra.mxu0 0.0
      %4854 = vmatpush.msra.mxu0 0.0
      %4855 = vmatpush.msra.mxu0 0.0
      %4856 = vmatpush.msra.mxu0 0.0
      %4857 = vmatpush.msra.mxu0 0.0
      %4858 = vmatpush.msra.mxu0 0.0
      %4859 = vmatpush.msra.mxu0 0.0
      %4860 = vmatpush.msra.mxu0 0.0
      %4861 = vmatpush.msra.mxu0 0.0
      %4862 = vmatpush.msra.mxu0 0.0
      %4863 = vmatpush.msra.mxu0 0.0
      %4864 = vmatpush.msra.mxu0 0.0
      %4865 = vmatpush.msra.mxu0 %v4848
      %4866 = vmatmul.f32.gmra.mxu0 %v3898
      %v4867 = vpop.f32.mrf.mxu0
      %v4868 = vadd.f32 0.0, %v4867
      %4869 = vmatmul.f32.gmra.mxu0 %v3900
      %v4870 = vpop.f32.mrf.mxu0
      %v4871 = vadd.f32 0.0, %v4870
      %4872 = vmatmul.f32.gmra.mxu0 %v3902
      %v4873 = vpop.f32.mrf.mxu0
      %v4874 = vadd.f32 0.0, %v4873
      %4875 = vmatmul.f32.gmra.mxu0 %v3904
      %v4876 = vpop.f32.mrf.mxu0
      %v4877 = vadd.f32 0.0, %v4876
      %4878 = vmatmul.f32.gmra.mxu0 %v3906
      %v4879 = vpop.f32.mrf.mxu0
      %v4880 = vadd.f32 0.0, %v4879
      %4881 = vmatmul.f32.gmra.mxu0 %v3908
      %v4882 = vpop.f32.mrf.mxu0
      %v4883 = vadd.f32 0.0, %v4882
      %4884 = vmatmul.f32.gmra.mxu0 %v3910
      %v4885 = vpop.f32.mrf.mxu0
      %v4886 = vadd.f32 0.0, %v4885
      %4887 = vmatmul.f32.gmra.mxu0 %v3912
      %v4888 = vpop.f32.mrf.mxu0
      %v4889 = vadd.f32 0.0, %v4888
      %4890 = vmatmul.f32.gmra.mxu0 %v3914
      %v4891 = vpop.f32.mrf.mxu0
      %v4892 = vadd.f32 0.0, %v4891
      %4893 = vmatmul.f32.gmra.mxu0 %v3916
      %v4894 = vpop.f32.mrf.mxu0
      %v4895 = vadd.f32 0.0, %v4894
      %4896 = vmatmul.f32.gmra.mxu0 %v3918
      %v4897 = vpop.f32.mrf.mxu0
      %v4898 = vadd.f32 0.0, %v4897
      %4899 = vmatmul.f32.gmra.mxu0 %v3920
      %v4900 = vpop.f32.mrf.mxu0
      %v4901 = vadd.f32 0.0, %v4900
      %4902 = vmatmul.f32.gmra.mxu0 %v3922
      %v4903 = vpop.f32.mrf.mxu0
      %v4904 = vadd.f32 0.0, %v4903
      %4905 = vmatmul.f32.gmra.mxu0 %v3924
      %v4906 = vpop.f32.mrf.mxu0
      %v4907 = vadd.f32 0.0, %v4906
      %4908 = vmatmul.f32.gmra.mxu0 %v3926
      %v4909 = vpop.f32.mrf.mxu0
      %v4910 = vadd.f32 0.0, %v4909
      %4911 = vmatmul.f32.gmra.mxu0 %v3928
      %v4912 = vpop.f32.mrf.mxu0
      %v4913 = vadd.f32 0.0, %v4912
      %4914 = vmatmul.f32.gmra.mxu0 %v3930
      %v4915 = vpop.f32.mrf.mxu0
      %v4916 = vadd.f32 0.0, %v4915
      %4917 = vmatmul.f32.gmra.mxu0 %v3932
      %v4918 = vpop.f32.mrf.mxu0
      %v4919 = vadd.f32 0.0, %v4918
      %4920 = vmatmul.f32.gmra.mxu0 %v3934
      %v4921 = vpop.f32.mrf.mxu0
      %v4922 = vadd.f32 0.0, %v4921
      %4923 = vmatmul.f32.gmra.mxu0 %v3936
      %v4924 = vpop.f32.mrf.mxu0
      %v4925 = vadd.f32 0.0, %v4924
      %4926 = vmatmul.f32.gmra.mxu0 %v3938
      %v4927 = vpop.f32.mrf.mxu0
      %v4928 = vadd.f32 0.0, %v4927
      %4929 = vmatmul.f32.gmra.mxu0 %v3940
      %v4930 = vpop.f32.mrf.mxu0
      %v4931 = vadd.f32 0.0, %v4930
      %4932 = vmatmul.f32.gmra.mxu0 %v3942
      %v4933 = vpop.f32.mrf.mxu0
      %v4934 = vadd.f32 0.0, %v4933
      %4935 = vmatmul.f32.gmra.mxu0 %v3944
      %v4936 = vpop.f32.mrf.mxu0
      %v4937 = vadd.f32 0.0, %v4936
      %4938 = vmatmul.f32.gmra.mxu0 %v3946
      %v4939 = vpop.f32.mrf.mxu0
      %v4940 = vadd.f32 0.0, %v4939
      %4941 = vmatmul.f32.gmra.mxu0 %v3948
      %v4942 = vpop.f32.mrf.mxu0
      %v4943 = vadd.f32 0.0, %v4942
      %4944 = vmatmul.f32.gmra.mxu0 %v3950
      %v4945 = vpop.f32.mrf.mxu0
      %v4946 = vadd.f32 0.0, %v4945
      %4947 = vmatmul.f32.gmra.mxu0 %v3952
      %v4948 = vpop.f32.mrf.mxu0
      %v4949 = vadd.f32 0.0, %v4948
      %4950 = vmatmul.f32.gmra.mxu0 %v4367
      %v4951 = vpop.f32.mrf.mxu0
      %v4952 = vadd.f32 0.0, %v4951
      %4953 = vmatmul.f32.gmra.mxu0 %v4370
      %v4954 = vpop.f32.mrf.mxu0
      %v4955 = vadd.f32 0.0, %v4954
      %4956 = vmatmul.f32.gmra.mxu0 %v4842
      %v4957 = vpop.f32.mrf.mxu0
      %v4958 = vadd.f32 0.0, %v4957
      %4959 = vmatmul.f32.gmra.mxu0 %v4845
      %v4960 = vpop.f32.mrf.mxu0
      %v4961 = vadd.f32 0.0, %v4960
      %4962 = vdwg.mxu0
      %v4963 = vadd.f32 %v4807, %v4868
      %v4964 = vadd.f32 %v4808, %v4871
      %v4965 = vadd.f32 %v4809, %v4874
      %v4966 = vadd.f32 %v4810, %v4877
      %v4967 = vadd.f32 %v4811, %v4880
      %v4968 = vadd.f32 %v4812, %v4883
      %v4969 = vadd.f32 %v4813, %v4886
      %v4970 = vadd.f32 %v4814, %v4889
      %v4971 = vadd.f32 %v4815, %v4892
      %v4972 = vadd.f32 %v4816, %v4895
      %v4973 = vadd.f32 %v4817, %v4898
      %v4974 = vadd.f32 %v4818, %v4901
      %v4975 = vadd.f32 %v4819, %v4904
      %v4976 = vadd.f32 %v4820, %v4907
      %v4977 = vadd.f32 %v4821, %v4910
      %v4978 = vadd.f32 %v4822, %v4913
      %v4979 = vadd.f32 %v4823, %v4916
      %v4980 = vadd.f32 %v4824, %v4919
      %v4981 = vadd.f32 %v4825, %v4922
      %v4982 = vadd.f32 %v4826, %v4925
      %v4983 = vadd.f32 %v4827, %v4928
      %v4984 = vadd.f32 %v4828, %v4931
      %v4985 = vadd.f32 %v4829, %v4934
      %v4986 = vadd.f32 %v4830, %v4937
      %v4987 = vadd.f32 %v4831, %v4940
      %v4988 = vadd.f32 %v4832, %v4943
      %v4989 = vadd.f32 %v4833, %v4946
      %v4990 = vadd.f32 %v4834, %v4949
      %v4991 = vadd.f32 %v4835, %v4952
      %v4992 = vadd.f32 %v4836, %v4955
      %v4993 = vadd.f32 %v4837, %v4958
      %v4994 = vadd.f32 %v4838, %v4961
      %v4996 = vrot.slane %v3576, 1
      %v4997 = vrot.slane %v3577, 1
      %v4998 = vsel %vm405, %v4996, %v4997
      %v4999 = vrot.slane %v3578, 1
      %v5000 = vsel %vm405, %v4997, %v4999
      %s5001 = scalar_lea.vmem %s4, 28
      %v5002 = vld [vmem:[%s5001] sm:$0xf]
      %v5003 = vsel %vm534, %v4998, 0
      %v5005 = vsel %vm534, %v5000, 0
      %v5008 = vsel %vm643, %v5002, 0
      %5010 = vmatpush.msra.mxu0 0.0
      %5011 = vmatpush.msra.mxu0 0.0
      %5012 = vmatpush.msra.mxu0 0.0
      %5013 = vmatpush.msra.mxu0 0.0
      %5014 = vmatpush.msra.mxu0 0.0
      %5015 = vmatpush.msra.mxu0 0.0
      %5016 = vmatpush.msra.mxu0 0.0
      %5017 = vmatpush.msra.mxu0 0.0
      %5018 = vmatpush.msra.mxu0 0.0
      %5019 = vmatpush.msra.mxu0 0.0
      %5020 = vmatpush.msra.mxu0 0.0
      %5021 = vmatpush.msra.mxu0 0.0
      %5022 = vmatpush.msra.mxu0 0.0
      %5023 = vmatpush.msra.mxu0 0.0
      %5024 = vmatpush.msra.mxu0 0.0
      %5025 = vmatpush.msra.mxu0 %v5008
      %5026 = vmatmul.f32.gmra.mxu0 %v3718
      %v5027 = vpop.f32.mrf.mxu0
      %v5028 = vadd.f32 0.0, %v5027
      %5029 = vmatmul.f32.gmra.mxu0 %v3720
      %v5030 = vpop.f32.mrf.mxu0
      %v5031 = vadd.f32 0.0, %v5030
      %5032 = vmatmul.f32.gmra.mxu0 %v3722
      %v5033 = vpop.f32.mrf.mxu0
      %v5034 = vadd.f32 0.0, %v5033
      %5035 = vmatmul.f32.gmra.mxu0 %v3724
      %v5036 = vpop.f32.mrf.mxu0
      %v5037 = vadd.f32 0.0, %v5036
      %5038 = vmatmul.f32.gmra.mxu0 %v3726
      %v5039 = vpop.f32.mrf.mxu0
      %v5040 = vadd.f32 0.0, %v5039
      %5041 = vmatmul.f32.gmra.mxu0 %v3728
      %v5042 = vpop.f32.mrf.mxu0
      %v5043 = vadd.f32 0.0, %v5042
      %5044 = vmatmul.f32.gmra.mxu0 %v3730
      %v5045 = vpop.f32.mrf.mxu0
      %v5046 = vadd.f32 0.0, %v5045
      %5047 = vmatmul.f32.gmra.mxu0 %v3732
      %v5048 = vpop.f32.mrf.mxu0
      %v5049 = vadd.f32 0.0, %v5048
      %5050 = vmatmul.f32.gmra.mxu0 %v3734
      %v5051 = vpop.f32.mrf.mxu0
      %v5052 = vadd.f32 0.0, %v5051
      %5053 = vmatmul.f32.gmra.mxu0 %v3736
      %v5054 = vpop.f32.mrf.mxu0
      %v5055 = vadd.f32 0.0, %v5054
      %5056 = vmatmul.f32.gmra.mxu0 %v3738
      %v5057 = vpop.f32.mrf.mxu0
      %v5058 = vadd.f32 0.0, %v5057
      %5059 = vmatmul.f32.gmra.mxu0 %v3740
      %v5060 = vpop.f32.mrf.mxu0
      %v5061 = vadd.f32 0.0, %v5060
      %5062 = vmatmul.f32.gmra.mxu0 %v3742
      %v5063 = vpop.f32.mrf.mxu0
      %v5064 = vadd.f32 0.0, %v5063
      %5065 = vmatmul.f32.gmra.mxu0 %v3744
      %v5066 = vpop.f32.mrf.mxu0
      %v5067 = vadd.f32 0.0, %v5066
      %5068 = vmatmul.f32.gmra.mxu0 %v3746
      %v5069 = vpop.f32.mrf.mxu0
      %v5070 = vadd.f32 0.0, %v5069
      %5071 = vmatmul.f32.gmra.mxu0 %v3748
      %v5072 = vpop.f32.mrf.mxu0
      %v5073 = vadd.f32 0.0, %v5072
      %5074 = vmatmul.f32.gmra.mxu0 %v3750
      %v5075 = vpop.f32.mrf.mxu0
      %v5076 = vadd.f32 0.0, %v5075
      %5077 = vmatmul.f32.gmra.mxu0 %v3752
      %v5078 = vpop.f32.mrf.mxu0
      %v5079 = vadd.f32 0.0, %v5078
      %5080 = vmatmul.f32.gmra.mxu0 %v3754
      %v5081 = vpop.f32.mrf.mxu0
      %v5082 = vadd.f32 0.0, %v5081
      %5083 = vmatmul.f32.gmra.mxu0 %v3756
      %v5084 = vpop.f32.mrf.mxu0
      %v5085 = vadd.f32 0.0, %v5084
      %5086 = vmatmul.f32.gmra.mxu0 %v3758
      %v5087 = vpop.f32.mrf.mxu0
      %v5088 = vadd.f32 0.0, %v5087
      %5089 = vmatmul.f32.gmra.mxu0 %v3760
      %v5090 = vpop.f32.mrf.mxu0
      %v5091 = vadd.f32 0.0, %v5090
      %5092 = vmatmul.f32.gmra.mxu0 %v3762
      %v5093 = vpop.f32.mrf.mxu0
      %v5094 = vadd.f32 0.0, %v5093
      %5095 = vmatmul.f32.gmra.mxu0 %v3764
      %v5096 = vpop.f32.mrf.mxu0
      %v5097 = vadd.f32 0.0, %v5096
      %5098 = vmatmul.f32.gmra.mxu0 %v3766
      %v5099 = vpop.f32.mrf.mxu0
      %v5100 = vadd.f32 0.0, %v5099
      %5101 = vmatmul.f32.gmra.mxu0 %v3768
      %v5102 = vpop.f32.mrf.mxu0
      %v5103 = vadd.f32 0.0, %v5102
      %5104 = vmatmul.f32.gmra.mxu0 %v3770
      %v5105 = vpop.f32.mrf.mxu0
      %v5106 = vadd.f32 0.0, %v5105
      %5107 = vmatmul.f32.gmra.mxu0 %v3772
      %v5108 = vpop.f32.mrf.mxu0
      %v5109 = vadd.f32 0.0, %v5108
      %5110 = vmatmul.f32.gmra.mxu0 %v4528
      %v5111 = vpop.f32.mrf.mxu0
      %v5112 = vadd.f32 0.0, %v5111
      %5113 = vmatmul.f32.gmra.mxu0 %v4530
      %v5114 = vpop.f32.mrf.mxu0
      %v5115 = vadd.f32 0.0, %v5114
      %5116 = vmatmul.f32.gmra.mxu0 %v5003
      %v5117 = vpop.f32.mrf.mxu0
      %v5118 = vadd.f32 0.0, %v5117
      %5119 = vmatmul.f32.gmra.mxu0 %v5005
      %v5120 = vpop.f32.mrf.mxu0
      %v5121 = vadd.f32 0.0, %v5120
      %5122 = vdwg.mxu0
      %v5123 = vadd.f32 %v4963, %v5028
      %v5124 = vadd.f32 %v4964, %v5031
      %v5125 = vadd.f32 %v4965, %v5034
      %v5126 = vadd.f32 %v4966, %v5037
      %v5127 = vadd.f32 %v4967, %v5040
      %v5128 = vadd.f32 %v4968, %v5043
      %v5129 = vadd.f32 %v4969, %v5046
      %v5130 = vadd.f32 %v4970, %v5049
      %v5131 = vadd.f32 %v4971, %v5052
      %v5132 = vadd.f32 %v4972, %v5055
      %v5133 = vadd.f32 %v4973, %v5058
      %v5134 = vadd.f32 %v4974, %v5061
      %v5135 = vadd.f32 %v4975, %v5064
      %v5136 = vadd.f32 %v4976, %v5067
      %v5137 = vadd.f32 %v4977, %v5070
      %v5138 = vadd.f32 %v4978, %v5073
      %v5139 = vadd.f32 %v4979, %v5076
      %v5140 = vadd.f32 %v4980, %v5079
      %v5141 = vadd.f32 %v4981, %v5082
      %v5142 = vadd.f32 %v4982, %v5085
      %v5143 = vadd.f32 %v4983, %v5088
      %v5144 = vadd.f32 %v4984, %v5091
      %v5145 = vadd.f32 %v4985, %v5094
      %v5146 = vadd.f32 %v4986, %v5097
      %v5147 = vadd.f32 %v4987, %v5100
      %v5148 = vadd.f32 %v4988, %v5103
      %v5149 = vadd.f32 %v4989, %v5106
      %v5150 = vadd.f32 %v4990, %v5109
      %v5151 = vadd.f32 %v4991, %v5112
      %v5152 = vadd.f32 %v4992, %v5115
      %v5153 = vadd.f32 %v4993, %v5118
      %v5154 = vadd.f32 %v4994, %v5121
      %v5155 = vrot.slane %v3576, 2
      %v5156 = vrot.slane %v3577, 2
      %v5157 = vsel %vm1116, %v5155, %v5156
      %v5158 = vrot.slane %v3578, 2
      %v5159 = vsel %vm1116, %v5156, %v5158
      %s5160 = scalar_lea.vmem %s4, 32
      %v5161 = vld [vmem:[%s5160] sm:$0xf]
      %v5162 = vsel %vm534, %v5157, 0
      %v5164 = vsel %vm534, %v5159, 0
      %v5167 = vsel %vm643, %v5161, 0
      %5169 = vmatpush.msra.mxu0 0.0
      %5170 = vmatpush.msra.mxu0 0.0
      %5171 = vmatpush.msra.mxu0 0.0
      %5172 = vmatpush.msra.mxu0 0.0
      %5173 = vmatpush.msra.mxu0 0.0
      %5174 = vmatpush.msra.mxu0 0.0
      %5175 = vmatpush.msra.mxu0 0.0
      %5176 = vmatpush.msra.mxu0 0.0
      %5177 = vmatpush.msra.mxu0 0.0
      %5178 = vmatpush.msra.mxu0 0.0
      %5179 = vmatpush.msra.mxu0 0.0
      %5180 = vmatpush.msra.mxu0 0.0
      %5181 = vmatpush.msra.mxu0 0.0
      %5182 = vmatpush.msra.mxu0 0.0
      %5183 = vmatpush.msra.mxu0 0.0
      %5184 = vmatpush.msra.mxu0 %v5167
      %5185 = vmatmul.f32.gmra.mxu0 %v4160
      %v5186 = vpop.f32.mrf.mxu0
      %v5187 = vadd.f32 0.0, %v5186
      %5188 = vmatmul.f32.gmra.mxu0 %v4162
      %v5189 = vpop.f32.mrf.mxu0
      %v5190 = vadd.f32 0.0, %v5189
      %5191 = vmatmul.f32.gmra.mxu0 %v4164
      %v5192 = vpop.f32.mrf.mxu0
      %v5193 = vadd.f32 0.0, %v5192
      %5194 = vmatmul.f32.gmra.mxu0 %v4166
      %v5195 = vpop.f32.mrf.mxu0
      %v5196 = vadd.f32 0.0, %v5195
      %5197 = vmatmul.f32.gmra.mxu0 %v4168
      %v5198 = vpop.f32.mrf.mxu0
      %v5199 = vadd.f32 0.0, %v5198
      %5200 = vmatmul.f32.gmra.mxu0 %v4170
      %v5201 = vpop.f32.mrf.mxu0
      %v5202 = vadd.f32 0.0, %v5201
      %5203 = vmatmul.f32.gmra.mxu0 %v4172
      %v5204 = vpop.f32.mrf.mxu0
      %v5205 = vadd.f32 0.0, %v5204
      %5206 = vmatmul.f32.gmra.mxu0 %v4174
      %v5207 = vpop.f32.mrf.mxu0
      %v5208 = vadd.f32 0.0, %v5207
      %5209 = vmatmul.f32.gmra.mxu0 %v4176
      %v5210 = vpop.f32.mrf.mxu0
      %v5211 = vadd.f32 0.0, %v5210
      %5212 = vmatmul.f32.gmra.mxu0 %v4178
      %v5213 = vpop.f32.mrf.mxu0
      %v5214 = vadd.f32 0.0, %v5213
      %5215 = vmatmul.f32.gmra.mxu0 %v4180
      %v5216 = vpop.f32.mrf.mxu0
      %v5217 = vadd.f32 0.0, %v5216
      %5218 = vmatmul.f32.gmra.mxu0 %v4182
      %v5219 = vpop.f32.mrf.mxu0
      %v5220 = vadd.f32 0.0, %v5219
      %5221 = vmatmul.f32.gmra.mxu0 %v4184
      %v5222 = vpop.f32.mrf.mxu0
      %v5223 = vadd.f32 0.0, %v5222
      %5224 = vmatmul.f32.gmra.mxu0 %v4186
      %v5225 = vpop.f32.mrf.mxu0
      %v5226 = vadd.f32 0.0, %v5225
      %5227 = vmatmul.f32.gmra.mxu0 %v4188
      %v5228 = vpop.f32.mrf.mxu0
      %v5229 = vadd.f32 0.0, %v5228
      %5230 = vmatmul.f32.gmra.mxu0 %v4190
      %v5231 = vpop.f32.mrf.mxu0
      %v5232 = vadd.f32 0.0, %v5231
      %5233 = vmatmul.f32.gmra.mxu0 %v4192
      %v5234 = vpop.f32.mrf.mxu0
      %v5235 = vadd.f32 0.0, %v5234
      %5236 = vmatmul.f32.gmra.mxu0 %v4194
      %v5237 = vpop.f32.mrf.mxu0
      %v5238 = vadd.f32 0.0, %v5237
      %5239 = vmatmul.f32.gmra.mxu0 %v4196
      %v5240 = vpop.f32.mrf.mxu0
      %v5241 = vadd.f32 0.0, %v5240
      %5242 = vmatmul.f32.gmra.mxu0 %v4198
      %v5243 = vpop.f32.mrf.mxu0
      %v5244 = vadd.f32 0.0, %v5243
      %5245 = vmatmul.f32.gmra.mxu0 %v4200
      %v5246 = vpop.f32.mrf.mxu0
      %v5247 = vadd.f32 0.0, %v5246
      %5248 = vmatmul.f32.gmra.mxu0 %v4202
      %v5249 = vpop.f32.mrf.mxu0
      %v5250 = vadd.f32 0.0, %v5249
      %5251 = vmatmul.f32.gmra.mxu0 %v4204
      %v5252 = vpop.f32.mrf.mxu0
      %v5253 = vadd.f32 0.0, %v5252
      %5254 = vmatmul.f32.gmra.mxu0 %v4206
      %v5255 = vpop.f32.mrf.mxu0
      %v5256 = vadd.f32 0.0, %v5255
      %5257 = vmatmul.f32.gmra.mxu0 %v4208
      %v5258 = vpop.f32.mrf.mxu0
      %v5259 = vadd.f32 0.0, %v5258
      %5260 = vmatmul.f32.gmra.mxu0 %v4210
      %v5261 = vpop.f32.mrf.mxu0
      %v5262 = vadd.f32 0.0, %v5261
      %5263 = vmatmul.f32.gmra.mxu0 %v4212
      %v5264 = vpop.f32.mrf.mxu0
      %v5265 = vadd.f32 0.0, %v5264
      %5266 = vmatmul.f32.gmra.mxu0 %v4214
      %v5267 = vpop.f32.mrf.mxu0
      %v5268 = vadd.f32 0.0, %v5267
      %5269 = vmatmul.f32.gmra.mxu0 %v4687
      %v5270 = vpop.f32.mrf.mxu0
      %v5271 = vadd.f32 0.0, %v5270
      %5272 = vmatmul.f32.gmra.mxu0 %v4689
      %v5273 = vpop.f32.mrf.mxu0
      %v5274 = vadd.f32 0.0, %v5273
      %5275 = vmatmul.f32.gmra.mxu0 %v5162
      %v5276 = vpop.f32.mrf.mxu0
      %v5277 = vadd.f32 0.0, %v5276
      %5278 = vmatmul.f32.gmra.mxu0 %v5164
      %v5279 = vpop.f32.mrf.mxu0
      %v5280 = vadd.f32 0.0, %v5279
      %5281 = vdwg.mxu0
      %v5282 = vadd.f32 %v5123, %v5187
      %v5283 = vadd.f32 %v5124, %v5190
      %v5284 = vadd.f32 %v5125, %v5193
      %v5285 = vadd.f32 %v5126, %v5196
      %v5286 = vadd.f32 %v5127, %v5199
      %v5287 = vadd.f32 %v5128, %v5202
      %v5288 = vadd.f32 %v5129, %v5205
      %v5289 = vadd.f32 %v5130, %v5208
      %v5290 = vadd.f32 %v5131, %v5211
      %v5291 = vadd.f32 %v5132, %v5214
      %v5292 = vadd.f32 %v5133, %v5217
      %v5293 = vadd.f32 %v5134, %v5220
      %v5294 = vadd.f32 %v5135, %v5223
      %v5295 = vadd.f32 %v5136, %v5226
      %v5296 = vadd.f32 %v5137, %v5229
      %v5297 = vadd.f32 %v5138, %v5232
      %v5298 = vadd.f32 %v5139, %v5235
      %v5299 = vadd.f32 %v5140, %v5238
      %v5300 = vadd.f32 %v5141, %v5241
      %v5301 = vadd.f32 %v5142, %v5244
      %v5302 = vadd.f32 %v5143, %v5247
      %v5303 = vadd.f32 %v5144, %v5250
      %v5304 = vadd.f32 %v5145, %v5253
      %v5305 = vadd.f32 %v5146, %v5256
      %v5306 = vadd.f32 %v5147, %v5259
      %v5307 = vadd.f32 %v5148, %v5262
      %v5308 = vadd.f32 %v5149, %v5265
      %v5309 = vadd.f32 %v5150, %v5268
      %v5310 = vadd.f32 %v5151, %v5271
      %v5311 = vadd.f32 %v5152, %v5274
      %v5312 = vadd.f32 %v5153, %v5277
      %v5313 = vadd.f32 %v5154, %v5280
      %v5314 = vld [vmem:[%s5] sm:$0x1]
      %v5316 = vperm.slane %v5314, 0
      %v5318 = vadd.f32 %v5282, %v5316
      %v5319 = vadd.f32 %v5283, %v5316
      %v5320 = vadd.f32 %v5284, %v5316
      %v5321 = vadd.f32 %v5285, %v5316
      %v5322 = vadd.f32 %v5286, %v5316
      %v5323 = vadd.f32 %v5287, %v5316
      %v5324 = vadd.f32 %v5288, %v5316
      %v5325 = vadd.f32 %v5289, %v5316
      %v5326 = vadd.f32 %v5290, %v5316
      %v5327 = vadd.f32 %v5291, %v5316
      %v5328 = vadd.f32 %v5292, %v5316
      %v5329 = vadd.f32 %v5293, %v5316
      %v5330 = vadd.f32 %v5294, %v5316
      %v5331 = vadd.f32 %v5295, %v5316
      %v5332 = vadd.f32 %v5296, %v5316
      %v5333 = vadd.f32 %v5297, %v5316
      %v5334 = vadd.f32 %v5298, %v5316
      %v5335 = vadd.f32 %v5299, %v5316
      %v5336 = vadd.f32 %v5300, %v5316
      %v5337 = vadd.f32 %v5301, %v5316
      %v5338 = vadd.f32 %v5302, %v5316
      %v5339 = vadd.f32 %v5303, %v5316
      %v5340 = vadd.f32 %v5304, %v5316
      %v5341 = vadd.f32 %v5305, %v5316
      %v5342 = vadd.f32 %v5306, %v5316
      %v5343 = vadd.f32 %v5307, %v5316
      %v5344 = vadd.f32 %v5308, %v5316
      %v5345 = vadd.f32 %v5309, %v5316
      %v5346 = vadd.f32 %v5310, %v5316
      %v5347 = vadd.f32 %v5311, %v5316
      %v5348 = vadd.f32 %v5312, %v5316
      %v5349 = vadd.f32 %v5313, %v5316
      %v5350 = vmax.f32 %v5318, 0.0
      %v5351 = vmax.f32 %v5319, 0.0
      %v5352 = vmax.f32 %v5320, 0.0
      %v5353 = vmax.f32 %v5321, 0.0
      %v5354 = vmax.f32 %v5322, 0.0
      %v5355 = vmax.f32 %v5323, 0.0
      %v5356 = vmax.f32 %v5324, 0.0
      %v5357 = vmax.f32 %v5325, 0.0
      %v5358 = vmax.f32 %v5326, 0.0
      %v5359 = vmax.f32 %v5327, 0.0
      %v5360 = vmax.f32 %v5328, 0.0
      %v5361 = vmax.f32 %v5329, 0.0
      %v5362 = vmax.f32 %v5330, 0.0
      %v5363 = vmax.f32 %v5331, 0.0
      %v5364 = vmax.f32 %v5332, 0.0
      %v5365 = vmax.f32 %v5333, 0.0
      %v5366 = vmax.f32 %v5334, 0.0
      %v5367 = vmax.f32 %v5335, 0.0
      %v5368 = vmax.f32 %v5336, 0.0
      %v5369 = vmax.f32 %v5337, 0.0
      %v5370 = vmax.f32 %v5338, 0.0
      %v5371 = vmax.f32 %v5339, 0.0
      %v5372 = vmax.f32 %v5340, 0.0
      %v5373 = vmax.f32 %v5341, 0.0
      %v5374 = vmax.f32 %v5342, 0.0
      %v5375 = vmax.f32 %v5343, 0.0
      %v5376 = vmax.f32 %v5344, 0.0
      %v5377 = vmax.f32 %v5345, 0.0
      %v5378 = vmax.f32 %v5346, 0.0
      %v5379 = vmax.f32 %v5347, 0.0
      %v5380 = vmax.f32 %v5348, 0.0
      %v5381 = vmax.f32 %v5349, 0.0
      %v5414 = vadd.f32 %v5350, %v1133
      %v5415 = vadd.f32 %v5351, %v1135
      %v5416 = vadd.f32 %v5352, %v1140
      %v5417 = vadd.f32 %v5353, %v1142
      %v5418 = vadd.f32 %v5354, %v1147
      %v5419 = vadd.f32 %v5355, %v1149
      %v5420 = vadd.f32 %v5356, %v1154
      %v5421 = vadd.f32 %v5357, %v1156
      %v5422 = vadd.f32 %v5358, %v1161
      %v5423 = vadd.f32 %v5359, %v1163
      %v5424 = vadd.f32 %v5360, %v1168
      %v5425 = vadd.f32 %v5361, %v1170
      %v5426 = vadd.f32 %v5362, %v1175
      %v5427 = vadd.f32 %v5363, %v1177
      %v5428 = vadd.f32 %v5364, %v1182
      %v5429 = vadd.f32 %v5365, %v1184
      %v5430 = vadd.f32 %v5366, %v1189
      %v5431 = vadd.f32 %v5367, %v1191
      %v5432 = vadd.f32 %v5368, %v1196
      %v5433 = vadd.f32 %v5369, %v1198
      %v5434 = vadd.f32 %v5370, %v1203
      %v5435 = vadd.f32 %v5371, %v1205
      %v5436 = vadd.f32 %v5372, %v1210
      %v5437 = vadd.f32 %v5373, %v1212
      %v5438 = vadd.f32 %v5374, %v1217
      %v5439 = vadd.f32 %v5375, %v1219
      %v5440 = vadd.f32 %v5376, %v1224
      %v5441 = vadd.f32 %v5377, %v1226
      %v5442 = vadd.f32 %v5378, %v1231
      %v5443 = vadd.f32 %v5379, %v1233
      %v5444 = vadd.f32 %v5380, %v1238
      %v5445 = vadd.f32 %v5381, %v1240
      %v5446 = vmax.f32 %v5414, 0.0
      %v5447 = vmax.f32 %v5415, 0.0
      %v5448 = vmax.f32 %v5416, 0.0
      %v5449 = vmax.f32 %v5417, 0.0
      %v5450 = vmax.f32 %v5418, 0.0
      %v5451 = vmax.f32 %v5419, 0.0
      %v5452 = vmax.f32 %v5420, 0.0
      %v5453 = vmax.f32 %v5421, 0.0
      %v5454 = vmax.f32 %v5422, 0.0
      %v5455 = vmax.f32 %v5423, 0.0
      %v5456 = vmax.f32 %v5424, 0.0
      %v5457 = vmax.f32 %v5425, 0.0
      %v5458 = vmax.f32 %v5426, 0.0
      %v5459 = vmax.f32 %v5427, 0.0
      %v5460 = vmax.f32 %v5428, 0.0
      %v5461 = vmax.f32 %v5429, 0.0
      %v5462 = vmax.f32 %v5430, 0.0
      %v5463 = vmax.f32 %v5431, 0.0
      %v5464 = vmax.f32 %v5432, 0.0
      %v5465 = vmax.f32 %v5433, 0.0
      %v5466 = vmax.f32 %v5434, 0.0
      %v5467 = vmax.f32 %v5435, 0.0
      %v5468 = vmax.f32 %v5436, 0.0
      %v5469 = vmax.f32 %v5437, 0.0
      %v5470 = vmax.f32 %v5438, 0.0
      %v5471 = vmax.f32 %v5439, 0.0
      %v5472 = vmax.f32 %v5440, 0.0
      %v5473 = vmax.f32 %v5441, 0.0
      %v5474 = vmax.f32 %v5442, 0.0
      %v5475 = vmax.f32 %v5443, 0.0
      %v5476 = vmax.f32 %v5444, 0.0
      %v5477 = vmax.f32 %v5445, 0.0
      %5478 = vxpose.xlu0.b32.start [1/16] %v5446, 128
      %5479 = vxpose.xlu0.b32.cont [2/16] %v5447, 128
      %5480 = vxpose.xlu0.b32.cont [3/16] %v5448, 128
      %5481 = vxpose.xlu0.b32.cont [4/16] %v5449, 128
      %5482 = vxpose.xlu0.b32.cont [5/16] %v5450, 128
      %5483 = vxpose.xlu0.b32.cont [6/16] %v5451, 128
      %5484 = vxpose.xlu0.b32.cont [7/16] %v5452, 128
      %5485 = vxpose.xlu0.b32.cont [8/16] %v5453, 128
      %5486 = vxpose.xlu0.b32.cont [9/16] %v5454, 128
      %5487 = vxpose.xlu0.b32.cont [10/16] %v5455, 128
      %5488 = vxpose.xlu0.b32.cont [11/16] %v5456, 128
      %5489 = vxpose.xlu0.b32.cont [12/16] %v5457, 128
      %5490 = vxpose.xlu0.b32.cont [13/16] %v5458, 128
      %5491 = vxpose.xlu0.b32.cont [14/16] %v5459, 128
      %5492 = vxpose.xlu0.b32.cont [15/16] %v5460, 128
      %5493 = vxpose.xlu0.b32.end [16/16] %v5461, 128
      %v5494 = vpop.trf.xlu0
      %v5495 = vpop.trf.xlu0
      %v5496 = vpop.trf.xlu0
      %v5497 = vpop.trf.xlu0
      %v5498 = vpop.trf.xlu0
      %v5499 = vpop.trf.xlu0
      %v5500 = vpop.trf.xlu0
      %v5501 = vpop.trf.xlu0
      %v5502 = vpop.trf.xlu0
      %v5503 = vpop.trf.xlu0
      %v5504 = vpop.trf.xlu0
      %v5505 = vpop.trf.xlu0
      %v5506 = vpop.trf.xlu0
      %v5507 = vpop.trf.xlu0
      %v5508 = vpop.trf.xlu0
      %v5509 = vpop.trf.xlu0
      %5510 = vxpose.xlu0.b32.start [1/16] %v5462, 128
      %5511 = vxpose.xlu0.b32.cont [2/16] %v5463, 128
      %5512 = vxpose.xlu0.b32.cont [3/16] %v5464, 128
      %5513 = vxpose.xlu0.b32.cont [4/16] %v5465, 128
      %5514 = vxpose.xlu0.b32.cont [5/16] %v5466, 128
      %5515 = vxpose.xlu0.b32.cont [6/16] %v5467, 128
      %5516 = vxpose.xlu0.b32.cont [7/16] %v5468, 128
      %5517 = vxpose.xlu0.b32.cont [8/16] %v5469, 128
      %5518 = vxpose.xlu0.b32.cont [9/16] %v5470, 128
      %5519 = vxpose.xlu0.b32.cont [10/16] %v5471, 128
      %5520 = vxpose.xlu0.b32.cont [11/16] %v5472, 128
      %5521 = vxpose.xlu0.b32.cont [12/16] %v5473, 128
      %5522 = vxpose.xlu0.b32.cont [13/16] %v5474, 128
      %5523 = vxpose.xlu0.b32.cont [14/16] %v5475, 128
      %5524 = vxpose.xlu0.b32.cont [15/16] %v5476, 128
      %5525 = vxpose.xlu0.b32.end [16/16] %v5477, 128
      %v5526 = vpop.trf.xlu0
      %v5527 = vpop.trf.xlu0
      %v5528 = vpop.trf.xlu0
      %v5529 = vpop.trf.xlu0
      %v5530 = vpop.trf.xlu0
      %v5531 = vpop.trf.xlu0
      %v5532 = vpop.trf.xlu0
      %v5533 = vpop.trf.xlu0
      %v5534 = vpop.trf.xlu0
      %v5535 = vpop.trf.xlu0
      %v5536 = vpop.trf.xlu0
      %v5537 = vpop.trf.xlu0
      %v5538 = vpop.trf.xlu0
      %v5539 = vpop.trf.xlu0
      %v5540 = vpop.trf.xlu0
      %v5541 = vpop.trf.xlu0
      %v5544 = vrot.slane %v5526, 4
      %v5545 = vsel %vm643, %v5494, %v5544
      %5547 = vst [vmem:[%s251] sm:$0xff] %v5545
      %p5548 = scmp.lt.s32.totalorder %s17, 1
      %s5549 = scalar_select %p5548, %s17, 1
      %s5550 = smul.addr %s5549, 2
      %s5551 = smul.addr %s5550, 4
      %s5552 = scalar_lea.vmem %s6, %s5551
      // Predicated region
      $region45: #{basic_block_forward.1} parent=43 // pred_check
        %p5553 = pneg %p166
      $region46: #{basic_block_forward.1} parent=43 // pred_check_branch
        %5555 = sbr.rel (%p5553) target = $region48
      $region47: #{basic_block_forward.1} parent=43 // pred_region
        _
      $region48: #{basic_block_forward.1} parent=43 // pred_fallthru
        _
    $region44: #{basic_block_forward.1} parent=5 // pred_fallthru
      _
    %p5556 = scmp.le.s32.totalorder 2, %s12
    // Predicated region
    $region49: #{basic_block_forward.1} parent=5 // pred_check
      %p5557 = pneg %p5556
    $region50: #{basic_block_forward.1} parent=5 // pred_check_branch
      %5559 = sbr.rel (%p5557) target = $region52
    $region51: #{basic_block_forward.1} parent=5 // pred_region
      %s5560 = ssub.s32 %s12, 2
      // Predicated region
      $region53: #{basic_block_forward.1} parent=51 // pred_check
        %p5561 = pneg %p172
      $region54: #{basic_block_forward.1} parent=51 // pred_check_branch
        %5563 = sbr.rel (%p5561) target = $region56
      $region55: #{basic_block_forward.1} parent=51 // pred_region
        %p5564 = scmp.lt.s32.totalorder %s18, 1
        %s5565 = scalar_select %p5564, %s18, 1
        %s5566 = smul.addr %s5565, 2
        %s5567 = smul.addr %s5566, 4
        %s5568 = scalar_lea.vmem %s6, %s5567
      $region56: #{basic_block_forward.1} parent=51 // pred_fallthru
        _
    $region52: #{basic_block_forward.1} parent=5 // pred_fallthru
      _
  $region6: #{basic_block_forward.1} parent=0 // loop_footer
    %s16 = sadd.s32 1, %s12
  $region7: #{basic_block_forward.1} parent=0 // loop_footer_branch
    %11 = sbr.rel target = $region3
  $region8: #{basic_block_forward.1} parent=0 // loop_exit
    _

</llo_original>
